<compile_context>
chip_gen: v5e
topology: v5e:2x2
jax: 0.10.0
libtpu: 0.0.40
codegen_flags: <defaults>
</compile_context>

<pallas_src>
import math
from functools import partial

import jax
import jax.numpy as jnp
from jax import lax
from jax.scipy.special import erf
from jax.experimental import pallas as pl
from jax.experimental.pallas import tpu as pltpu

FEAT_DIM = 128                 # feat_dim (PyTorch default 768); must be a multiple of 64
NUM_HEADS = FEAT_DIM // 64     # nn.MultiheadAttention(num_heads=feat_dim // 64)
MLP_RATIO = 4
LN_EPS = 1e-5
_INV_SQRT2 = 1.0 / math.sqrt(2.0)


# --------------------------- Fused TEAMBlock kernel ---------------------------
def _team_block_kernel(*refs, num_heads, use_self_attn, use_mlp, gelu_tanh):
    it = iter(refs[:-1])
    out_ref = refs[-1]

    mask_ref = next(it) if use_self_attn else None
    text_ref, image_ref, ret_ref = next(it), next(it), next(it)
    if use_self_attn:
        n1g, n1b = next(it), next(it)
        sa_wqk, sa_bqk, sa_wv, sa_bv, sa_wo, sa_bo = [next(it) for _ in range(6)]
    n2g, n2b = next(it), next(it)
    ca_wq, ca_bq, ca_wkv, ca_bkv, ca_wo, ca_bo = [next(it) for _ in range(6)]
    if use_mlp:
        n3g, n3b = next(it), next(it)
        fc1_w, fc1_b, fc2_w, fc2_b = [next(it) for _ in range(4)]

    b_tile, Lq, D = ret_ref.shape
    Lk = image_ref.shape[1]
    dh = D // num_heads
    Mq = b_tile * Lq

    # Flatten the batch tile -> big MXU-friendly slabs for all weight matmuls.
    text = text_ref[...].reshape(Mq, D)          # f32
    ret = ret_ref[...].reshape(Mq, D)            # f32

    def ln(x, g_ref, b_ref):                     # f32 LayerNorm (VPU)
        mu = jnp.mean(x, axis=-1, keepdims=True)
        xc = x - mu
        var = jnp.mean(xc * xc, axis=-1, keepdims=True)
        return xc * lax.rsqrt(var + LN_EPS) * g_ref[...] + b_ref[...]

    def mm(x, w_ref, b_ref=None):
        """bf16 MXU matmul with f32 accumulation; bias added in f32."""
        y = jnp.dot(x.astype(jnp.bfloat16), w_ref[...],
                    preferred_element_type=jnp.float32)
        return y if b_ref is None else y + b_ref[...]

    def attention(q, k, v, bias, wo_ref, bo_ref, Lkv):
        """q: (Mq, D); k, v: (b_tile*Lkv, D); bias: (b_tile, Lq, Lkv) or None.
        Heads are dh=64 lane slices; per-head contexts are concatenated lane-wise and the
        output projection is ONE (Mq, D) x (D, D) matmul (full K=128 contraction)."""
        qh = q.reshape(b_tile, Lq, D).astype(jnp.bfloat16)
        kh = k.reshape(b_tile, Lkv, D).astype(jnp.bfloat16)
        vh = v.reshape(b_tile, Lkv, D).astype(jnp.bfloat16)
        ctx_parts = []
        for h in range(num_heads):               # static unroll (num_heads == 2)
            sl = slice(h * dh, (h + 1) * dh)
            s = jnp.einsum('bqd,bkd->bqk', qh[:, :, sl], kh[:, :, sl],
                           preferred_element_type=jnp.float32)   # Q already 1/sqrt(dh)-scaled
            if bias is not None:
                s = s + bias
            m = jnp.max(s, axis=-1, keepdims=True)
            p = jnp.exp(s - m)
            inv = pl.reciprocal(jnp.sum(p, axis=-1, keepdims=True), approx=True)
            p = (p * inv).astype(jnp.bfloat16)
            ctx_parts.append(jnp.einsum('bqk,bkd->bqd', p, vh[:, :, sl],
                                        preferred_element_type=jnp.float32))
        ctx = jnp.concatenate(ctx_parts, axis=-1).reshape(Mq, D)   # lane-dense (Mq, D)
        return mm(ctx, wo_ref, bo_ref)                             # single K=128 out-projection

    # ---------------- self-attention ----------------
    if use_self_attn:
        r = ln(ret, n1g, n1b)                                       # norm1
        qk = mm(text + r, sa_wqk, sa_bqk)                           # (Mq, 2D) merged Q|K
        v = mm(r, sa_wv, sa_bv)                                     # (Mq, D)
        bias = jnp.broadcast_to(                                    # hoisted: one broadcast total
            jnp.where(mask_ref[...] == 0, jnp.float32(-1e9), jnp.float32(0.0)),
            (b_tile, Lq, Lq))
        ret = ret + attention(qk[:, :D], qk[:, D:], v, bias, sa_wo, sa_bo, Lq)   # dropout1 == id

    # ---------------- cross-attention ----------------
    r = ln(ret, n2g, n2b)                                           # norm2
    q = mm(text + r, ca_wq, ca_bq)                                  # (Mq, D)
    img = image_ref[...].reshape(b_tile * Lk, D)
    kv = mm(img, ca_wkv, ca_bkv)                                    # (b_tile*Lk, 2D) merged K|V
    ret = ret + attention(q, kv[:, :D], kv[:, D:], None, ca_wo, ca_bo, Lk)       # dropout2 == id

    # ---------------- MLP ----------------
    if use_mlp:
        r = ln(ret, n3g, n3b)                                       # norm3
        h = mm(r, fc1_w, fc1_b)                                     # (Mq, 4D)
        if gelu_tanh:
            h = jax.nn.gelu(h, approximate=True)                    # EUP tanh path (v6e/v7x)
        else:
            h = 0.5 * h * (1.0 + erf(h * _INV_SQRT2))               # torch-exact erf GELU
        ret = ret + mm(h, fc2_w, fc2_b)                             # dropout3 == id

    out_ref[...] = ret.reshape(b_tile, Lq, D).astype(out_ref.dtype)


# --------------------------- pallas_call wrapper ---------------------------
def _batched_spec(b_tile, tail):
    """Block of b_tile batch elements; full extent on the trailing dims."""
    n = len(tail)
    return pl.BlockSpec((b_tile,) + tuple(tail), lambda b, _n=n: (b,) + (0,) * _n)


def _shared_spec(shape):
    """Full-array block, identical for every grid step (stays resident in VMEM)."""
    n = len(shape)
    return pl.BlockSpec(tuple(shape), lambda b, _n=n: (0,) * _n)


def _pick_b_tile(B, Lq, target_rows=128):
    """Batch tile so that B_TILE*Lq ~ 128 MXU rows, but keep >=2 grid steps (v7x megacore)
    when splitting still leaves each TensorCore a reasonably full slab."""
    bt = max(1, min(B, target_rows // max(1, Lq)))
    if pl.cdiv(B, bt) < 2 and B >= 2 and pl.cdiv(B, 2) * Lq >= target_rows // 2:
        bt = pl.cdiv(B, 2)
    return bt


def _fused_team_block(kp, mask3, text, image, retrieved, *,
                      b_tile, use_self_attn, use_mlp, gelu_tanh):
    B, Lq, D = text.shape          # B is already padded to a multiple of b_tile
    Lk = image.shape[1]
    D2 = 2 * D
    hidden = kp["fc1_wT"].shape[1]

    kernel = partial(_team_block_kernel, num_heads=D // 64,
                     use_self_attn=use_self_attn, use_mlp=use_mlp, gelu_tanh=gelu_tanh)

    in_specs, args = [], []
    if use_self_attn:
        in_specs.append(_batched_spec(b_tile, (1, Lq)))             # key-padding mask (int)
        args.append(mask3)
    in_specs += [_batched_spec(b_tile, (Lq, D)),                    # text
                 _batched_spec(b_tile, (Lk, D)),                    # image
                 _batched_spec(b_tile, (Lq, D))]                    # retrieved
    args += [text, image, retrieved]
    if use_self_attn:
        in_specs += [_shared_spec((1, D)), _shared_spec((1, D)),    # norm1 g/b
                     _shared_spec((D, D2)), _shared_spec((1, D2)),  # self-attn merged QK
                     _shared_spec((D, D)), _shared_spec((1, D)),    # self-attn V
                     _shared_spec((D, D)), _shared_spec((1, D))]    # self-attn out-proj
        sa = kp["sa"]
        args += [kp["norm1_g"], kp["norm1_b"],
                 sa["wqk_T"], sa["bqk"], sa["wv_T"], sa["bv"], sa["wo_T"], sa["bo"]]
    in_specs += [_shared_spec((1, D)), _shared_spec((1, D)),        # norm2 g/b
                 _shared_spec((D, D)), _shared_spec((1, D)),        # cross-attn Q
                 _shared_spec((D, D2)), _shared_spec((1, D2)),      # cross-attn merged KV
                 _shared_spec((D, D)), _shared_spec((1, D))]        # cross-attn out-proj
    ca = kp["ca"]
    args += [kp["norm2_g"], kp["norm2_b"],
             ca["wq_T"], ca["bq"], ca["wkv_T"], ca["bkv"], ca["wo_T"], ca["bo"]]
    if use_mlp:
        in_specs += [_shared_spec((1, D)), _shared_spec((1, D)),            # norm3 g/b
                     _shared_spec((D, hidden)), _shared_spec((1, hidden)),  # fc1
                     _shared_spec((hidden, D)), _shared_spec((1, D))]       # fc2
        args += [kp["norm3_g"], kp["norm3_b"],
                 kp["fc1_wT"], kp["fc1_b"], kp["fc2_wT"], kp["fc2_b"]]

    return pl.pallas_call(
        kernel,
        out_shape=jax.ShapeDtypeStruct((B, Lq, D), retrieved.dtype),
        grid=(B // b_tile,),
        in_specs=in_specs,
        out_specs=_batched_spec(b_tile, (Lq, D)),
        compiler_params=pltpu.CompilerParams(
            dimension_semantics=("parallel",)),                     # shard batch tiles over TCs
    )(*args)


@partial(jax.jit, static_argnames=("use_self_attn", "use_mlp", "gelu_tanh"))
def team_block_forward(kernel_params, text_tensors, text_masks, image_tensors,
                       retrieved_tensors, use_self_attn=True, use_mlp=True, gelu_tanh=False):
    B, Lq, _ = text_tensors.shape
    b_tile = _pick_b_tile(B, Lq)
    B_pad = pl.cdiv(B, b_tile) * b_tile
    if B_pad != B:                                 # pad batch to a multiple of the tile
        pad3 = ((0, B_pad - B), (0, 0), (0, 0))
        text_tensors = jnp.pad(text_tensors, pad3)
        image_tensors = jnp.pad(image_tensors, pad3)
        retrieved_tensors = jnp.pad(retrieved_tensors, pad3)
        text_masks = jnp.pad(text_masks, ((0, B_pad - B), (0, 0)), constant_values=1)
    mask3 = text_masks.astype(jnp.int32).reshape(B_pad, 1, Lq)
    out = _fused_team_block(kernel_params, mask3, text_tensors, image_tensors,
                            retrieved_tensors, b_tile=b_tile,
                            use_self_attn=use_self_attn, use_mlp=use_mlp,
                            gelu_tanh=gelu_tanh)
    return out[:B] if B_pad != B else out


# --------------------------- One-time weight re-layout ---------------------------
def prepare_params(params, weight_dtype=jnp.bfloat16):
    """PyTorch-layout params -> kernel layout, ONCE (outside jit):
    weights transposed to [Din, Dout] and cast to bf16 (f32 MXU accumulate in-kernel),
    Q+K / K+V projections merged, 1/sqrt(dh) folded into the Q projection, biases f32 rows."""
    D = params["norm2_g"].shape[0]
    hidden = params["fc1_w"].shape[0]
    num_heads = D // 64
    scale = 1.0 / math.sqrt(D // num_heads)
    f32 = jnp.float32

    def attn(p):
        wq, wk, wv = jnp.split(p["in_proj_weight"], 3, axis=0)      # torch layout (D, D) each
        bq, bk, bv = jnp.split(p["in_proj_bias"], 3, axis=0)
        wq, bq = wq * scale, bq * scale                             # fold attention scale
        return {
            "wqk_T": jnp.concatenate([wq, wk], axis=0).T.astype(weight_dtype),   # (D, 2D)
            "bqk": jnp.concatenate([bq, bk]).reshape(1, 2 * D).astype(f32),
            "wv_T": wv.T.astype(weight_dtype), "bv": bv.reshape(1, D).astype(f32),
            "wq_T": wq.T.astype(weight_dtype), "bq": bq.reshape(1, D).astype(f32),
            "wkv_T": jnp.concatenate([wk, wv], axis=0).T.astype(weight_dtype),   # (D, 2D)
            "bkv": jnp.concatenate([bk, bv]).reshape(1, 2 * D).astype(f32),
            "wo_T": p["out_proj_weight"].T.astype(weight_dtype),
            "bo": p["out_proj_bias"].reshape(1, D).astype(f32),
        }

    return {
        "norm1_g": params["norm1_g"].reshape(1, D).astype(f32),
        "norm1_b": params["norm1_b"].reshape(1, D).astype(f32),
        "norm2_g": params["norm2_g"].reshape(1, D).astype(f32),
        "norm2_b": params["norm2_b"].reshape(1, D).astype(f32),
        "norm3_g": params["norm3_g"].reshape(1, D).astype(f32),
        "norm3_b": params["norm3_b"].reshape(1, D).astype(f32),
        "sa": attn(params["self_attn"]),
        "ca": attn(params["cross_attn"]),
        "fc1_wT": params["fc1_w"].T.astype(weight_dtype),
        "fc1_b": params["fc1_b"].reshape(1, hidden).astype(f32),
        "fc2_wT": params["fc2_w"].T.astype(weight_dtype),
        "fc2_b": params["fc2_b"].reshape(1, D).astype(f32),
    }


# --------------------------- Deterministic parameter init (PyTorch layout) ---------------------------
def init_params(key, feat_dim=FEAT_DIM, mlp_ratio=MLP_RATIO):
    D = feat_dim
    hidden = D * mlp_ratio
    ks = jax.random.split(key, 4)

    def w(k, shape):
        return 0.02 * jax.random.normal(k, shape, jnp.float32)

    def attn_params(k):
        k1, k2 = jax.random.split(k)
        return {
            "in_proj_weight": w(k1, (3 * D, D)),
            "in_proj_bias": jnp.zeros((3 * D,), jnp.float32),
            "out_proj_weight": w(k2, (D, D)),
            "out_proj_bias": jnp.zeros((D,), jnp.float32),
        }

    return {
        "norm1_g": jnp.ones((D,), jnp.float32), "norm1_b": jnp.zeros((D,), jnp.float32),
        "norm2_g": jnp.ones((D,), jnp.float32), "norm2_b": jnp.zeros((D,), jnp.float32),
        "norm3_g": jnp.ones((D,), jnp.float32), "norm3_b": jnp.zeros((D,), jnp.float32),
        "self_attn": attn_params(ks[0]),
        "cross_attn": attn_params(ks[1]),
        "fc1_w": w(ks[2], (hidden, D)), "fc1_b": jnp.zeros((hidden,), jnp.float32),
        "fc2_w": w(ks[3], (D, hidden)), "fc2_b": jnp.zeros((D,), jnp.float32),
    }


# --------------------------- Pure-JAX reference (for correctness check) ---------------------------
def _reference_forward(params, text, masks, image, retrieved, use_self_attn=True, use_mlp=True):
    def ln(x, g, b):
        mu = jnp.mean(x, -1, keepdims=True)
        var = jnp.mean((x - mu) ** 2, -1, keepdims=True)
        return (x - mu) / jnp.sqrt(var + LN_EPS) * g + b

    def mha(p, q, k, v, key_mask=None):
        B, Lq, D = q.shape
        Lk = k.shape[1]
        H, dh = NUM_HEADS, D // NUM_HEADS
        wq, wk, wv = jnp.split(p["in_proj_weight"], 3, axis=0)
        bq, bk, bv = jnp.split(p["in_proj_bias"], 3, axis=0)
        qh = (q @ wq.T + bq).reshape(B, Lq, H, dh).transpose(0, 2, 1, 3)
        kh = (k @ wk.T + bk).reshape(B, Lk, H, dh).transpose(0, 2, 1, 3)
        vh = (v @ wv.T + bv).reshape(B, Lk, H, dh).transpose(0, 2, 1, 3)
        s = jnp.einsum("bhqd,bhkd->bhqk", qh, kh) / math.sqrt(dh)
        if key_mask is not None:
            s = s + jnp.where(key_mask, -1e9, 0.0)[:, None, None, :]
        a = jax.nn.softmax(s, axis=-1)
        o = jnp.einsum("bhqk,bhkd->bhqd", a, vh).transpose(0, 2, 1, 3).reshape(B, Lq, D)
        return o @ p["out_proj_weight"].T + p["out_proj_bias"]

    ret = retrieved
    if use_self_attn:
        r = ln(ret, params["norm1_g"], params["norm1_b"])
        ret = ret + mha(params["self_attn"], text + r, text + r, r, masks == 0)
    r = ln(ret, params["norm2_g"], params["norm2_b"])
    ret = ret + mha(params["cross_attn"], text + r, image, image, None)
    if use_mlp:
        r = ln(ret, params["norm3_g"], params["norm3_b"])
        h = r @ params["fc1_w"].T + params["fc1_b"]
        h = 0.5 * h * (1.0 + erf(h * _INV_SQRT2))
        ret = ret + (h @ params["fc2_w"].T + params["fc2_b"])
    return ret


if __name__ == "__main__":
    B, L_TXT, L_IMG, D = 2, 8, 16, FEAT_DIM

    root = jax.random.PRNGKey(0)
    k_par, k_txt, k_img, k_ret = jax.random.split(root, 4)

    params = init_params(k_par)                 # PyTorch-layout params
    kparams = prepare_params(params)            # one-time W^T / bf16 / merged-QKV / scale-folded

    text_tensors = jax.random.normal(k_txt, (B, L_TXT, D), jnp.float32)
    image_tensors = jax.random.normal(k_img, (B, L_IMG, D), jnp.float32)
    retrieved_tensors = jax.random.normal(k_ret, (B, L_TXT, D), jnp.float32)
    # text_masks: 1 = valid token, 0 = padding (key_padding_mask = masks == 0)
    text_masks = jnp.ones((B, L_TXT), jnp.int32).at[1, 6:].set(0)

    # Full block (self-attn + cross-attn + MLP)
    out = team_block_forward(kparams, text_tensors, text_masks,
                             image_tensors, retrieved_tensors)
    jax.block_until_ready(out)
    assert out.shape == (B, L_TXT, D)
    ref = _reference_forward(params, text_tensors, text_masks,
                             image_tensors, retrieved_tensors)
    max_err = float(jnp.max(jnp.abs(out - ref)))
    assert max_err < 5e-2, f"mismatch vs reference (full block): {max_err}"

    # Cross-attention-only variant (exercises the conditional in_specs / arg paths)
    out2 = team_block_forward(kparams, text_tensors, text_masks,
                              image_tensors, retrieved_tensors,
                              use_self_attn=False, use_mlp=False)
    jax.block_until_ready(out2)
    ref2 = _reference_forward(params, text_tensors, text_masks,
                              image_tensors, retrieved_tensors,
                              use_self_attn=False, use_mlp=False)
    max_err2 = float(jnp.max(jnp.abs(out2 - ref2)))
    assert max_err2 < 5e-2, f"mismatch vs reference (cross-attn only): {max_err2}"

    print("KERNEL_OK")
</pallas_src>

<mosaic_0001>
module attributes {stable_mosaic.version = 11 : i64} {
  func.func @_team_block_kernel(%arg0: i32, %arg1: memref<2x1x8xi32, #tpu.memory_space<vmem>>, %arg2: memref<2x8x128xf32, #tpu.memory_space<vmem>>, %arg3: memref<2x16x128xf32, #tpu.memory_space<vmem>>, %arg4: memref<2x8x128xf32, #tpu.memory_space<vmem>>, %arg5: memref<1x128xf32, #tpu.memory_space<vmem>>, %arg6: memref<1x128xf32, #tpu.memory_space<vmem>>, %arg7: memref<128x256xbf16, #tpu.memory_space<vmem>>, %arg8: memref<1x256xf32, #tpu.memory_space<vmem>>, %arg9: memref<128x128xbf16, #tpu.memory_space<vmem>>, %arg10: memref<1x128xf32, #tpu.memory_space<vmem>>, %arg11: memref<128x128xbf16, #tpu.memory_space<vmem>>, %arg12: memref<1x128xf32, #tpu.memory_space<vmem>>, %arg13: memref<1x128xf32, #tpu.memory_space<vmem>>, %arg14: memref<1x128xf32, #tpu.memory_space<vmem>>, %arg15: memref<128x128xbf16, #tpu.memory_space<vmem>>, %arg16: memref<1x128xf32, #tpu.memory_space<vmem>>, %arg17: memref<128x256xbf16, #tpu.memory_space<vmem>>, %arg18: memref<1x256xf32, #tpu.memory_space<vmem>>, %arg19: memref<128x128xbf16, #tpu.memory_space<vmem>>, %arg20: memref<1x128xf32, #tpu.memory_space<vmem>>, %arg21: memref<1x128xf32, #tpu.memory_space<vmem>>, %arg22: memref<1x128xf32, #tpu.memory_space<vmem>>, %arg23: memref<128x512xbf16, #tpu.memory_space<vmem>>, %arg24: memref<1x512xf32, #tpu.memory_space<vmem>>, %arg25: memref<512x128xbf16, #tpu.memory_space<vmem>>, %arg26: memref<1x128xf32, #tpu.memory_space<vmem>>, %arg27: memref<2x8x128xf32, #tpu.memory_space<vmem>>) attributes {dimension_semantics = [#tpu.dimension_semantics<parallel>], iteration_bounds = array<i64: 1>, scalar_prefetch = 0 : i64, scratch_operands = 0 : i64, tpu.core_type = #tpu.core_type<tc>, window_params = [{transform_indices = @transform_0, window_bounds = array<i64: 2, 1, 8>}, {transform_indices = @transform_1, window_bounds = array<i64: 2, 8, 128>}, {transform_indices = @transform_2, window_bounds = array<i64: 2, 16, 128>}, {transform_indices = @transform_3, window_bounds = array<i64: 2, 8, 128>}, {pipeline_mode = #tpu.pipeline_mode<synchronous>, transform_indices = @transform_4, window_bounds = array<i64: 1, 128>}, {pipeline_mode = #tpu.pipeline_mode<synchronous>, transform_indices = @transform_5, window_bounds = array<i64: 1, 128>}, {pipeline_mode = #tpu.pipeline_mode<synchronous>, transform_indices = @transform_6, window_bounds = array<i64: 128, 256>}, {pipeline_mode = #tpu.pipeline_mode<synchronous>, transform_indices = @transform_7, window_bounds = array<i64: 1, 256>}, {pipeline_mode = #tpu.pipeline_mode<synchronous>, transform_indices = @transform_8, window_bounds = array<i64: 128, 128>}, {pipeline_mode = #tpu.pipeline_mode<synchronous>, transform_indices = @transform_9, window_bounds = array<i64: 1, 128>}, {pipeline_mode = #tpu.pipeline_mode<synchronous>, transform_indices = @transform_10, window_bounds = array<i64: 128, 128>}, {pipeline_mode = #tpu.pipeline_mode<synchronous>, transform_indices = @transform_11, window_bounds = array<i64: 1, 128>}, {pipeline_mode = #tpu.pipeline_mode<synchronous>, transform_indices = @transform_12, window_bounds = array<i64: 1, 128>}, {pipeline_mode = #tpu.pipeline_mode<synchronous>, transform_indices = @transform_13, window_bounds = array<i64: 1, 128>}, {pipeline_mode = #tpu.pipeline_mode<synchronous>, transform_indices = @transform_14, window_bounds = array<i64: 128, 128>}, {pipeline_mode = #tpu.pipeline_mode<synchronous>, transform_indices = @transform_15, window_bounds = array<i64: 1, 128>}, {pipeline_mode = #tpu.pipeline_mode<synchronous>, transform_indices = @transform_16, window_bounds = array<i64: 128, 256>}, {pipeline_mode = #tpu.pipeline_mode<synchronous>, transform_indices = @transform_17, window_bounds = array<i64: 1, 256>}, {pipeline_mode = #tpu.pipeline_mode<synchronous>, transform_indices = @transform_18, window_bounds = array<i64: 128, 128>}, {pipeline_mode = #tpu.pipeline_mode<synchronous>, transform_indices = @transform_19, window_bounds = array<i64: 1, 128>}, {pipeline_mode = #tpu.pipeline_mode<synchronous>, transform_indices = @transform_20, window_bounds = array<i64: 1, 128>}, {pipeline_mode = #tpu.pipeline_mode<synchronous>, transform_indices = @transform_21, window_bounds = array<i64: 1, 128>}, {pipeline_mode = #tpu.pipeline_mode<synchronous>, transform_indices = @transform_22, window_bounds = array<i64: 128, 512>}, {pipeline_mode = #tpu.pipeline_mode<synchronous>, transform_indices = @transform_23, window_bounds = array<i64: 1, 512>}, {pipeline_mode = #tpu.pipeline_mode<synchronous>, transform_indices = @transform_24, window_bounds = array<i64: 512, 128>}, {pipeline_mode = #tpu.pipeline_mode<synchronous>, transform_indices = @transform_25, window_bounds = array<i64: 1, 128>}, {transform_indices = @transform_26, window_bounds = array<i64: 2, 8, 128>}]} {
    %c0 = arith.constant 0 : index
    %c0_0 = arith.constant 0 : index
    %c0_1 = arith.constant 0 : index
    %0 = vector.load %arg2[%c0, %c0_0, %c0_1] : memref<2x8x128xf32, #tpu.memory_space<vmem>>, vector<2x8x128xf32>
    %1 = vector.shape_cast %0 : vector<2x8x128xf32> to vector<16x128xf32>
    %c0_2 = arith.constant 0 : index
    %c0_3 = arith.constant 0 : index
    %c0_4 = arith.constant 0 : index
    %2 = vector.load %arg4[%c0_2, %c0_3, %c0_4] : memref<2x8x128xf32, #tpu.memory_space<vmem>>, vector<2x8x128xf32>
    %3 = vector.shape_cast %2 : vector<2x8x128xf32> to vector<16x128xf32>
    %cst = arith.constant dense<0.000000e+00> : vector<16xf32>
    %4 = vector.multi_reduction <add>, %3, %cst [1] : vector<16x128xf32> to vector<16xf32>
    %5 = vector.shape_cast %4 : vector<16xf32> to vector<16x1xf32>
    %cst_5 = arith.constant 1.280000e+02 : f32
    %6 = vector.broadcast %cst_5 : f32 to vector<16x1xf32>
    %7 = arith.divf %5, %6 : vector<16x1xf32>
    %8 = vector.broadcast %7 : vector<16x1xf32> to vector<16x128xf32>
    %9 = arith.subf %3, %8 : vector<16x128xf32>
    %10 = arith.mulf %9, %9 : vector<16x128xf32>
    %cst_6 = arith.constant dense<0.000000e+00> : vector<16xf32>
    %11 = vector.multi_reduction <add>, %10, %cst_6 [1] : vector<16x128xf32> to vector<16xf32>
    %12 = vector.shape_cast %11 : vector<16xf32> to vector<16x1xf32>
    %cst_7 = arith.constant 1.280000e+02 : f32
    %13 = vector.broadcast %cst_7 : f32 to vector<16x1xf32>
    %14 = arith.divf %12, %13 : vector<16x1xf32>
    %cst_8 = arith.constant 9.99999974E-6 : f32
    %15 = vector.broadcast %cst_8 : f32 to vector<16x1xf32>
    %16 = arith.addf %14, %15 : vector<16x1xf32>
    %17 = math.rsqrt %16 : vector<16x1xf32>
    %18 = vector.broadcast %17 : vector<16x1xf32> to vector<16x128xf32>
    %19 = arith.mulf %9, %18 : vector<16x128xf32>
    %c0_9 = arith.constant 0 : index
    %c0_10 = arith.constant 0 : index
    %20 = vector.load %arg5[%c0_9, %c0_10] : memref<1x128xf32, #tpu.memory_space<vmem>>, vector<1x128xf32>
    %21 = vector.broadcast %20 : vector<1x128xf32> to vector<16x128xf32>
    %22 = arith.mulf %19, %21 : vector<16x128xf32>
    %c0_11 = arith.constant 0 : index
    %c0_12 = arith.constant 0 : index
    %23 = vector.load %arg6[%c0_11, %c0_12] : memref<1x128xf32, #tpu.memory_space<vmem>>, vector<1x128xf32>
    %24 = vector.broadcast %23 : vector<1x128xf32> to vector<16x128xf32>
    %25 = arith.addf %22, %24 : vector<16x128xf32>
    %26 = arith.addf %1, %25 : vector<16x128xf32>
    %27 = arith.truncf %26 : vector<16x128xf32> to vector<16x128xbf16>
    %c0_13 = arith.constant 0 : index
    %c0_14 = arith.constant 0 : index
    %28 = vector.load %arg7[%c0_13, %c0_14] : memref<128x256xbf16, #tpu.memory_space<vmem>>, vector<128x256xbf16>
    %cst_15 = arith.constant dense<0.000000e+00> : vector<16x256xf32>
    %29 = tpu.matmul %27, %28, %cst_15 {dimension_numbers = #tpu.dot_dimension_numbers<[1], [0], [0], [1], [0, 0, 1, 1], [], []>} : vector<16x128xbf16>, vector<128x256xbf16>, vector<16x256xf32> -> vector<16x256xf32>
    %c0_16 = arith.constant 0 : index
    %c0_17 = arith.constant 0 : index
    %30 = vector.load %arg8[%c0_16, %c0_17] : memref<1x256xf32, #tpu.memory_space<vmem>>, vector<1x256xf32>
    %31 = vector.broadcast %30 : vector<1x256xf32> to vector<16x256xf32>
    %32 = arith.addf %29, %31 : vector<16x256xf32>
    %33 = arith.truncf %25 : vector<16x128xf32> to vector<16x128xbf16>
    %c0_18 = arith.constant 0 : index
    %c0_19 = arith.constant 0 : index
    %34 = vector.load %arg9[%c0_18, %c0_19] : memref<128x128xbf16, #tpu.memory_space<vmem>>, vector<128x128xbf16>
    %cst_20 = arith.constant dense<0.000000e+00> : vector<16x128xf32>
    %35 = tpu.matmul %33, %34, %cst_20 {dimension_numbers = #tpu.dot_dimension_numbers<[1], [0], [0], [1], [0, 0, 1, 1], [], []>} : vector<16x128xbf16>, vector<128x128xbf16>, vector<16x128xf32> -> vector<16x128xf32>
    %c0_21 = arith.constant 0 : index
    %c0_22 = arith.constant 0 : index
    %36 = vector.load %arg10[%c0_21, %c0_22] : memref<1x128xf32, #tpu.memory_space<vmem>>, vector<1x128xf32>
    %37 = vector.broadcast %36 : vector<1x128xf32> to vector<16x128xf32>
    %38 = arith.addf %35, %37 : vector<16x128xf32>
    %c0_23 = arith.constant 0 : index
    %c0_24 = arith.constant 0 : index
    %c0_25 = arith.constant 0 : index
    %39 = vector.load %arg1[%c0_23, %c0_24, %c0_25] : memref<2x1x8xi32, #tpu.memory_space<vmem>>, vector<2x1x8xi32>
    %c0_i32 = arith.constant 0 : i32
    %40 = vector.broadcast %c0_i32 : i32 to vector<2x1x8xi32>
    %41 = arith.cmpi eq, %39, %40 : vector<2x1x8xi32>
    %cst_26 = arith.constant -1.000000e+09 : f32
    %cst_27 = arith.constant 0.000000e+00 : f32
    %42 = vector.broadcast %cst_26 : f32 to vector<2x1x8xf32>
    %43 = vector.broadcast %cst_27 : f32 to vector<2x1x8xf32>
    %44 = arith.select %41, %42, %43 : vector<2x1x8xi1>, vector<2x1x8xf32>
    %45 = vector.shape_cast %44 : vector<2x1x8xf32> to vector<2x1x8xf32>
    %46 = vector.broadcast %45 : vector<2x1x8xf32> to vector<2x8x8xf32>
    %47 = vector.extract_strided_slice %32 {offsets = [0, 0], sizes = [16, 128], strides = [1, 1]} : vector<16x256xf32> to vector<16x128xf32>
    %48 = vector.extract_strided_slice %32 {offsets = [0, 128], sizes = [16, 128], strides = [1, 1]} : vector<16x256xf32> to vector<16x128xf32>
    %49 = vector.shape_cast %47 : vector<16x128xf32> to vector<2x8x128xf32>
    %50 = arith.truncf %49 : vector<2x8x128xf32> to vector<2x8x128xbf16>
    %51 = vector.shape_cast %48 : vector<16x128xf32> to vector<2x8x128xf32>
    %52 = arith.truncf %51 : vector<2x8x128xf32> to vector<2x8x128xbf16>
    %53 = vector.shape_cast %38 : vector<16x128xf32> to vector<2x8x128xf32>
    %54 = arith.truncf %53 : vector<2x8x128xf32> to vector<2x8x128xbf16>
    %55 = vector.extract_strided_slice %50 {offsets = [0, 0, 0], sizes = [2, 8, 64], strides = [1, 1, 1]} : vector<2x8x128xbf16> to vector<2x8x64xbf16>
    %56 = vector.extract_strided_slice %52 {offsets = [0, 0, 0], sizes = [2, 8, 64], strides = [1, 1, 1]} : vector<2x8x128xbf16> to vector<2x8x64xbf16>
    "tpu.trace_start"() <{level = 10 : i32, message = "bqd,bkd->bqk"}> : () -> ()
    %cst_28 = arith.constant dense<0.000000e+00> : vector<2x8x8xf32>
    %57 = tpu.matmul %55, %56, %cst_28 {dimension_numbers = #tpu.dot_dimension_numbers<[2], [2], [1], [1], [0, 0, 0, 1, 1, 1], [0], [0]>} : vector<2x8x64xbf16>, vector<2x8x64xbf16>, vector<2x8x8xf32> -> vector<2x8x8xf32>
    "tpu.trace_stop"() : () -> ()
    %58 = arith.addf %57, %46 : vector<2x8x8xf32>
    %cst_29 = arith.constant dense<0xFF800000> : vector<2x8xf32>
    %59 = vector.multi_reduction <maximumf>, %58, %cst_29 [2] : vector<2x8x8xf32> to vector<2x8xf32>
    %60 = vector.shape_cast %59 : vector<2x8xf32> to vector<2x8x1xf32>
    %61 = vector.broadcast %60 : vector<2x8x1xf32> to vector<2x8x8xf32>
    %62 = arith.subf %58, %61 : vector<2x8x8xf32>
    %63 = math.exp %62 : vector<2x8x8xf32>
    %cst_30 = arith.constant dense<0.000000e+00> : vector<2x8xf32>
    %64 = vector.multi_reduction <add>, %63, %cst_30 [2] : vector<2x8x8xf32> to vector<2x8xf32>
    %65 = vector.shape_cast %64 : vector<2x8xf32> to vector<2x8x1xf32>
    %66 = tpu.reciprocal %65 {approx = true} : vector<2x8x1xf32> -> vector<2x8x1xf32>
    %67 = vector.broadcast %66 : vector<2x8x1xf32> to vector<2x8x8xf32>
    %68 = arith.mulf %63, %67 : vector<2x8x8xf32>
    %69 = arith.truncf %68 : vector<2x8x8xf32> to vector<2x8x8xbf16>
    %70 = vector.extract_strided_slice %54 {offsets = [0, 0, 0], sizes = [2, 8, 64], strides = [1, 1, 1]} : vector<2x8x128xbf16> to vector<2x8x64xbf16>
    "tpu.trace_start"() <{level = 10 : i32, message = "bqk,bkd->bqd"}> : () -> ()
    %cst_31 = arith.constant dense<0.000000e+00> : vector<2x8x64xf32>
    %71 = tpu.matmul %69, %70, %cst_31 {dimension_numbers = #tpu.dot_dimension_numbers<[2], [1], [1], [2], [0, 0, 0, 1, 1, 2], [0], [0]>} : vector<2x8x8xbf16>, vector<2x8x64xbf16>, vector<2x8x64xf32> -> vector<2x8x64xf32>
    "tpu.trace_stop"() : () -> ()
    %72 = vector.extract_strided_slice %50 {offsets = [0, 0, 64], sizes = [2, 8, 64], strides = [1, 1, 1]} : vector<2x8x128xbf16> to vector<2x8x64xbf16>
    %73 = vector.extract_strided_slice %52 {offsets = [0, 0, 64], sizes = [2, 8, 64], strides = [1, 1, 1]} : vector<2x8x128xbf16> to vector<2x8x64xbf16>
    "tpu.trace_start"() <{level = 10 : i32, message = "bqd,bkd->bqk"}> : () -> ()
    %cst_32 = arith.constant dense<0.000000e+00> : vector<2x8x8xf32>
    %74 = tpu.matmul %72, %73, %cst_32 {dimension_numbers = #tpu.dot_dimension_numbers<[2], [2], [1], [1], [0, 0, 0, 1, 1, 1], [0], [0]>} : vector<2x8x64xbf16>, vector<2x8x64xbf16>, vector<2x8x8xf32> -> vector<2x8x8xf32>
    "tpu.trace_stop"() : () -> ()
    %75 = arith.addf %74, %46 : vector<2x8x8xf32>
    %cst_33 = arith.constant dense<0xFF800000> : vector<2x8xf32>
    %76 = vector.multi_reduction <maximumf>, %75, %cst_33 [2] : vector<2x8x8xf32> to vector<2x8xf32>
    %77 = vector.shape_cast %76 : vector<2x8xf32> to vector<2x8x1xf32>
    %78 = vector.broadcast %77 : vector<2x8x1xf32> to vector<2x8x8xf32>
    %79 = arith.subf %75, %78 : vector<2x8x8xf32>
    %80 = math.exp %79 : vector<2x8x8xf32>
    %cst_34 = arith.constant dense<0.000000e+00> : vector<2x8xf32>
    %81 = vector.multi_reduction <add>, %80, %cst_34 [2] : vector<2x8x8xf32> to vector<2x8xf32>
    %82 = vector.shape_cast %81 : vector<2x8xf32> to vector<2x8x1xf32>
    %83 = tpu.reciprocal %82 {approx = true} : vector<2x8x1xf32> -> vector<2x8x1xf32>
    %84 = vector.broadcast %83 : vector<2x8x1xf32> to vector<2x8x8xf32>
    %85 = arith.mulf %80, %84 : vector<2x8x8xf32>
    %86 = arith.truncf %85 : vector<2x8x8xf32> to vector<2x8x8xbf16>
    %87 = vector.extract_strided_slice %54 {offsets = [0, 0, 64], sizes = [2, 8, 64], strides = [1, 1, 1]} : vector<2x8x128xbf16> to vector<2x8x64xbf16>
    "tpu.trace_start"() <{level = 10 : i32, message = "bqk,bkd->bqd"}> : () -> ()
    %cst_35 = arith.constant dense<0.000000e+00> : vector<2x8x64xf32>
    %88 = tpu.matmul %86, %87, %cst_35 {dimension_numbers = #tpu.dot_dimension_numbers<[2], [1], [1], [2], [0, 0, 0, 1, 1, 2], [0], [0]>} : vector<2x8x8xbf16>, vector<2x8x64xbf16>, vector<2x8x64xf32> -> vector<2x8x64xf32>
    "tpu.trace_stop"() : () -> ()
    %89 = tpu.concatenate %71, %88 in 2 : vector<2x8x64xf32>, vector<2x8x64xf32> -> vector<2x8x128xf32>
    %90 = vector.shape_cast %89 : vector<2x8x128xf32> to vector<16x128xf32>
    %91 = arith.truncf %90 : vector<16x128xf32> to vector<16x128xbf16>
    %c0_36 = arith.constant 0 : index
    %c0_37 = arith.constant 0 : index
    %92 = vector.load %arg11[%c0_36, %c0_37] : memref<128x128xbf16, #tpu.memory_space<vmem>>, vector<128x128xbf16>
    %cst_38 = arith.constant dense<0.000000e+00> : vector<16x128xf32>
    %93 = tpu.matmul %91, %92, %cst_38 {dimension_numbers = #tpu.dot_dimension_numbers<[1], [0], [0], [1], [0, 0, 1, 1], [], []>} : vector<16x128xbf16>, vector<128x128xbf16>, vector<16x128xf32> -> vector<16x128xf32>
    %c0_39 = arith.constant 0 : index
    %c0_40 = arith.constant 0 : index
    %94 = vector.load %arg12[%c0_39, %c0_40] : memref<1x128xf32, #tpu.memory_space<vmem>>, vector<1x128xf32>
    %95 = vector.broadcast %94 : vector<1x128xf32> to vector<16x128xf32>
    %96 = arith.addf %93, %95 : vector<16x128xf32>
    %97 = arith.addf %3, %96 : vector<16x128xf32>
    %cst_41 = arith.constant dense<0.000000e+00> : vector<16xf32>
    %98 = vector.multi_reduction <add>, %97, %cst_41 [1] : vector<16x128xf32> to vector<16xf32>
    %99 = vector.shape_cast %98 : vector<16xf32> to vector<16x1xf32>
    %cst_42 = arith.constant 1.280000e+02 : f32
    %100 = vector.broadcast %cst_42 : f32 to vector<16x1xf32>
    %101 = arith.divf %99, %100 : vector<16x1xf32>
    %102 = vector.broadcast %101 : vector<16x1xf32> to vector<16x128xf32>
    %103 = arith.subf %97, %102 : vector<16x128xf32>
    %104 = arith.mulf %103, %103 : vector<16x128xf32>
    %cst_43 = arith.constant dense<0.000000e+00> : vector<16xf32>
    %105 = vector.multi_reduction <add>, %104, %cst_43 [1] : vector<16x128xf32> to vector<16xf32>
    %106 = vector.shape_cast %105 : vector<16xf32> to vector<16x1xf32>
    %cst_44 = arith.constant 1.280000e+02 : f32
    %107 = vector.broadcast %cst_44 : f32 to vector<16x1xf32>
    %108 = arith.divf %106, %107 : vector<16x1xf32>
    %cst_45 = arith.constant 9.99999974E-6 : f32
    %109 = vector.broadcast %cst_45 : f32 to vector<16x1xf32>
    %110 = arith.addf %108, %109 : vector<16x1xf32>
    %111 = math.rsqrt %110 : vector<16x1xf32>
    %112 = vector.broadcast %111 : vector<16x1xf32> to vector<16x128xf32>
    %113 = arith.mulf %103, %112 : vector<16x128xf32>
    %c0_46 = arith.constant 0 : index
    %c0_47 = arith.constant 0 : index
    %114 = vector.load %arg13[%c0_46, %c0_47] : memref<1x128xf32, #tpu.memory_space<vmem>>, vector<1x128xf32>
    %115 = vector.broadcast %114 : vector<1x128xf32> to vector<16x128xf32>
    %116 = arith.mulf %113, %115 : vector<16x128xf32>
    %c0_48 = arith.constant 0 : index
    %c0_49 = arith.constant 0 : index
    %117 = vector.load %arg14[%c0_48, %c0_49] : memref<1x128xf32, #tpu.memory_space<vmem>>, vector<1x128xf32>
    %118 = vector.broadcast %117 : vector<1x128xf32> to vector<16x128xf32>
    %119 = arith.addf %116, %118 : vector<16x128xf32>
    %120 = arith.addf %1, %119 : vector<16x128xf32>
    %121 = arith.truncf %120 : vector<16x128xf32> to vector<16x128xbf16>
    %c0_50 = arith.constant 0 : index
    %c0_51 = arith.constant 0 : index
    %122 = vector.load %arg15[%c0_50, %c0_51] : memref<128x128xbf16, #tpu.memory_space<vmem>>, vector<128x128xbf16>
    %cst_52 = arith.constant dense<0.000000e+00> : vector<16x128xf32>
    %123 = tpu.matmul %121, %122, %cst_52 {dimension_numbers = #tpu.dot_dimension_numbers<[1], [0], [0], [1], [0, 0, 1, 1], [], []>} : vector<16x128xbf16>, vector<128x128xbf16>, vector<16x128xf32> -> vector<16x128xf32>
    %c0_53 = arith.constant 0 : index
    %c0_54 = arith.constant 0 : index
    %124 = vector.load %arg16[%c0_53, %c0_54] : memref<1x128xf32, #tpu.memory_space<vmem>>, vector<1x128xf32>
    %125 = vector.broadcast %124 : vector<1x128xf32> to vector<16x128xf32>
    %126 = arith.addf %123, %125 : vector<16x128xf32>
    %c0_55 = arith.constant 0 : index
    %c0_56 = arith.constant 0 : index
    %c0_57 = arith.constant 0 : index
    %127 = vector.load %arg3[%c0_55, %c0_56, %c0_57] : memref<2x16x128xf32, #tpu.memory_space<vmem>>, vector<2x16x128xf32>
    %128 = vector.shape_cast %127 : vector<2x16x128xf32> to vector<32x128xf32>
    %129 = arith.truncf %128 : vector<32x128xf32> to vector<32x128xbf16>
    %c0_58 = arith.constant 0 : index
    %c0_59 = arith.constant 0 : index
    %130 = vector.load %arg17[%c0_58, %c0_59] : memref<128x256xbf16, #tpu.memory_space<vmem>>, vector<128x256xbf16>
    %cst_60 = arith.constant dense<0.000000e+00> : vector<32x256xf32>
    %131 = tpu.matmul %129, %130, %cst_60 {dimension_numbers = #tpu.dot_dimension_numbers<[1], [0], [0], [1], [0, 0, 1, 1], [], []>} : vector<32x128xbf16>, vector<128x256xbf16>, vector<32x256xf32> -> vector<32x256xf32>
    %c0_61 = arith.constant 0 : index
    %c0_62 = arith.constant 0 : index
    %132 = vector.load %arg18[%c0_61, %c0_62] : memref<1x256xf32, #tpu.memory_space<vmem>>, vector<1x256xf32>
    %133 = vector.broadcast %132 : vector<1x256xf32> to vector<32x256xf32>
    %134 = arith.addf %131, %133 : vector<32x256xf32>
    %135 = vector.extract_strided_slice %134 {offsets = [0, 0], sizes = [32, 128], strides = [1, 1]} : vector<32x256xf32> to vector<32x128xf32>
    %136 = vector.extract_strided_slice %134 {offsets = [0, 128], sizes = [32, 128], strides = [1, 1]} : vector<32x256xf32> to vector<32x128xf32>
    %137 = vector.shape_cast %126 : vector<16x128xf32> to vector<2x8x128xf32>
    %138 = arith.truncf %137 : vector<2x8x128xf32> to vector<2x8x128xbf16>
    %139 = vector.shape_cast %135 : vector<32x128xf32> to vector<2x16x128xf32>
    %140 = arith.truncf %139 : vector<2x16x128xf32> to vector<2x16x128xbf16>
    %141 = vector.shape_cast %136 : vector<32x128xf32> to vector<2x16x128xf32>
    %142 = arith.truncf %141 : vector<2x16x128xf32> to vector<2x16x128xbf16>
    %143 = vector.extract_strided_slice %138 {offsets = [0, 0, 0], sizes = [2, 8, 64], strides = [1, 1, 1]} : vector<2x8x128xbf16> to vector<2x8x64xbf16>
    %144 = vector.extract_strided_slice %140 {offsets = [0, 0, 0], sizes = [2, 16, 64], strides = [1, 1, 1]} : vector<2x16x128xbf16> to vector<2x16x64xbf16>
    "tpu.trace_start"() <{level = 10 : i32, message = "bqd,bkd->bqk"}> : () -> ()
    %cst_63 = arith.constant dense<0.000000e+00> : vector<2x8x16xf32>
    %145 = tpu.matmul %143, %144, %cst_63 {dimension_numbers = #tpu.dot_dimension_numbers<[2], [2], [1], [1], [0, 0, 0, 1, 1, 1], [0], [0]>} : vector<2x8x64xbf16>, vector<2x16x64xbf16>, vector<2x8x16xf32> -> vector<2x8x16xf32>
    "tpu.trace_stop"() : () -> ()
    %cst_64 = arith.constant dense<0xFF800000> : vector<2x8xf32>
    %146 = vector.multi_reduction <maximumf>, %145, %cst_64 [2] : vector<2x8x16xf32> to vector<2x8xf32>
    %147 = vector.shape_cast %146 : vector<2x8xf32> to vector<2x8x1xf32>
    %148 = vector.broadcast %147 : vector<2x8x1xf32> to vector<2x8x16xf32>
    %149 = arith.subf %145, %148 : vector<2x8x16xf32>
    %150 = math.exp %149 : vector<2x8x16xf32>
    %cst_65 = arith.constant dense<0.000000e+00> : vector<2x8xf32>
    %151 = vector.multi_reduction <add>, %150, %cst_65 [2] : vector<2x8x16xf32> to vector<2x8xf32>
    %152 = vector.shape_cast %151 : vector<2x8xf32> to vector<2x8x1xf32>
    %153 = tpu.reciprocal %152 {approx = true} : vector<2x8x1xf32> -> vector<2x8x1xf32>
    %154 = vector.broadcast %153 : vector<2x8x1xf32> to vector<2x8x16xf32>
    %155 = arith.mulf %150, %154 : vector<2x8x16xf32>
    %156 = arith.truncf %155 : vector<2x8x16xf32> to vector<2x8x16xbf16>
    %157 = vector.extract_strided_slice %142 {offsets = [0, 0, 0], sizes = [2, 16, 64], strides = [1, 1, 1]} : vector<2x16x128xbf16> to vector<2x16x64xbf16>
    "tpu.trace_start"() <{level = 10 : i32, message = "bqk,bkd->bqd"}> : () -> ()
    %cst_66 = arith.constant dense<0.000000e+00> : vector<2x8x64xf32>
    %158 = tpu.matmul %156, %157, %cst_66 {dimension_numbers = #tpu.dot_dimension_numbers<[2], [1], [1], [2], [0, 0, 0, 1, 1, 2], [0], [0]>} : vector<2x8x16xbf16>, vector<2x16x64xbf16>, vector<2x8x64xf32> -> vector<2x8x64xf32>
    "tpu.trace_stop"() : () -> ()
    %159 = vector.extract_strided_slice %138 {offsets = [0, 0, 64], sizes = [2, 8, 64], strides = [1, 1, 1]} : vector<2x8x128xbf16> to vector<2x8x64xbf16>
    %160 = vector.extract_strided_slice %140 {offsets = [0, 0, 64], sizes = [2, 16, 64], strides = [1, 1, 1]} : vector<2x16x128xbf16> to vector<2x16x64xbf16>
    "tpu.trace_start"() <{level = 10 : i32, message = "bqd,bkd->bqk"}> : () -> ()
    %cst_67 = arith.constant dense<0.000000e+00> : vector<2x8x16xf32>
    %161 = tpu.matmul %159, %160, %cst_67 {dimension_numbers = #tpu.dot_dimension_numbers<[2], [2], [1], [1], [0, 0, 0, 1, 1, 1], [0], [0]>} : vector<2x8x64xbf16>, vector<2x16x64xbf16>, vector<2x8x16xf32> -> vector<2x8x16xf32>
    "tpu.trace_stop"() : () -> ()
    %cst_68 = arith.constant dense<0xFF800000> : vector<2x8xf32>
    %162 = vector.multi_reduction <maximumf>, %161, %cst_68 [2] : vector<2x8x16xf32> to vector<2x8xf32>
    %163 = vector.shape_cast %162 : vector<2x8xf32> to vector<2x8x1xf32>
    %164 = vector.broadcast %163 : vector<2x8x1xf32> to vector<2x8x16xf32>
    %165 = arith.subf %161, %164 : vector<2x8x16xf32>
    %166 = math.exp %165 : vector<2x8x16xf32>
    %cst_69 = arith.constant dense<0.000000e+00> : vector<2x8xf32>
    %167 = vector.multi_reduction <add>, %166, %cst_69 [2] : vector<2x8x16xf32> to vector<2x8xf32>
    %168 = vector.shape_cast %167 : vector<2x8xf32> to vector<2x8x1xf32>
    %169 = tpu.reciprocal %168 {approx = true} : vector<2x8x1xf32> -> vector<2x8x1xf32>
    %170 = vector.broadcast %169 : vector<2x8x1xf32> to vector<2x8x16xf32>
    %171 = arith.mulf %166, %170 : vector<2x8x16xf32>
    %172 = arith.truncf %171 : vector<2x8x16xf32> to vector<2x8x16xbf16>
    %173 = vector.extract_strided_slice %142 {offsets = [0, 0, 64], sizes = [2, 16, 64], strides = [1, 1, 1]} : vector<2x16x128xbf16> to vector<2x16x64xbf16>
    "tpu.trace_start"() <{level = 10 : i32, message = "bqk,bkd->bqd"}> : () -> ()
    %cst_70 = arith.constant dense<0.000000e+00> : vector<2x8x64xf32>
    %174 = tpu.matmul %172, %173, %cst_70 {dimension_numbers = #tpu.dot_dimension_numbers<[2], [1], [1], [2], [0, 0, 0, 1, 1, 2], [0], [0]>} : vector<2x8x16xbf16>, vector<2x16x64xbf16>, vector<2x8x64xf32> -> vector<2x8x64xf32>
    "tpu.trace_stop"() : () -> ()
    %175 = tpu.concatenate %158, %174 in 2 : vector<2x8x64xf32>, vector<2x8x64xf32> -> vector<2x8x128xf32>
    %176 = vector.shape_cast %175 : vector<2x8x128xf32> to vector<16x128xf32>
    %177 = arith.truncf %176 : vector<16x128xf32> to vector<16x128xbf16>
    %c0_71 = arith.constant 0 : index
    %c0_72 = arith.constant 0 : index
    %178 = vector.load %arg19[%c0_71, %c0_72] : memref<128x128xbf16, #tpu.memory_space<vmem>>, vector<128x128xbf16>
    %cst_73 = arith.constant dense<0.000000e+00> : vector<16x128xf32>
    %179 = tpu.matmul %177, %178, %cst_73 {dimension_numbers = #tpu.dot_dimension_numbers<[1], [0], [0], [1], [0, 0, 1, 1], [], []>} : vector<16x128xbf16>, vector<128x128xbf16>, vector<16x128xf32> -> vector<16x128xf32>
    %c0_74 = arith.constant 0 : index
    %c0_75 = arith.constant 0 : index
    %180 = vector.load %arg20[%c0_74, %c0_75] : memref<1x128xf32, #tpu.memory_space<vmem>>, vector<1x128xf32>
    %181 = vector.broadcast %180 : vector<1x128xf32> to vector<16x128xf32>
    %182 = arith.addf %179, %181 : vector<16x128xf32>
    %183 = arith.addf %97, %182 : vector<16x128xf32>
    %cst_76 = arith.constant dense<0.000000e+00> : vector<16xf32>
    %184 = vector.multi_reduction <add>, %183, %cst_76 [1] : vector<16x128xf32> to vector<16xf32>
    %185 = vector.shape_cast %184 : vector<16xf32> to vector<16x1xf32>
    %cst_77 = arith.constant 1.280000e+02 : f32
    %186 = vector.broadcast %cst_77 : f32 to vector<16x1xf32>
    %187 = arith.divf %185, %186 : vector<16x1xf32>
    %188 = vector.broadcast %187 : vector<16x1xf32> to vector<16x128xf32>
    %189 = arith.subf %183, %188 : vector<16x128xf32>
    %190 = arith.mulf %189, %189 : vector<16x128xf32>
    %cst_78 = arith.constant dense<0.000000e+00> : vector<16xf32>
    %191 = vector.multi_reduction <add>, %190, %cst_78 [1] : vector<16x128xf32> to vector<16xf32>
    %192 = vector.shape_cast %191 : vector<16xf32> to vector<16x1xf32>
    %cst_79 = arith.constant 1.280000e+02 : f32
    %193 = vector.broadcast %cst_79 : f32 to vector<16x1xf32>
    %194 = arith.divf %192, %193 : vector<16x1xf32>
    %cst_80 = arith.constant 9.99999974E-6 : f32
    %195 = vector.broadcast %cst_80 : f32 to vector<16x1xf32>
    %196 = arith.addf %194, %195 : vector<16x1xf32>
    %197 = math.rsqrt %196 : vector<16x1xf32>
    %198 = vector.broadcast %197 : vector<16x1xf32> to vector<16x128xf32>
    %199 = arith.mulf %189, %198 : vector<16x128xf32>
    %c0_81 = arith.constant 0 : index
    %c0_82 = arith.constant 0 : index
    %200 = vector.load %arg21[%c0_81, %c0_82] : memref<1x128xf32, #tpu.memory_space<vmem>>, vector<1x128xf32>
    %201 = vector.broadcast %200 : vector<1x128xf32> to vector<16x128xf32>
    %202 = arith.mulf %199, %201 : vector<16x128xf32>
    %c0_83 = arith.constant 0 : index
    %c0_84 = arith.constant 0 : index
    %203 = vector.load %arg22[%c0_83, %c0_84] : memref<1x128xf32, #tpu.memory_space<vmem>>, vector<1x128xf32>
    %204 = vector.broadcast %203 : vector<1x128xf32> to vector<16x128xf32>
    %205 = arith.addf %202, %204 : vector<16x128xf32>
    %206 = arith.truncf %205 : vector<16x128xf32> to vector<16x128xbf16>
    %c0_85 = arith.constant 0 : index
    %c0_86 = arith.constant 0 : index
    %207 = vector.load %arg23[%c0_85, %c0_86] : memref<128x512xbf16, #tpu.memory_space<vmem>>, vector<128x512xbf16>
    %cst_87 = arith.constant dense<0.000000e+00> : vector<16x512xf32>
    %208 = tpu.matmul %206, %207, %cst_87 {dimension_numbers = #tpu.dot_dimension_numbers<[1], [0], [0], [1], [0, 0, 1, 1], [], []>} : vector<16x128xbf16>, vector<128x512xbf16>, vector<16x512xf32> -> vector<16x512xf32>
    %c0_88 = arith.constant 0 : index
    %c0_89 = arith.constant 0 : index
    %209 = vector.load %arg24[%c0_88, %c0_89] : memref<1x512xf32, #tpu.memory_space<vmem>>, vector<1x512xf32>
    %210 = vector.broadcast %209 : vector<1x512xf32> to vector<16x512xf32>
    %211 = arith.addf %208, %210 : vector<16x512xf32>
    %cst_90 = arith.constant 5.000000e-01 : f32
    %212 = vector.broadcast %cst_90 : f32 to vector<16x512xf32>
    %213 = arith.mulf %212, %211 : vector<16x512xf32>
    %cst_91 = arith.constant 0.707106769 : f32
    %214 = vector.broadcast %cst_91 : f32 to vector<16x512xf32>
    %215 = arith.mulf %211, %214 : vector<16x512xf32>
    %216 = math.erf %215 : vector<16x512xf32>
    %cst_92 = arith.constant 1.000000e+00 : f32
    %217 = vector.broadcast %cst_92 : f32 to vector<16x512xf32>
    %218 = arith.addf %217, %216 : vector<16x512xf32>
    %219 = arith.mulf %213, %218 : vector<16x512xf32>
    %220 = arith.truncf %219 : vector<16x512xf32> to vector<16x512xbf16>
    %c0_93 = arith.constant 0 : index
    %c0_94 = arith.constant 0 : index
    %221 = vector.load %arg25[%c0_93, %c0_94] : memref<512x128xbf16, #tpu.memory_space<vmem>>, vector<512x128xbf16>
    %cst_95 = arith.constant dense<0.000000e+00> : vector<16x128xf32>
    %222 = tpu.matmul %220, %221, %cst_95 {dimension_numbers = #tpu.dot_dimension_numbers<[1], [0], [0], [1], [0, 0, 1, 1], [], []>} : vector<16x512xbf16>, vector<512x128xbf16>, vector<16x128xf32> -> vector<16x128xf32>
    %c0_96 = arith.constant 0 : index
    %c0_97 = arith.constant 0 : index
    %223 = vector.load %arg26[%c0_96, %c0_97] : memref<1x128xf32, #tpu.memory_space<vmem>>, vector<1x128xf32>
    %224 = vector.broadcast %223 : vector<1x128xf32> to vector<16x128xf32>
    %225 = arith.addf %222, %224 : vector<16x128xf32>
    %226 = arith.addf %183, %225 : vector<16x128xf32>
    %227 = vector.shape_cast %226 : vector<16x128xf32> to vector<2x8x128xf32>
    %c0_98 = arith.constant 0 : index
    %c0_99 = arith.constant 0 : index
    %c0_100 = arith.constant 0 : index
    %228 = vector.load %arg27[%c0_98, %c0_99, %c0_100] : memref<2x8x128xf32, #tpu.memory_space<vmem>>, vector<2x8x128xf32>
    tpu.vector_store %arg27[%c0_98, %c0_99, %c0_100], %227 {strides = array<i32>} : memref<2x8x128xf32, #tpu.memory_space<vmem>>, vector<2x8x128xf32>,
    return
  }
  func.func @transform_0(%arg0: i32) -> (i32, i32, i32) {
    %c0_i32 = arith.constant 0 : i32
    %c0_i32_0 = arith.constant 0 : i32
    %c0_i32_1 = arith.constant 0 : i32
    return %arg0, %c0_i32, %c0_i32_0 : i32, i32, i32
  }
  func.func @transform_1(%arg0: i32) -> (i32, i32, i32) {
    %c0_i32 = arith.constant 0 : i32
    %c0_i32_0 = arith.constant 0 : i32
    %c0_i32_1 = arith.constant 0 : i32
    return %arg0, %c0_i32, %c0_i32_0 : i32, i32, i32
  }
  func.func @transform_2(%arg0: i32) -> (i32, i32, i32) {
    %c0_i32 = arith.constant 0 : i32
    %c0_i32_0 = arith.constant 0 : i32
    %c0_i32_1 = arith.constant 0 : i32
    return %arg0, %c0_i32, %c0_i32_0 : i32, i32, i32
  }
  func.func @transform_3(%arg0: i32) -> (i32, i32, i32) {
    %c0_i32 = arith.constant 0 : i32
    %c0_i32_0 = arith.constant 0 : i32
    %c0_i32_1 = arith.constant 0 : i32
    return %arg0, %c0_i32, %c0_i32_0 : i32, i32, i32
  }
  func.func @transform_4(%arg0: i32) -> (i32, i32) {
    %c0_i32 = arith.constant 0 : i32
    %c0_i32_0 = arith.constant 0 : i32
    %c0_i32_1 = arith.constant 0 : i32
    return %c0_i32, %c0_i32_0 : i32, i32
  }
  func.func @transform_5(%arg0: i32) -> (i32, i32) {
    %c0_i32 = arith.constant 0 : i32
    %c0_i32_0 = arith.constant 0 : i32
    %c0_i32_1 = arith.constant 0 : i32
    return %c0_i32, %c0_i32_0 : i32, i32
  }
  func.func @transform_6(%arg0: i32) -> (i32, i32) {
    %c0_i32 = arith.constant 0 : i32
    %c0_i32_0 = arith.constant 0 : i32
    %c0_i32_1 = arith.constant 0 : i32
    return %c0_i32, %c0_i32_0 : i32, i32
  }
  func.func @transform_7(%arg0: i32) -> (i32, i32) {
    %c0_i32 = arith.constant 0 : i32
    %c0_i32_0 = arith.constant 0 : i32
    %c0_i32_1 = arith.constant 0 : i32
    return %c0_i32, %c0_i32_0 : i32, i32
  }
  func.func @transform_8(%arg0: i32) -> (i32, i32) {
    %c0_i32 = arith.constant 0 : i32
    %c0_i32_0 = arith.constant 0 : i32
    %c0_i32_1 = arith.constant 0 : i32
    return %c0_i32, %c0_i32_0 : i32, i32
  }
  func.func @transform_9(%arg0: i32) -> (i32, i32) {
    %c0_i32 = arith.constant 0 : i32
    %c0_i32_0 = arith.constant 0 : i32
    %c0_i32_1 = arith.constant 0 : i32
    return %c0_i32, %c0_i32_0 : i32, i32
  }
  func.func @transform_10(%arg0: i32) -> (i32, i32) {
    %c0_i32 = arith.constant 0 : i32
    %c0_i32_0 = arith.constant 0 : i32
    %c0_i32_1 = arith.constant 0 : i32
    return %c0_i32, %c0_i32_0 : i32, i32
  }
  func.func @transform_11(%arg0: i32) -> (i32, i32) {
    %c0_i32 = arith.constant 0 : i32
    %c0_i32_0 = arith.constant 0 : i32
    %c0_i32_1 = arith.constant 0 : i32
    return %c0_i32, %c0_i32_0 : i32, i32
  }
  func.func @transform_12(%arg0: i32) -> (i32, i32) {
    %c0_i32 = arith.constant 0 : i32
    %c0_i32_0 = arith.constant 0 : i32
    %c0_i32_1 = arith.constant 0 : i32
    return %c0_i32, %c0_i32_0 : i32, i32
  }
  func.func @transform_13(%arg0: i32) -> (i32, i32) {
    %c0_i32 = arith.constant 0 : i32
    %c0_i32_0 = arith.constant 0 : i32
    %c0_i32_1 = arith.constant 0 : i32
    return %c0_i32, %c0_i32_0 : i32, i32
  }
  func.func @transform_14(%arg0: i32) -> (i32, i32) {
    %c0_i32 = arith.constant 0 : i32
    %c0_i32_0 = arith.constant 0 : i32
    %c0_i32_1 = arith.constant 0 : i32
    return %c0_i32, %c0_i32_0 : i32, i32
  }
  func.func @transform_15(%arg0: i32) -> (i32, i32) {
    %c0_i32 = arith.constant 0 : i32
    %c0_i32_0 = arith.constant 0 : i32
    %c0_i32_1 = arith.constant 0 : i32
    return %c0_i32, %c0_i32_0 : i32, i32
  }
  func.func @transform_16(%arg0: i32) -> (i32, i32) {
    %c0_i32 = arith.constant 0 : i32
    %c0_i32_0 = arith.constant 0 : i32
    %c0_i32_1 = arith.constant 0 : i32
    return %c0_i32, %c0_i32_0 : i32, i32
  }
  func.func @transform_17(%arg0: i32) -> (i32, i32) {
    %c0_i32 = arith.constant 0 : i32
    %c0_i32_0 = arith.constant 0 : i32
    %c0_i32_1 = arith.constant 0 : i32
    return %c0_i32, %c0_i32_0 : i32, i32
  }
  func.func @transform_18(%arg0: i32) -> (i32, i32) {
    %c0_i32 = arith.constant 0 : i32
    %c0_i32_0 = arith.constant 0 : i32
    %c0_i32_1 = arith.constant 0 : i32
    return %c0_i32, %c0_i32_0 : i32, i32
  }
  func.func @transform_19(%arg0: i32) -> (i32, i32) {
    %c0_i32 = arith.constant 0 : i32
    %c0_i32_0 = arith.constant 0 : i32
    %c0_i32_1 = arith.constant 0 : i32
    return %c0_i32, %c0_i32_0 : i32, i32
  }
  func.func @transform_20(%arg0: i32) -> (i32, i32) {
    %c0_i32 = arith.constant 0 : i32
    %c0_i32_0 = arith.constant 0 : i32
    %c0_i32_1 = arith.constant 0 : i32
    return %c0_i32, %c0_i32_0 : i32, i32
  }
  func.func @transform_21(%arg0: i32) -> (i32, i32) {
    %c0_i32 = arith.constant 0 : i32
    %c0_i32_0 = arith.constant 0 : i32
    %c0_i32_1 = arith.constant 0 : i32
    return %c0_i32, %c0_i32_0 : i32, i32
  }
  func.func @transform_22(%arg0: i32) -> (i32, i32) {
    %c0_i32 = arith.constant 0 : i32
    %c0_i32_0 = arith.constant 0 : i32
    %c0_i32_1 = arith.constant 0 : i32
    return %c0_i32, %c0_i32_0 : i32, i32
  }
  func.func @transform_23(%arg0: i32) -> (i32, i32) {
    %c0_i32 = arith.constant 0 : i32
    %c0_i32_0 = arith.constant 0 : i32
    %c0_i32_1 = arith.constant 0 : i32
    return %c0_i32, %c0_i32_0 : i32, i32
  }
  func.func @transform_24(%arg0: i32) -> (i32, i32) {
    %c0_i32 = arith.constant 0 : i32
    %c0_i32_0 = arith.constant 0 : i32
    %c0_i32_1 = arith.constant 0 : i32
    return %c0_i32, %c0_i32_0 : i32, i32
  }
  func.func @transform_25(%arg0: i32) -> (i32, i32) {
    %c0_i32 = arith.constant 0 : i32
    %c0_i32_0 = arith.constant 0 : i32
    %c0_i32_1 = arith.constant 0 : i32
    return %c0_i32, %c0_i32_0 : i32, i32
  }
  func.func @transform_26(%arg0: i32) -> (i32, i32, i32) {
    %c0_i32 = arith.constant 0 : i32
    %c0_i32_0 = arith.constant 0 : i32
    %c0_i32_1 = arith.constant 0 : i32
    return %arg0, %c0_i32, %c0_i32_0 : i32, i32, i32
  }
}

</mosaic_0001>

<llo_original>
// kernel: team_block_forward.1
$region0: #{team_block_forward.1}
  #allocation0 [shape = 'u32[]', space=smem, size = 0x4, offset = 0x4, fixed_abs, tag = 'smem constant byte address 0x4 - core index']
  #allocation1 [shape = 'u32[72,128]{1,0:T(1,128)}', space=vmem, size = 0x9000, scoped, tag = 'internal scratch']
  %s0 = inlined_call_operand.vmem [shape: s32[2,1,8], index: 0, kind: input, shape index: {}]
  %s1 = inlined_call_operand.vmem [shape: f32[2,8,128], index: 1, kind: input, shape index: {}]
  %s2 = inlined_call_operand.hbm [shape: f32[2,16,128], index: 2, kind: input, shape index: {}]
  %s3 = inlined_call_operand.hbm [shape: f32[2,8,128], index: 3, kind: input, shape index: {}]
  %s4 = inlined_call_operand.hbm [shape: f32[1,128], index: 4, kind: input, shape index: {}]
  %s5 = inlined_call_operand.hbm [shape: f32[1,128], index: 5, kind: input, shape index: {}]
  %s6 = inlined_call_operand.hbm [shape: bf16[128,256], index: 6, kind: input, shape index: {}]
  %s7 = inlined_call_operand.hbm [shape: f32[1,256], index: 7, kind: input, shape index: {}]
  %s8 = inlined_call_operand.hbm [shape: bf16[128,128], index: 8, kind: input, shape index: {}]
  %s9 = inlined_call_operand.hbm [shape: f32[1,128], index: 9, kind: input, shape index: {}]
  %s10 = inlined_call_operand.hbm [shape: bf16[128,128], index: 10, kind: input, shape index: {}]
  %s11 = inlined_call_operand.hbm [shape: f32[1,128], index: 11, kind: input, shape index: {}]
  %s12 = inlined_call_operand.hbm [shape: f32[1,128], index: 12, kind: input, shape index: {}]
  %s13 = inlined_call_operand.hbm [shape: f32[1,128], index: 13, kind: input, shape index: {}]
  %s14 = inlined_call_operand.hbm [shape: bf16[128,128], index: 14, kind: input, shape index: {}]
  %s15 = inlined_call_operand.hbm [shape: f32[1,128], index: 15, kind: input, shape index: {}]
  %s16 = inlined_call_operand.hbm [shape: bf16[128,256], index: 16, kind: input, shape index: {}]
  %s17 = inlined_call_operand.hbm [shape: f32[1,256], index: 17, kind: input, shape index: {}]
  %s18 = inlined_call_operand.hbm [shape: bf16[128,128], index: 18, kind: input, shape index: {}]
  %s19 = inlined_call_operand.hbm [shape: f32[1,128], index: 19, kind: input, shape index: {}]
  %s20 = inlined_call_operand.hbm [shape: f32[1,128], index: 20, kind: input, shape index: {}]
  %s21 = inlined_call_operand.hbm [shape: f32[1,128], index: 21, kind: input, shape index: {}]
  %s22 = inlined_call_operand.hbm [shape: bf16[128,512], index: 22, kind: input, shape index: {}]
  %s23 = inlined_call_operand.vmem [shape: f32[1,512], index: 23, kind: input, shape index: {}]
  %s24 = inlined_call_operand.hbm [shape: bf16[512,128], index: 24, kind: input, shape index: {}]
  %s25 = inlined_call_operand.hbm [shape: f32[1,128], index: 25, kind: input, shape index: {}]
  %s26 = inlined_call_operand.hbm [shape: f32[2,8,128], index: 26, kind: output, shape index: {}]
  %s27 = sld [smem:[#allocation0]]
  $region206: #{team_block_forward.1} parent=0
    _
  %s29 = ssub.s32 1, %s27
  %s30 = scalar_select 0, %s29, %s27
  $region1: #{team_block_forward.1} parent=0
    #allocation2 [shape = 'u8[16384]{0}', space=vmem, size = 0x4000, scoped, tag = 'input window, operand 2, single buffered']
    #allocation3 [shape = 's32[1]{0}', space=sflag, size = 0x4, scoped, tag = 'scoped memory for team_block_forward.1']
    #allocation4 [shape = 's32[1]{0}', space=sflag, size = 0x4, scoped, tag = 'scoped memory for team_block_forward.1']
    #allocation5 [shape = 'u8[8192]{0}', space=vmem, size = 0x2000, scoped, tag = 'input window, operand 3, single buffered']
    #allocation6 [shape = 's32[1]{0}', space=sflag, size = 0x4, scoped, tag = 'scoped memory for team_block_forward.1']
    #allocation7 [shape = 'u8[512]{0}', space=vmem, size = 0x400, scoped, tag = 'input window, operand 4, single buffered']
    #allocation8 [shape = 'u8[512]{0}', space=vmem, size = 0x400, scoped, tag = 'input window, operand 5, single buffered']
    #allocation9 [shape = 's32[1]{0}', space=sflag, size = 0x4, scoped, tag = 'scoped memory for team_block_forward.1']
    #allocation10 [shape = 'u8[65536]{0}', space=vmem, size = 0x10000, scoped, tag = 'input window, operand 6, single buffered']
    #allocation11 [shape = 'u8[1024]{0}', space=vmem, size = 0x400, scoped, tag = 'input window, operand 7, single buffered']
    #allocation12 [shape = 's32[1]{0}', space=sflag, size = 0x4, scoped, tag = 'scoped memory for team_block_forward.1']
    #allocation13 [shape = 'u8[32768]{0}', space=vmem, size = 0x8000, scoped, tag = 'input window, operand 8, single buffered']
    #allocation14 [shape = 'u8[512]{0}', space=vmem, size = 0x400, scoped, tag = 'input window, operand 9, single buffered']
    #allocation15 [shape = 's32[1]{0}', space=sflag, size = 0x4, scoped, tag = 'scoped memory for team_block_forward.1']
    #allocation16 [shape = 'u8[32768]{0}', space=vmem, size = 0x8000, scoped, tag = 'input window, operand 10, single buffered']
    #allocation17 [shape = 'u8[512]{0}', space=vmem, size = 0x400, scoped, tag = 'input window, operand 11, single buffered']
    #allocation18 [shape = 's32[1]{0}', space=sflag, size = 0x4, scoped, tag = 'scoped memory for team_block_forward.1']
    #allocation19 [shape = 'u8[512]{0}', space=vmem, size = 0x400, scoped, tag = 'input window, operand 12, single buffered']
    #allocation20 [shape = 'u8[512]{0}', space=vmem, size = 0x400, scoped, tag = 'input window, operand 13, single buffered']
    #allocation21 [shape = 's32[1]{0}', space=sflag, size = 0x4, scoped, tag = 'scoped memory for team_block_forward.1']
    #allocation22 [shape = 'u8[32768]{0}', space=vmem, size = 0x8000, scoped, tag = 'input window, operand 14, single buffered']
    #allocation23 [shape = 'u8[512]{0}', space=vmem, size = 0x400, scoped, tag = 'input window, operand 15, single buffered']
    #allocation24 [shape = 's32[1]{0}', space=sflag, size = 0x4, scoped, tag = 'scoped memory for team_block_forward.1']
    #allocation25 [shape = 'u8[65536]{0}', space=vmem, size = 0x10000, scoped, tag = 'input window, operand 16, single buffered']
    #allocation26 [shape = 'u8[1024]{0}', space=vmem, size = 0x400, scoped, tag = 'input window, operand 17, single buffered']
    #allocation27 [shape = 's32[1]{0}', space=sflag, size = 0x4, scoped, tag = 'scoped memory for team_block_forward.1']
    #allocation28 [shape = 'u8[32768]{0}', space=vmem, size = 0x8000, scoped, tag = 'input window, operand 18, single buffered']
    #allocation29 [shape = 'u8[512]{0}', space=vmem, size = 0x400, scoped, tag = 'input window, operand 19, single buffered']
    #allocation30 [shape = 's32[1]{0}', space=sflag, size = 0x4, scoped, tag = 'scoped memory for team_block_forward.1']
    #allocation31 [shape = 'u8[512]{0}', space=vmem, size = 0x400, scoped, tag = 'input window, operand 20, single buffered']
    #allocation32 [shape = 'u8[512]{0}', space=vmem, size = 0x400, scoped, tag = 'input window, operand 21, single buffered']
    #allocation33 [shape = 's32[1]{0}', space=sflag, size = 0x4, scoped, tag = 'scoped memory for team_block_forward.1']
    #allocation34 [shape = 'u8[131072]{0}', space=vmem, size = 0x20000, scoped, tag = 'input window, operand 22, single buffered']
    #allocation35 [shape = 'u8[131072]{0}', space=vmem, size = 0x20000, scoped, tag = 'input window, operand 24, single buffered']
    #allocation36 [shape = 's32[1]{0}', space=sflag, size = 0x4, scoped, tag = 'scoped memory for team_block_forward.1']
    #allocation37 [shape = 'u8[512]{0}', space=vmem, size = 0x400, scoped, tag = 'input window, operand 25, single buffered']
    #allocation38 [shape = 'u8[8192]{0}', space=vmem, size = 0x2000, scoped, tag = 'output window, operand 0, single buffered']
    %31 = vsyncpa [#allocation3], 0
    %32 = vsyncpa [#allocation6], 0
    %33 = vsyncpa [#allocation9], 0
    %34 = vsyncpa [#allocation12], 0
    %35 = vsyncpa [#allocation15], 0
    %36 = vsyncpa [#allocation18], 0
    %37 = vsyncpa [#allocation21], 0
    %38 = vsyncpa [#allocation24], 0
    %39 = vsyncpa [#allocation27], 0
    %40 = vsyncpa [#allocation30], 0
    %41 = vsyncpa [#allocation33], 0
    %42 = vsyncpa [#allocation36], 0
    %43 = vsyncpa [#allocation4], 0
    // Predicated region
    $region2: #{team_block_forward.1} parent=1 // pred_check
      _
    $region3: #{team_block_forward.1} parent=1 // pred_check_branch
      %45 = sbr.rel (0) target = $region5
    $region4: #{team_block_forward.1} parent=1 // pred_region
      _
    $region5: #{team_block_forward.1} parent=1 // pred_fallthru
      _
    // Predicated region
    $region6: #{team_block_forward.1} parent=1 // pred_check
      _
    $region7: #{team_block_forward.1} parent=1 // pred_check_branch
      %47 = sbr.rel (0) target = $region9
    $region8: #{team_block_forward.1} parent=1 // pred_region
      _
    $region9: #{team_block_forward.1} parent=1 // pred_fallthru
      _
    // Predicated region
    $region10: #{team_block_forward.1} parent=1 // pred_check
      _
    $region11: #{team_block_forward.1} parent=1 // pred_check_branch
      %49 = sbr.rel (0) target = $region13
    $region12: #{team_block_forward.1} parent=1 // pred_region
      %51 = vsyncadd [#allocation3], 0
      %s52 = sshll.u32 %s2, 4
      %s53 = int_to_ptr.hbm [resolvable:$true] %s52
      %s54 = sshll.u32 [#allocation2], 4
      %s55 = int_to_ptr.vmem [resolvable:$true] %s54
      %60 = dma.hbm_to_vmem [thread:$0]  %s53, 512, %s55, [#allocation3], 128, 128, 8
    $region13: #{team_block_forward.1} parent=1 // pred_fallthru
      _
    // Predicated region
    $region14: #{team_block_forward.1} parent=1 // pred_check
      _
    $region15: #{team_block_forward.1} parent=1 // pred_check_branch
      %62 = sbr.rel (0) target = $region17
    $region16: #{team_block_forward.1} parent=1 // pred_region
      %64 = vsyncadd [#allocation6], 0
      %s65 = sshll.u32 %s3, 4
      %s66 = int_to_ptr.hbm [resolvable:$true] %s65
      %s67 = sshll.u32 [#allocation5], 4
      %s68 = int_to_ptr.vmem [resolvable:$true] %s67
      %73 = dma.hbm_to_vmem [thread:$0]  %s66, 256, %s68, [#allocation6], 128, 128, 8
    $region17: #{team_block_forward.1} parent=1 // pred_fallthru
      _
    // Predicated region
    $region18: #{team_block_forward.1} parent=1 // pred_check
      _
    $region19: #{team_block_forward.1} parent=1 // pred_check_branch
      %75 = sbr.rel (0) target = $region21
    $region20: #{team_block_forward.1} parent=1 // pred_region
      %77 = vsyncadd [#allocation6], 0
      %s79 = sshll.u32 %s4, 4
      %s80 = int_to_ptr.hbm [resolvable:$true] %s79
      %s81 = sshll.u32 [#allocation7], 4
      %s82 = int_to_ptr.vmem [resolvable:$true] %s81
      %84 = dma.hbm_to_vmem [thread:$0]  %s80, 16, %s82, [#allocation6]
    $region21: #{team_block_forward.1} parent=1 // pred_fallthru
      _
    // Predicated region
    $region22: #{team_block_forward.1} parent=1 // pred_check
      _
    $region23: #{team_block_forward.1} parent=1 // pred_check_branch
      %86 = sbr.rel (0) target = $region25
    $region24: #{team_block_forward.1} parent=1 // pred_region
      %88 = vsyncadd [#allocation9], 0
      %s90 = sshll.u32 %s5, 4
      %s91 = int_to_ptr.hbm [resolvable:$true] %s90
      %s92 = sshll.u32 [#allocation8], 4
      %s93 = int_to_ptr.vmem [resolvable:$true] %s92
      %95 = dma.hbm_to_vmem [thread:$0]  %s91, 16, %s93, [#allocation9]
    $region25: #{team_block_forward.1} parent=1 // pred_fallthru
      _
    // Predicated region
    $region26: #{team_block_forward.1} parent=1 // pred_check
      _
    $region27: #{team_block_forward.1} parent=1 // pred_check_branch
      %97 = sbr.rel (0) target = $region29
    $region28: #{team_block_forward.1} parent=1 // pred_region
      %99 = vsyncadd [#allocation9], 0
      %s100 = sshll.u32 %s6, 4
      %s101 = int_to_ptr.hbm [resolvable:$true] %s100
      %s102 = sshll.u32 [#allocation10], 4
      %s103 = int_to_ptr.vmem [resolvable:$true] %s102
      %108 = dma.hbm_to_vmem [thread:$0]  %s101, 2048, %s103, [#allocation9], 128, 128, 8
    $region29: #{team_block_forward.1} parent=1 // pred_fallthru
      _
    // Predicated region
    $region30: #{team_block_forward.1} parent=1 // pred_check
      _
    $region31: #{team_block_forward.1} parent=1 // pred_check_branch
      %110 = sbr.rel (0) target = $region33
    $region32: #{team_block_forward.1} parent=1 // pred_region
      %112 = vsyncadd [#allocation12], 0
      %s114 = sshll.u32 %s7, 4
      %s115 = int_to_ptr.hbm [resolvable:$true] %s114
      %s116 = sshll.u32 [#allocation11], 4
      %s117 = int_to_ptr.vmem [resolvable:$true] %s116
      %119 = dma.hbm_to_vmem [thread:$0]  %s115, 32, %s117, [#allocation12]
    $region33: #{team_block_forward.1} parent=1 // pred_fallthru
      _
    // Predicated region
    $region34: #{team_block_forward.1} parent=1 // pred_check
      _
    $region35: #{team_block_forward.1} parent=1 // pred_check_branch
      %121 = sbr.rel (0) target = $region37
    $region36: #{team_block_forward.1} parent=1 // pred_region
      %123 = vsyncadd [#allocation12], 0
      %s124 = sshll.u32 %s8, 4
      %s125 = int_to_ptr.hbm [resolvable:$true] %s124
      %s126 = sshll.u32 [#allocation13], 4
      %s127 = int_to_ptr.vmem [resolvable:$true] %s126
      %132 = dma.hbm_to_vmem [thread:$0]  %s125, 1024, %s127, [#allocation12], 64, 64, 4
    $region37: #{team_block_forward.1} parent=1 // pred_fallthru
      _
    // Predicated region
    $region38: #{team_block_forward.1} parent=1 // pred_check
      _
    $region39: #{team_block_forward.1} parent=1 // pred_check_branch
      %134 = sbr.rel (0) target = $region41
    $region40: #{team_block_forward.1} parent=1 // pred_region
      %136 = vsyncadd [#allocation15], 0
      %s138 = sshll.u32 %s9, 4
      %s139 = int_to_ptr.hbm [resolvable:$true] %s138
      %s140 = sshll.u32 [#allocation14], 4
      %s141 = int_to_ptr.vmem [resolvable:$true] %s140
      %143 = dma.hbm_to_vmem [thread:$0]  %s139, 16, %s141, [#allocation15]
    $region41: #{team_block_forward.1} parent=1 // pred_fallthru
      _
    // Predicated region
    $region42: #{team_block_forward.1} parent=1 // pred_check
      _
    $region43: #{team_block_forward.1} parent=1 // pred_check_branch
      %145 = sbr.rel (0) target = $region45
    $region44: #{team_block_forward.1} parent=1 // pred_region
      %147 = vsyncadd [#allocation15], 0
      %s148 = sshll.u32 %s10, 4
      %s149 = int_to_ptr.hbm [resolvable:$true] %s148
      %s150 = sshll.u32 [#allocation16], 4
      %s151 = int_to_ptr.vmem [resolvable:$true] %s150
      %156 = dma.hbm_to_vmem [thread:$0]  %s149, 1024, %s151, [#allocation15], 64, 64, 4
    $region45: #{team_block_forward.1} parent=1 // pred_fallthru
      _
    // Predicated region
    $region46: #{team_block_forward.1} parent=1 // pred_check
      _
    $region47: #{team_block_forward.1} parent=1 // pred_check_branch
      %158 = sbr.rel (0) target = $region49
    $region48: #{team_block_forward.1} parent=1 // pred_region
      %160 = vsyncadd [#allocation18], 0
      %s162 = sshll.u32 %s11, 4
      %s163 = int_to_ptr.hbm [resolvable:$true] %s162
      %s164 = sshll.u32 [#allocation17], 4
      %s165 = int_to_ptr.vmem [resolvable:$true] %s164
      %167 = dma.hbm_to_vmem [thread:$0]  %s163, 16, %s165, [#allocation18]
    $region49: #{team_block_forward.1} parent=1 // pred_fallthru
      _
    // Predicated region
    $region50: #{team_block_forward.1} parent=1 // pred_check
      _
    $region51: #{team_block_forward.1} parent=1 // pred_check_branch
      %169 = sbr.rel (0) target = $region53
    $region52: #{team_block_forward.1} parent=1 // pred_region
      %171 = vsyncadd [#allocation18], 0
      %s173 = sshll.u32 %s12, 4
      %s174 = int_to_ptr.hbm [resolvable:$true] %s173
      %s175 = sshll.u32 [#allocation19], 4
      %s176 = int_to_ptr.vmem [resolvable:$true] %s175
      %178 = dma.hbm_to_vmem [thread:$0]  %s174, 16, %s176, [#allocation18]
    $region53: #{team_block_forward.1} parent=1 // pred_fallthru
      _
    // Predicated region
    $region54: #{team_block_forward.1} parent=1 // pred_check
      _
    $region55: #{team_block_forward.1} parent=1 // pred_check_branch
      %180 = sbr.rel (0) target = $region57
    $region56: #{team_block_forward.1} parent=1 // pred_region
      %182 = vsyncadd [#allocation21], 0
      %s184 = sshll.u32 %s13, 4
      %s185 = int_to_ptr.hbm [resolvable:$true] %s184
      %s186 = sshll.u32 [#allocation20], 4
      %s187 = int_to_ptr.vmem [resolvable:$true] %s186
      %189 = dma.hbm_to_vmem [thread:$0]  %s185, 16, %s187, [#allocation21]
    $region57: #{team_block_forward.1} parent=1 // pred_fallthru
      _
    // Predicated region
    $region58: #{team_block_forward.1} parent=1 // pred_check
      _
    $region59: #{team_block_forward.1} parent=1 // pred_check_branch
      %191 = sbr.rel (0) target = $region61
    $region60: #{team_block_forward.1} parent=1 // pred_region
      %193 = vsyncadd [#allocation21], 0
      %s194 = sshll.u32 %s14, 4
      %s195 = int_to_ptr.hbm [resolvable:$true] %s194
      %s196 = sshll.u32 [#allocation22], 4
      %s197 = int_to_ptr.vmem [resolvable:$true] %s196
      %202 = dma.hbm_to_vmem [thread:$0]  %s195, 1024, %s197, [#allocation21], 64, 64, 4
    $region61: #{team_block_forward.1} parent=1 // pred_fallthru
      _
    // Predicated region
    $region62: #{team_block_forward.1} parent=1 // pred_check
      _
    $region63: #{team_block_forward.1} parent=1 // pred_check_branch
      %204 = sbr.rel (0) target = $region65
    $region64: #{team_block_forward.1} parent=1 // pred_region
      %206 = vsyncadd [#allocation24], 0
      %s208 = sshll.u32 %s15, 4
      %s209 = int_to_ptr.hbm [resolvable:$true] %s208
      %s210 = sshll.u32 [#allocation23], 4
      %s211 = int_to_ptr.vmem [resolvable:$true] %s210
      %213 = dma.hbm_to_vmem [thread:$0]  %s209, 16, %s211, [#allocation24]
    $region65: #{team_block_forward.1} parent=1 // pred_fallthru
      _
    // Predicated region
    $region66: #{team_block_forward.1} parent=1 // pred_check
      _
    $region67: #{team_block_forward.1} parent=1 // pred_check_branch
      %215 = sbr.rel (0) target = $region69
    $region68: #{team_block_forward.1} parent=1 // pred_region
      %217 = vsyncadd [#allocation24], 0
      %s218 = sshll.u32 %s16, 4
      %s219 = int_to_ptr.hbm [resolvable:$true] %s218
      %s220 = sshll.u32 [#allocation25], 4
      %s221 = int_to_ptr.vmem [resolvable:$true] %s220
      %226 = dma.hbm_to_vmem [thread:$0]  %s219, 2048, %s221, [#allocation24], 128, 128, 8
    $region69: #{team_block_forward.1} parent=1 // pred_fallthru
      _
    // Predicated region
    $region70: #{team_block_forward.1} parent=1 // pred_check
      _
    $region71: #{team_block_forward.1} parent=1 // pred_check_branch
      %228 = sbr.rel (0) target = $region73
    $region72: #{team_block_forward.1} parent=1 // pred_region
      %230 = vsyncadd [#allocation27], 0
      %s232 = sshll.u32 %s17, 4
      %s233 = int_to_ptr.hbm [resolvable:$true] %s232
      %s234 = sshll.u32 [#allocation26], 4
      %s235 = int_to_ptr.vmem [resolvable:$true] %s234
      %237 = dma.hbm_to_vmem [thread:$0]  %s233, 32, %s235, [#allocation27]
    $region73: #{team_block_forward.1} parent=1 // pred_fallthru
      _
    // Predicated region
    $region74: #{team_block_forward.1} parent=1 // pred_check
      _
    $region75: #{team_block_forward.1} parent=1 // pred_check_branch
      %239 = sbr.rel (0) target = $region77
    $region76: #{team_block_forward.1} parent=1 // pred_region
      %241 = vsyncadd [#allocation27], 0
      %s242 = sshll.u32 %s18, 4
      %s243 = int_to_ptr.hbm [resolvable:$true] %s242
      %s244 = sshll.u32 [#allocation28], 4
      %s245 = int_to_ptr.vmem [resolvable:$true] %s244
      %250 = dma.hbm_to_vmem [thread:$0]  %s243, 1024, %s245, [#allocation27], 64, 64, 4
    $region77: #{team_block_forward.1} parent=1 // pred_fallthru
      _
    // Predicated region
    $region78: #{team_block_forward.1} parent=1 // pred_check
      _
    $region79: #{team_block_forward.1} parent=1 // pred_check_branch
      %252 = sbr.rel (0) target = $region81
    $region80: #{team_block_forward.1} parent=1 // pred_region
      %254 = vsyncadd [#allocation30], 0
      %s256 = sshll.u32 %s19, 4
      %s257 = int_to_ptr.hbm [resolvable:$true] %s256
      %s258 = sshll.u32 [#allocation29], 4
      %s259 = int_to_ptr.vmem [resolvable:$true] %s258
      %261 = dma.hbm_to_vmem [thread:$0]  %s257, 16, %s259, [#allocation30]
    $region81: #{team_block_forward.1} parent=1 // pred_fallthru
      _
    // Predicated region
    $region82: #{team_block_forward.1} parent=1 // pred_check
      _
    $region83: #{team_block_forward.1} parent=1 // pred_check_branch
      %263 = sbr.rel (0) target = $region85
    $region84: #{team_block_forward.1} parent=1 // pred_region
      %265 = vsyncadd [#allocation30], 0
      %s267 = sshll.u32 %s20, 4
      %s268 = int_to_ptr.hbm [resolvable:$true] %s267
      %s269 = sshll.u32 [#allocation31], 4
      %s270 = int_to_ptr.vmem [resolvable:$true] %s269
      %272 = dma.hbm_to_vmem [thread:$0]  %s268, 16, %s270, [#allocation30]
    $region85: #{team_block_forward.1} parent=1 // pred_fallthru
      _
    // Predicated region
    $region86: #{team_block_forward.1} parent=1 // pred_check
      _
    $region87: #{team_block_forward.1} parent=1 // pred_check_branch
      %274 = sbr.rel (0) target = $region89
    $region88: #{team_block_forward.1} parent=1 // pred_region
      %276 = vsyncadd [#allocation33], 0
      %s278 = sshll.u32 %s21, 4
      %s279 = int_to_ptr.hbm [resolvable:$true] %s278
      %s280 = sshll.u32 [#allocation32], 4
      %s281 = int_to_ptr.vmem [resolvable:$true] %s280
      %283 = dma.hbm_to_vmem [thread:$0]  %s279, 16, %s281, [#allocation33]
    $region89: #{team_block_forward.1} parent=1 // pred_fallthru
      _
    // Predicated region
    $region90: #{team_block_forward.1} parent=1 // pred_check
      _
    $region91: #{team_block_forward.1} parent=1 // pred_check_branch
      %285 = sbr.rel (0) target = $region93
    $region92: #{team_block_forward.1} parent=1 // pred_region
      %287 = vsyncadd [#allocation33], 0
      %s288 = sshll.u32 %s22, 4
      %s289 = int_to_ptr.hbm [resolvable:$true] %s288
      %s290 = sshll.u32 [#allocation34], 4
      %s291 = int_to_ptr.vmem [resolvable:$true] %s290
      %296 = dma.hbm_to_vmem [thread:$0]  %s289, 4096, %s291, [#allocation33], 256, 256, 16
    $region93: #{team_block_forward.1} parent=1 // pred_fallthru
      _
    // Predicated region
    $region94: #{team_block_forward.1} parent=1 // pred_check
      _
    $region95: #{team_block_forward.1} parent=1 // pred_check_branch
      %298 = sbr.rel (0) target = $region97
    $region96: #{team_block_forward.1} parent=1 // pred_region
      _
    $region97: #{team_block_forward.1} parent=1 // pred_fallthru
      _
    // Predicated region
    $region98: #{team_block_forward.1} parent=1 // pred_check
      _
    $region99: #{team_block_forward.1} parent=1 // pred_check_branch
      %300 = sbr.rel (0) target = $region101
    $region100: #{team_block_forward.1} parent=1 // pred_region
      %302 = vsyncadd [#allocation36], 0
      %s303 = sshll.u32 %s24, 4
      %s304 = int_to_ptr.hbm [resolvable:$true] %s303
      %s305 = sshll.u32 [#allocation35], 4
      %s306 = int_to_ptr.vmem [resolvable:$true] %s305
      %311 = dma.hbm_to_vmem [thread:$0]  %s304, 4096, %s306, [#allocation36], 64, 64, 4
    $region101: #{team_block_forward.1} parent=1 // pred_fallthru
      _
    // Predicated region
    $region102: #{team_block_forward.1} parent=1 // pred_check
      _
    $region103: #{team_block_forward.1} parent=1 // pred_check_branch
      %313 = sbr.rel (0) target = $region105
    $region104: #{team_block_forward.1} parent=1 // pred_region
      %315 = vsyncadd [#allocation36], 0
      %s317 = sshll.u32 %s25, 4
      %s318 = int_to_ptr.hbm [resolvable:$true] %s317
      %s319 = sshll.u32 [#allocation37], 4
      %s320 = int_to_ptr.vmem [resolvable:$true] %s319
      %322 = dma.hbm_to_vmem [thread:$0]  %s318, 16, %s320, [#allocation36]
    $region105: #{team_block_forward.1} parent=1 // pred_fallthru
      _
    // Predicated region
    $region106: #{team_block_forward.1} parent=1 // pred_check
      _
    $region107: #{team_block_forward.1} parent=1 // pred_check_branch
      %324 = sbr.rel (0) target = $region109
    $region108: #{team_block_forward.1} parent=1 // pred_region
      %326 = dma.done [#allocation3], 512
    $region109: #{team_block_forward.1} parent=1 // pred_fallthru
      _
    // Predicated region
    $region110: #{team_block_forward.1} parent=1 // pred_check
      _
    $region111: #{team_block_forward.1} parent=1 // pred_check_branch
      %328 = sbr.rel (0) target = $region113
    $region112: #{team_block_forward.1} parent=1 // pred_region
      %330 = dma.done [#allocation6], 256
    $region113: #{team_block_forward.1} parent=1 // pred_fallthru
      _
    // Predicated region
    $region114: #{team_block_forward.1} parent=1 // pred_check
      _
    $region115: #{team_block_forward.1} parent=1 // pred_check_branch
      %332 = sbr.rel (0) target = $region117
    $region116: #{team_block_forward.1} parent=1 // pred_region
      %334 = dma.done [#allocation6], 16
    $region117: #{team_block_forward.1} parent=1 // pred_fallthru
      _
    // Predicated region
    $region118: #{team_block_forward.1} parent=1 // pred_check
      _
    $region119: #{team_block_forward.1} parent=1 // pred_check_branch
      %336 = sbr.rel (0) target = $region121
    $region120: #{team_block_forward.1} parent=1 // pred_region
      %338 = dma.done [#allocation9], 16
    $region121: #{team_block_forward.1} parent=1 // pred_fallthru
      _
    // Predicated region
    $region122: #{team_block_forward.1} parent=1 // pred_check
      _
    $region123: #{team_block_forward.1} parent=1 // pred_check_branch
      %340 = sbr.rel (0) target = $region125
    $region124: #{team_block_forward.1} parent=1 // pred_region
      %342 = dma.done [#allocation9], 2048
    $region125: #{team_block_forward.1} parent=1 // pred_fallthru
      _
    // Predicated region
    $region126: #{team_block_forward.1} parent=1 // pred_check
      _
    $region127: #{team_block_forward.1} parent=1 // pred_check_branch
      %344 = sbr.rel (0) target = $region129
    $region128: #{team_block_forward.1} parent=1 // pred_region
      %346 = dma.done [#allocation12], 32
    $region129: #{team_block_forward.1} parent=1 // pred_fallthru
      _
    // Predicated region
    $region130: #{team_block_forward.1} parent=1 // pred_check
      _
    $region131: #{team_block_forward.1} parent=1 // pred_check_branch
      %348 = sbr.rel (0) target = $region133
    $region132: #{team_block_forward.1} parent=1 // pred_region
      %350 = dma.done [#allocation12], 1024
    $region133: #{team_block_forward.1} parent=1 // pred_fallthru
      _
    // Predicated region
    $region134: #{team_block_forward.1} parent=1 // pred_check
      _
    $region135: #{team_block_forward.1} parent=1 // pred_check_branch
      %352 = sbr.rel (0) target = $region137
    $region136: #{team_block_forward.1} parent=1 // pred_region
      %354 = dma.done [#allocation15], 16
    $region137: #{team_block_forward.1} parent=1 // pred_fallthru
      _
    // Predicated region
    $region138: #{team_block_forward.1} parent=1 // pred_check
      _
    $region139: #{team_block_forward.1} parent=1 // pred_check_branch
      %356 = sbr.rel (0) target = $region141
    $region140: #{team_block_forward.1} parent=1 // pred_region
      %358 = dma.done [#allocation15], 1024
    $region141: #{team_block_forward.1} parent=1 // pred_fallthru
      _
    // Predicated region
    $region142: #{team_block_forward.1} parent=1 // pred_check
      _
    $region143: #{team_block_forward.1} parent=1 // pred_check_branch
      %360 = sbr.rel (0) target = $region145
    $region144: #{team_block_forward.1} parent=1 // pred_region
      %362 = dma.done [#allocation18], 16
    $region145: #{team_block_forward.1} parent=1 // pred_fallthru
      _
    // Predicated region
    $region146: #{team_block_forward.1} parent=1 // pred_check
      _
    $region147: #{team_block_forward.1} parent=1 // pred_check_branch
      %364 = sbr.rel (0) target = $region149
    $region148: #{team_block_forward.1} parent=1 // pred_region
      %366 = dma.done [#allocation18], 16
    $region149: #{team_block_forward.1} parent=1 // pred_fallthru
      _
    // Predicated region
    $region150: #{team_block_forward.1} parent=1 // pred_check
      _
    $region151: #{team_block_forward.1} parent=1 // pred_check_branch
      %368 = sbr.rel (0) target = $region153
    $region152: #{team_block_forward.1} parent=1 // pred_region
      %370 = dma.done [#allocation21], 16
    $region153: #{team_block_forward.1} parent=1 // pred_fallthru
      _
    // Predicated region
    $region154: #{team_block_forward.1} parent=1 // pred_check
      _
    $region155: #{team_block_forward.1} parent=1 // pred_check_branch
      %372 = sbr.rel (0) target = $region157
    $region156: #{team_block_forward.1} parent=1 // pred_region
      %374 = dma.done [#allocation21], 1024
    $region157: #{team_block_forward.1} parent=1 // pred_fallthru
      _
    // Predicated region
    $region158: #{team_block_forward.1} parent=1 // pred_check
      _
    $region159: #{team_block_forward.1} parent=1 // pred_check_branch
      %376 = sbr.rel (0) target = $region161
    $region160: #{team_block_forward.1} parent=1 // pred_region
      %378 = dma.done [#allocation24], 16
    $region161: #{team_block_forward.1} parent=1 // pred_fallthru
      _
    // Predicated region
    $region162: #{team_block_forward.1} parent=1 // pred_check
      _
    $region163: #{team_block_forward.1} parent=1 // pred_check_branch
      %380 = sbr.rel (0) target = $region165
    $region164: #{team_block_forward.1} parent=1 // pred_region
      %382 = dma.done [#allocation24], 2048
    $region165: #{team_block_forward.1} parent=1 // pred_fallthru
      _
    // Predicated region
    $region166: #{team_block_forward.1} parent=1 // pred_check
      _
    $region167: #{team_block_forward.1} parent=1 // pred_check_branch
      %384 = sbr.rel (0) target = $region169
    $region168: #{team_block_forward.1} parent=1 // pred_region
      %386 = dma.done [#allocation27], 32
    $region169: #{team_block_forward.1} parent=1 // pred_fallthru
      _
    // Predicated region
    $region170: #{team_block_forward.1} parent=1 // pred_check
      _
    $region171: #{team_block_forward.1} parent=1 // pred_check_branch
      %388 = sbr.rel (0) target = $region173
    $region172: #{team_block_forward.1} parent=1 // pred_region
      %390 = dma.done [#allocation27], 1024
    $region173: #{team_block_forward.1} parent=1 // pred_fallthru
      _
    // Predicated region
    $region174: #{team_block_forward.1} parent=1 // pred_check
      _
    $region175: #{team_block_forward.1} parent=1 // pred_check_branch
      %392 = sbr.rel (0) target = $region177
    $region176: #{team_block_forward.1} parent=1 // pred_region
      %394 = dma.done [#allocation30], 16
    $region177: #{team_block_forward.1} parent=1 // pred_fallthru
      _
    // Predicated region
    $region178: #{team_block_forward.1} parent=1 // pred_check
      _
    $region179: #{team_block_forward.1} parent=1 // pred_check_branch
      %396 = sbr.rel (0) target = $region181
    $region180: #{team_block_forward.1} parent=1 // pred_region
      %398 = dma.done [#allocation30], 16
    $region181: #{team_block_forward.1} parent=1 // pred_fallthru
      _
    // Predicated region
    $region182: #{team_block_forward.1} parent=1 // pred_check
      _
    $region183: #{team_block_forward.1} parent=1 // pred_check_branch
      %400 = sbr.rel (0) target = $region185
    $region184: #{team_block_forward.1} parent=1 // pred_region
      %402 = dma.done [#allocation33], 16
    $region185: #{team_block_forward.1} parent=1 // pred_fallthru
      _
    // Predicated region
    $region186: #{team_block_forward.1} parent=1 // pred_check
      _
    $region187: #{team_block_forward.1} parent=1 // pred_check_branch
      %404 = sbr.rel (0) target = $region189
    $region188: #{team_block_forward.1} parent=1 // pred_region
      %406 = dma.done [#allocation33], 4096
    $region189: #{team_block_forward.1} parent=1 // pred_fallthru
      _
    // Predicated region
    $region190: #{team_block_forward.1} parent=1 // pred_check
      _
    $region191: #{team_block_forward.1} parent=1 // pred_check_branch
      %408 = sbr.rel (0) target = $region193
    $region192: #{team_block_forward.1} parent=1 // pred_region
      %410 = dma.done [#allocation36], 4096
    $region193: #{team_block_forward.1} parent=1 // pred_fallthru
      _
    // Predicated region
    $region194: #{team_block_forward.1} parent=1 // pred_check
      _
    $region195: #{team_block_forward.1} parent=1 // pred_check_branch
      %412 = sbr.rel (0) target = $region197
    $region196: #{team_block_forward.1} parent=1 // pred_region
      %414 = dma.done [#allocation36], 16
    $region197: #{team_block_forward.1} parent=1 // pred_fallthru
      _
    %v416 = vld [vmem:[%s1] sm:$0xff]
    %v417 = vld [vmem:[%s1 + $0x8] sm:$0xff]
    %v418 = vld [vmem:[#allocation5] sm:$0xff]
    %v419 = vld [vmem:[#allocation5 + $0x8] sm:$0xff]
    %420 = vadd.xlane.f32.xlu0 %v418
    %v421 = vpop.xlane.xlu0 %420
    %422 = vadd.xlane.f32.xlu0 %v419
    %v423 = vpop.xlane.xlu0 %422
    %v424 = vrcp.pop 128.0
    %v425 = vmul.f32 128.0, %v424
    %v426 = vsub.f32 1.0, %v425
    %v427 = vmul.f32 %v424, %v426
    %v428 = vadd.f32 %v424, %v427
    %vm429 = vweird.f32 %v424
    %v430 = vsel %vm429, %v424, %v428
    %v431 = vmul.f32 %v421, %v430
    %v432 = vmul.f32 %v423, %v430
    %v433 = vsub.f32 %v418, %v431
    %v434 = vsub.f32 %v419, %v432
    %v435 = vmul.f32 %v433, %v433
    %v436 = vmul.f32 %v434, %v434
    %437 = vadd.xlane.f32.xlu0 %v435
    %v438 = vpop.xlane.xlu0 %437
    %439 = vadd.xlane.f32.xlu0 %v436
    %v440 = vpop.xlane.xlu0 %439
    %v441 = vmul.f32 %v438, %v430
    %v442 = vmul.f32 %v440, %v430
    %v443 = vadd.f32 %v441, 1e-05
    %v444 = vadd.f32 %v442, 1e-05
    %v445 = vrsqrt.pop %v443
    %v446 = vmul.f32 %v445, %v443
    %v447 = vmul.f32 %v446, %v445
    %v448 = vmul.f32 0.5, %v447
    %v449 = vsub.f32 1.5, %v448
    %v450 = vmul.f32 %v445, %v449
    %vm451 = vweird.f32 %v443
    %vm452 = vweird.f32 %v445
    %vm453 = vmor %vm451, %vm452
    %v454 = vsel %vm453, %v445, %v450
    %v455 = vrsqrt.pop %v444
    %v456 = vmul.f32 %v455, %v444
    %v457 = vmul.f32 %v456, %v455
    %v458 = vmul.f32 0.5, %v457
    %v459 = vsub.f32 1.5, %v458
    %v460 = vmul.f32 %v455, %v459
    %vm461 = vweird.f32 %v444
    %vm462 = vweird.f32 %v455
    %vm463 = vmor %vm461, %vm462
    %v464 = vsel %vm463, %v455, %v460
    %v465 = vmul.f32 %v433, %v454
    %v466 = vmul.f32 %v434, %v464
    %v467 = vld [vmem:[#allocation7] sm:$0x1]
    %v469 = vperm.slane %v467, 0
    %v471 = vmul.f32 %v465, %v469
    %v472 = vmul.f32 %v466, %v469
    %v473 = vld [vmem:[#allocation8] sm:$0x1]
    %v475 = vperm.slane %v473, 0
    %v477 = vadd.f32 %v471, %v475
    %v478 = vadd.f32 %v472, %v475
    %v479 = vadd.f32 %v416, %v477
    %v480 = vadd.f32 %v417, %v478
    %v481 = vpack.c.bf16 %v480, %v479
    %v482 = vld [vmem:[#allocation10] sm:$0xff]
    %v483 = vld [vmem:[#allocation10 + $0x8] sm:$0xff]
    %v484 = vld [vmem:[#allocation10 + $0x10] sm:$0xff]
    %v485 = vld [vmem:[#allocation10 + $0x18] sm:$0xff]
    %v486 = vld [vmem:[#allocation10 + $0x20] sm:$0xff]
    %v487 = vld [vmem:[#allocation10 + $0x28] sm:$0xff]
    %v488 = vld [vmem:[#allocation10 + $0x30] sm:$0xff]
    %v489 = vld [vmem:[#allocation10 + $0x38] sm:$0xff]
    %v490 = vld [vmem:[#allocation10 + $0x40] sm:$0xff]
    %v491 = vld [vmem:[#allocation10 + $0x48] sm:$0xff]
    %v492 = vld [vmem:[#allocation10 + $0x50] sm:$0xff]
    %v493 = vld [vmem:[#allocation10 + $0x58] sm:$0xff]
    %v494 = vld [vmem:[#allocation10 + $0x60] sm:$0xff]
    %v495 = vld [vmem:[#allocation10 + $0x68] sm:$0xff]
    %v496 = vld [vmem:[#allocation10 + $0x70] sm:$0xff]
    %v497 = vld [vmem:[#allocation10 + $0x78] sm:$0xff]
    %v498 = vld [vmem:[#allocation11] sm:$0x3]
    %v500 = vperm.slane %v498, 0
    %v501 = vperm.slane %v498, 1
    %v520 = vunpack.c.l.b16 %v482
    %v521 = vunpack.c.h.b16 %v482
    %v522 = vunpack.c.l.b16 %v483
    %v523 = vunpack.c.h.b16 %v483
    %v524 = vunpack.c.l.b16 %v484
    %v525 = vunpack.c.h.b16 %v484
    %v526 = vunpack.c.l.b16 %v485
    %v527 = vunpack.c.h.b16 %v485
    %v528 = vunpack.c.l.b16 %v486
    %v529 = vunpack.c.h.b16 %v486
    %v530 = vunpack.c.l.b16 %v487
    %v531 = vunpack.c.h.b16 %v487
    %v532 = vunpack.c.l.b16 %v488
    %v533 = vunpack.c.h.b16 %v488
    %v534 = vunpack.c.l.b16 %v489
    %v535 = vunpack.c.h.b16 %v489
    %v536 = vunpack.c.l.b16 %v490
    %v537 = vunpack.c.h.b16 %v490
    %v538 = vunpack.c.l.b16 %v491
    %v539 = vunpack.c.h.b16 %v491
    %v540 = vunpack.c.l.b16 %v492
    %v541 = vunpack.c.h.b16 %v492
    %v542 = vunpack.c.l.b16 %v493
    %v543 = vunpack.c.h.b16 %v493
    %v544 = vunpack.c.l.b16 %v494
    %v545 = vunpack.c.h.b16 %v494
    %v546 = vunpack.c.l.b16 %v495
    %v547 = vunpack.c.h.b16 %v495
    %v548 = vunpack.c.l.b16 %v496
    %v549 = vunpack.c.h.b16 %v496
    %v550 = vunpack.c.l.b16 %v497
    %v551 = vunpack.c.h.b16 %v497
    %v552 = vpack.c.b16 %v522, %v520
    %v553 = vpack.c.b16 %v523, %v521
    %v554 = vpack.c.b16 %v526, %v524
    %v555 = vpack.c.b16 %v527, %v525
    %v556 = vpack.c.b16 %v530, %v528
    %v557 = vpack.c.b16 %v531, %v529
    %v558 = vpack.c.b16 %v534, %v532
    %v559 = vpack.c.b16 %v535, %v533
    %v560 = vpack.c.b16 %v538, %v536
    %v561 = vpack.c.b16 %v539, %v537
    %v562 = vpack.c.b16 %v542, %v540
    %v563 = vpack.c.b16 %v543, %v541
    %v564 = vpack.c.b16 %v546, %v544
    %v565 = vpack.c.b16 %v547, %v545
    %v566 = vpack.c.b16 %v550, %v548
    %v567 = vpack.c.b16 %v551, %v549
    %584 = vmatpush.bf16.msra.mxu0 %v566
    %585 = vmatpush.bf16.msra.mxu0 %v564
    %586 = vmatpush.bf16.msra.mxu0 %v562
    %587 = vmatpush.bf16.msra.mxu0 %v560
    %588 = vmatpush.bf16.msra.mxu0 %v558
    %589 = vmatpush.bf16.msra.mxu0 %v556
    %590 = vmatpush.bf16.msra.mxu0 %v554
    %591 = vmatpush.bf16.msra.mxu0 %v552
    %592 = vmatmul.bf16.gmra.mxu0 %v481
    %v593 = vpop.f32.mrf.mxu0
    %v594 = vadd.f32 %v500, %v593
    %v595 = vpop.f32.mrf.mxu0
    %v596 = vadd.f32 %v500, %v595
    %597 = vdwg.mxu0
    %598 = vmatpush.bf16.msra.mxu0 %v567
    %599 = vmatpush.bf16.msra.mxu0 %v565
    %600 = vmatpush.bf16.msra.mxu0 %v563
    %601 = vmatpush.bf16.msra.mxu0 %v561
    %602 = vmatpush.bf16.msra.mxu0 %v559
    %603 = vmatpush.bf16.msra.mxu0 %v557
    %604 = vmatpush.bf16.msra.mxu0 %v555
    %605 = vmatpush.bf16.msra.mxu0 %v553
    %606 = vmatmul.bf16.gmra.mxu0 %v481
    %v607 = vpop.f32.mrf.mxu0
    %v608 = vadd.f32 %v501, %v607
    %v609 = vpop.f32.mrf.mxu0
    %v610 = vadd.f32 %v501, %v609
    %611 = vdwg.mxu0
    %v612 = vpack.c.bf16 %v478, %v477
    %v613 = vld [vmem:[#allocation13] sm:$0xf]
    %v614 = vld [vmem:[#allocation13 + $0x4] sm:$0xf]
    %v615 = vld [vmem:[#allocation13 + $0x8] sm:$0xf]
    %v616 = vld [vmem:[#allocation13 + $0xc] sm:$0xf]
    %v617 = vld [vmem:[#allocation13 + $0x10] sm:$0xf]
    %v618 = vld [vmem:[#allocation13 + $0x14] sm:$0xf]
    %v619 = vld [vmem:[#allocation13 + $0x18] sm:$0xf]
    %v620 = vld [vmem:[#allocation13 + $0x1c] sm:$0xf]
    %v621 = vld [vmem:[#allocation13 + $0x20] sm:$0xf]
    %v622 = vld [vmem:[#allocation13 + $0x24] sm:$0xf]
    %v623 = vld [vmem:[#allocation13 + $0x28] sm:$0xf]
    %v624 = vld [vmem:[#allocation13 + $0x2c] sm:$0xf]
    %v625 = vld [vmem:[#allocation13 + $0x30] sm:$0xf]
    %v626 = vld [vmem:[#allocation13 + $0x34] sm:$0xf]
    %v627 = vld [vmem:[#allocation13 + $0x38] sm:$0xf]
    %v628 = vld [vmem:[#allocation13 + $0x3c] sm:$0xf]
    %v629 = vld [vmem:[#allocation14] sm:$0x1]
    %v631 = vperm.slane %v629, 0
    %v649 = vunpack.c.l.b16 %v613
    %v650 = vunpack.c.l.b16 %v614
    %v651 = vunpack.c.l.b16 %v615
    %v652 = vunpack.c.l.b16 %v616
    %v653 = vunpack.c.l.b16 %v617
    %v654 = vunpack.c.l.b16 %v618
    %v655 = vunpack.c.l.b16 %v619
    %v656 = vunpack.c.l.b16 %v620
    %v657 = vunpack.c.l.b16 %v621
    %v658 = vunpack.c.l.b16 %v622
    %v659 = vunpack.c.l.b16 %v623
    %v660 = vunpack.c.l.b16 %v624
    %v661 = vunpack.c.l.b16 %v625
    %v662 = vunpack.c.l.b16 %v626
    %v663 = vunpack.c.l.b16 %v627
    %v664 = vunpack.c.l.b16 %v628
    %v665 = vpack.c.b16 %v650, %v649
    %v666 = vpack.c.b16 %v652, %v651
    %v667 = vpack.c.b16 %v654, %v653
    %v668 = vpack.c.b16 %v656, %v655
    %v669 = vpack.c.b16 %v658, %v657
    %v670 = vpack.c.b16 %v660, %v659
    %v671 = vpack.c.b16 %v662, %v661
    %v672 = vpack.c.b16 %v664, %v663
    %681 = vmatpush.bf16.msra.mxu0 %v672
    %682 = vmatpush.bf16.msra.mxu0 %v671
    %683 = vmatpush.bf16.msra.mxu0 %v670
    %684 = vmatpush.bf16.msra.mxu0 %v669
    %685 = vmatpush.bf16.msra.mxu0 %v668
    %686 = vmatpush.bf16.msra.mxu0 %v667
    %687 = vmatpush.bf16.msra.mxu0 %v666
    %688 = vmatpush.bf16.msra.mxu0 %v665
    %689 = vmatmul.bf16.gmra.mxu0 %v612
    %v690 = vpop.f32.mrf.mxu0
    %v691 = vadd.f32 %v631, %v690
    %v692 = vpop.f32.mrf.mxu0
    %v693 = vadd.f32 %v631, %v692
    %694 = vdwg.mxu0
    %v695 = vld [vmem:[%s0] sm:$0x1]
    %v696 = vld [vmem:[%s0 + $0x1] sm:$0x1]
    %vm697 = vcmp.eq.s32.totalorder %v695, 0
    %vm698 = vcmp.eq.s32.totalorder %v696, 0
    %v699 = vsel %vm697, -1e+09, 0.0
    %v700 = vsel %vm698, -1e+09, 0.0
    %v703 = vperm.slane %v699, 0
    %v704 = vperm.slane %v700, 0
    %v707 = vpack.c.bf16 %v594, %v594
    %v708 = vpack.c.bf16 %v596, %v596
    %v709 = vpack.c.bf16 %v608, %v608
    %v710 = vpack.c.bf16 %v610, %v610
    %v711 = vpack.c.bf16 %v691, %v691
    %v712 = vpack.c.bf16 %v693, %v693
    %vm713 = vcmask 523264
    %v715 = vsel %vm713, %v707, 0
    %v718 = vsel %vm713, %v709, 0
    %720 = vmatpush.bf16.xpose.msra.mxu0 0
    %721 = vmatpush.bf16.xpose.msra.mxu0 0
    %722 = vmatpush.bf16.xpose.msra.mxu0 0
    %723 = vmatpush.bf16.xpose.msra.mxu0 0
    %724 = vmatpush.bf16.xpose.msra.mxu0 0
    %725 = vmatpush.bf16.xpose.msra.mxu0 0
    %726 = vmatpush.bf16.xpose.msra.mxu0 0
    %727 = vmatpush.bf16.xpose.msra.mxu0 %v718
    %728 = vmatmul.bf16.gmra.mxu0 %v715
    %v729 = vpop.f32.mrf.mxu0
    %v730 = vadd.f32 %v703, %v729
    %v731 = vpop.f32.mrf.mxu0
    %732 = vdwg.mxu0
    %v734 = vsel %vm713, %v708, 0
    %v737 = vsel %vm713, %v710, 0
    %739 = vmatpush.bf16.xpose.msra.mxu0 0
    %740 = vmatpush.bf16.xpose.msra.mxu0 0
    %741 = vmatpush.bf16.xpose.msra.mxu0 0
    %742 = vmatpush.bf16.xpose.msra.mxu0 0
    %743 = vmatpush.bf16.xpose.msra.mxu0 0
    %744 = vmatpush.bf16.xpose.msra.mxu0 0
    %745 = vmatpush.bf16.xpose.msra.mxu0 0
    %746 = vmatpush.bf16.xpose.msra.mxu0 %v737
    %747 = vmatmul.bf16.gmra.mxu0 %v734
    %v748 = vpop.f32.mrf.mxu0
    %v749 = vadd.f32 %v704, %v748
    %v750 = vpop.f32.mrf.mxu0
    %751 = vdwg.mxu0
    %vm752 = vcmask 64512
    %v753 = vsel %vm752, %v730, -inf
    %754 = vmax.xlane.f32.xlu0 %v753
    %v755 = vpop.xlane.xlu0 %754
    %v756 = vsel %vm752, %v749, -inf
    %757 = vmax.xlane.f32.xlu0 %v756
    %v758 = vpop.xlane.xlu0 %757
    %v759 = vsub.f32 %v730, %v755
    %v760 = vsub.f32 %v749, %v758
    %v761 = vmul.f32 %v759, 1.442695
    %v762 = vpow.pop %v761
    %v763 = vmul.f32 %v760, 1.442695
    %v764 = vpow.pop %v763
    %v765 = vsel %vm752, %v762, 0.0
    %766 = vadd.xlane.f32.xlu0 %v765
    %v767 = vpop.xlane.xlu0 %766
    %v768 = vsel %vm752, %v764, 0.0
    %769 = vadd.xlane.f32.xlu0 %v768
    %v770 = vpop.xlane.xlu0 %769
    %v771 = vrcp.pop %v767
    %v772 = vrcp.pop %v770
    %v773 = vmul.f32 %v762, %v771
    %v774 = vmul.f32 %v764, %v772
    %v775 = vpack.c.bf16 %v773, %v773
    %v776 = vpack.c.bf16 %v774, %v774
    %v778 = vsel %vm752, %v775, 0
    %vm780 = vcmask 1043456
    %v782 = vsel %vm780, %v711, 0
    %784 = vmatpush.bf16.msra.mxu0 0
    %785 = vmatpush.bf16.msra.mxu0 0
    %786 = vmatpush.bf16.msra.mxu0 0
    %787 = vmatpush.bf16.msra.mxu0 0
    %788 = vmatpush.bf16.msra.mxu0 0
    %789 = vmatpush.bf16.msra.mxu0 0
    %790 = vmatpush.bf16.msra.mxu0 0
    %791 = vmatpush.bf16.msra.mxu0 %v782
    %792 = vmatmul.bf16.gmra.mxu0 %v778
    %v793 = vpop.f32.mrf.mxu0
    %v794 = vadd.f32 0.0, %v793
    %v795 = vpop.f32.mrf.mxu0
    %796 = vdwg.mxu0
    %v798 = vsel %vm752, %v776, 0
    %v801 = vsel %vm780, %v712, 0
    %803 = vmatpush.bf16.msra.mxu0 0
    %804 = vmatpush.bf16.msra.mxu0 0
    %805 = vmatpush.bf16.msra.mxu0 0
    %806 = vmatpush.bf16.msra.mxu0 0
    %807 = vmatpush.bf16.msra.mxu0 0
    %808 = vmatpush.bf16.msra.mxu0 0
    %809 = vmatpush.bf16.msra.mxu0 0
    %810 = vmatpush.bf16.msra.mxu0 %v801
    %811 = vmatmul.bf16.gmra.mxu0 %v798
    %v812 = vpop.f32.mrf.mxu0
    %v813 = vadd.f32 0.0, %v812
    %v814 = vpop.f32.mrf.mxu0
    %815 = vdwg.mxu0
    %v817 = vunpack.c.l.b16 %v707
    %v818 = vpack.c.b16 %v817, %v817
    %819 = vrot.lane.b32.xlu0 %v818, 64
    %v820 = vpop.permute.xlu0 %819
    %v822 = vunpack.c.l.b16 %v709
    %v823 = vpack.c.b16 %v822, %v822
    %824 = vrot.lane.b32.xlu0 %v823, 64
    %v825 = vpop.permute.xlu0 %824
    %v827 = vsel %vm713, %v820, 0
    %v830 = vsel %vm713, %v825, 0
    %832 = vmatpush.bf16.xpose.msra.mxu0 0
    %833 = vmatpush.bf16.xpose.msra.mxu0 0
    %834 = vmatpush.bf16.xpose.msra.mxu0 0
    %835 = vmatpush.bf16.xpose.msra.mxu0 0
    %836 = vmatpush.bf16.xpose.msra.mxu0 0
    %837 = vmatpush.bf16.xpose.msra.mxu0 0
    %838 = vmatpush.bf16.xpose.msra.mxu0 0
    %839 = vmatpush.bf16.xpose.msra.mxu0 %v830
    %840 = vmatmul.bf16.gmra.mxu0 %v827
    %v841 = vpop.f32.mrf.mxu0
    %v842 = vadd.f32 %v703, %v841
    %v843 = vpop.f32.mrf.mxu0
    %844 = vdwg.mxu0
    %v846 = vunpack.c.l.b16 %v708
    %v847 = vpack.c.b16 %v846, %v846
    %848 = vrot.lane.b32.xlu0 %v847, 64
    %v849 = vpop.permute.xlu0 %848
    %v851 = vunpack.c.l.b16 %v710
    %v852 = vpack.c.b16 %v851, %v851
    %853 = vrot.lane.b32.xlu0 %v852, 64
    %v854 = vpop.permute.xlu0 %853
    %v856 = vsel %vm713, %v849, 0
    %v859 = vsel %vm713, %v854, 0
    %861 = vmatpush.bf16.xpose.msra.mxu0 0
    %862 = vmatpush.bf16.xpose.msra.mxu0 0
    %863 = vmatpush.bf16.xpose.msra.mxu0 0
    %864 = vmatpush.bf16.xpose.msra.mxu0 0
    %865 = vmatpush.bf16.xpose.msra.mxu0 0
    %866 = vmatpush.bf16.xpose.msra.mxu0 0
    %867 = vmatpush.bf16.xpose.msra.mxu0 0
    %868 = vmatpush.bf16.xpose.msra.mxu0 %v859
    %869 = vmatmul.bf16.gmra.mxu0 %v856
    %v870 = vpop.f32.mrf.mxu0
    %v871 = vadd.f32 %v704, %v870
    %v872 = vpop.f32.mrf.mxu0
    %873 = vdwg.mxu0
    %v874 = vsel %vm752, %v842, -inf
    %875 = vmax.xlane.f32.xlu0 %v874
    %v876 = vpop.xlane.xlu0 %875
    %v877 = vsel %vm752, %v871, -inf
    %878 = vmax.xlane.f32.xlu0 %v877
    %v879 = vpop.xlane.xlu0 %878
    %v880 = vsub.f32 %v842, %v876
    %v881 = vsub.f32 %v871, %v879
    %v882 = vmul.f32 %v880, 1.442695
    %v883 = vpow.pop %v882
    %v884 = vmul.f32 %v881, 1.442695
    %v885 = vpow.pop %v884
    %v886 = vsel %vm752, %v883, 0.0
    %887 = vadd.xlane.f32.xlu0 %v886
    %v888 = vpop.xlane.xlu0 %887
    %v889 = vsel %vm752, %v885, 0.0
    %890 = vadd.xlane.f32.xlu0 %v889
    %v891 = vpop.xlane.xlu0 %890
    %v892 = vrcp.pop %v888
    %v893 = vrcp.pop %v891
    %v894 = vmul.f32 %v883, %v892
    %v895 = vmul.f32 %v885, %v893
    %v896 = vpack.c.bf16 %v894, %v894
    %v897 = vpack.c.bf16 %v895, %v895
    %v899 = vunpack.c.l.b16 %v711
    %v900 = vpack.c.b16 %v899, %v899
    %901 = vrot.lane.b32.xlu0 %v900, 64
    %v902 = vpop.permute.xlu0 %901
    %v904 = vsel %vm752, %v896, 0
    %v907 = vsel %vm780, %v902, 0
    %909 = vmatpush.bf16.msra.mxu0 0
    %910 = vmatpush.bf16.msra.mxu0 0
    %911 = vmatpush.bf16.msra.mxu0 0
    %912 = vmatpush.bf16.msra.mxu0 0
    %913 = vmatpush.bf16.msra.mxu0 0
    %914 = vmatpush.bf16.msra.mxu0 0
    %915 = vmatpush.bf16.msra.mxu0 0
    %916 = vmatpush.bf16.msra.mxu0 %v907
    %917 = vmatmul.bf16.gmra.mxu0 %v904
    %v918 = vpop.f32.mrf.mxu0
    %v919 = vadd.f32 0.0, %v918
    %v920 = vpop.f32.mrf.mxu0
    %921 = vdwg.mxu0
    %v923 = vunpack.c.l.b16 %v712
    %v924 = vpack.c.b16 %v923, %v923
    %925 = vrot.lane.b32.xlu0 %v924, 64
    %v926 = vpop.permute.xlu0 %925
    %v928 = vsel %vm752, %v897, 0
    %v931 = vsel %vm780, %v926, 0
    %933 = vmatpush.bf16.msra.mxu0 0
    %934 = vmatpush.bf16.msra.mxu0 0
    %935 = vmatpush.bf16.msra.mxu0 0
    %936 = vmatpush.bf16.msra.mxu0 0
    %937 = vmatpush.bf16.msra.mxu0 0
    %938 = vmatpush.bf16.msra.mxu0 0
    %939 = vmatpush.bf16.msra.mxu0 0
    %940 = vmatpush.bf16.msra.mxu0 %v931
    %941 = vmatmul.bf16.gmra.mxu0 %v928
    %v942 = vpop.f32.mrf.mxu0
    %v943 = vadd.f32 0.0, %v942
    %v944 = vpop.f32.mrf.mxu0
    %945 = vdwg.mxu0
    %948 = vrot.lane.b32.xlu0 %v919, 64
    %v949 = vpop.permute.xlu0 %948
    %950 = vrot.lane.b32.xlu0 %v943, 64
    %v951 = vpop.permute.xlu0 %950
    %v954 = vsel %vm713, %v794, %v949
    %v955 = vsel %vm713, %v813, %v951
    %v956 = vpack.c.bf16 %v955, %v954
    %v957 = vld [vmem:[#allocation16] sm:$0xf]
    %v958 = vld [vmem:[#allocation16 + $0x4] sm:$0xf]
    %v959 = vld [vmem:[#allocation16 + $0x8] sm:$0xf]
    %v960 = vld [vmem:[#allocation16 + $0xc] sm:$0xf]
    %v961 = vld [vmem:[#allocation16 + $0x10] sm:$0xf]
    %v962 = vld [vmem:[#allocation16 + $0x14] sm:$0xf]
    %v963 = vld [vmem:[#allocation16 + $0x18] sm:$0xf]
    %v964 = vld [vmem:[#allocation16 + $0x1c] sm:$0xf]
    %v965 = vld [vmem:[#allocation16 + $0x20] sm:$0xf]
    %v966 = vld [vmem:[#allocation16 + $0x24] sm:$0xf]
    %v967 = vld [vmem:[#allocation16 + $0x28] sm:$0xf]
    %v968 = vld [vmem:[#allocation16 + $0x2c] sm:$0xf]
    %v969 = vld [vmem:[#allocation16 + $0x30] sm:$0xf]
    %v970 = vld [vmem:[#allocation16 + $0x34] sm:$0xf]
    %v971 = vld [vmem:[#allocation16 + $0x38] sm:$0xf]
    %v972 = vld [vmem:[#allocation16 + $0x3c] sm:$0xf]
    %v973 = vld [vmem:[#allocation17] sm:$0x1]
    %v975 = vperm.slane %v973, 0
    %v993 = vunpack.c.l.b16 %v957
    %v994 = vunpack.c.l.b16 %v958
    %v995 = vunpack.c.l.b16 %v959
    %v996 = vunpack.c.l.b16 %v960
    %v997 = vunpack.c.l.b16 %v961
    %v998 = vunpack.c.l.b16 %v962
    %v999 = vunpack.c.l.b16 %v963
    %v1000 = vunpack.c.l.b16 %v964
    %v1001 = vunpack.c.l.b16 %v965
    %v1002 = vunpack.c.l.b16 %v966
    %v1003 = vunpack.c.l.b16 %v967
    %v1004 = vunpack.c.l.b16 %v968
    %v1005 = vunpack.c.l.b16 %v969
    %v1006 = vunpack.c.l.b16 %v970
    %v1007 = vunpack.c.l.b16 %v971
    %v1008 = vunpack.c.l.b16 %v972
    %v1009 = vpack.c.b16 %v994, %v993
    %v1010 = vpack.c.b16 %v996, %v995
    %v1011 = vpack.c.b16 %v998, %v997
    %v1012 = vpack.c.b16 %v1000, %v999
    %v1013 = vpack.c.b16 %v1002, %v1001
    %v1014 = vpack.c.b16 %v1004, %v1003
    %v1015 = vpack.c.b16 %v1006, %v1005
    %v1016 = vpack.c.b16 %v1008, %v1007
    %1025 = vmatpush.bf16.msra.mxu0 %v1016
    %1026 = vmatpush.bf16.msra.mxu0 %v1015
    %1027 = vmatpush.bf16.msra.mxu0 %v1014
    %1028 = vmatpush.bf16.msra.mxu0 %v1013
    %1029 = vmatpush.bf16.msra.mxu0 %v1012
    %1030 = vmatpush.bf16.msra.mxu0 %v1011
    %1031 = vmatpush.bf16.msra.mxu0 %v1010
    %1032 = vmatpush.bf16.msra.mxu0 %v1009
    %1033 = vmatmul.bf16.gmra.mxu0 %v956
    %v1034 = vpop.f32.mrf.mxu0
    %v1035 = vadd.f32 %v975, %v1034
    %v1036 = vpop.f32.mrf.mxu0
    %v1037 = vadd.f32 %v975, %v1036
    %1038 = vdwg.mxu0
    %v1039 = vadd.f32 %v418, %v1035
    %v1040 = vadd.f32 %v419, %v1037
    %1041 = vadd.xlane.f32.xlu0 %v1039
    %v1042 = vpop.xlane.xlu0 %1041
    %1043 = vadd.xlane.f32.xlu0 %v1040
    %v1044 = vpop.xlane.xlu0 %1043
    %v1045 = vmul.f32 %v1042, %v430
    %v1046 = vmul.f32 %v1044, %v430
    %v1047 = vsub.f32 %v1039, %v1045
    %v1048 = vsub.f32 %v1040, %v1046
    %v1049 = vmul.f32 %v1047, %v1047
    %v1050 = vmul.f32 %v1048, %v1048
    %1051 = vadd.xlane.f32.xlu0 %v1049
    %v1052 = vpop.xlane.xlu0 %1051
    %1053 = vadd.xlane.f32.xlu0 %v1050
    %v1054 = vpop.xlane.xlu0 %1053
    %v1055 = vmul.f32 %v1052, %v430
    %v1056 = vmul.f32 %v1054, %v430
    %v1057 = vadd.f32 %v1055, 1e-05
    %v1058 = vadd.f32 %v1056, 1e-05
    %v1059 = vrsqrt.pop %v1057
    %v1060 = vmul.f32 %v1059, %v1057
    %v1061 = vmul.f32 %v1060, %v1059
    %v1062 = vmul.f32 0.5, %v1061
    %v1063 = vsub.f32 1.5, %v1062
    %v1064 = vmul.f32 %v1059, %v1063
    %vm1065 = vweird.f32 %v1057
    %vm1066 = vweird.f32 %v1059
    %vm1067 = vmor %vm1065, %vm1066
    %v1068 = vsel %vm1067, %v1059, %v1064
    %v1069 = vrsqrt.pop %v1058
    %v1070 = vmul.f32 %v1069, %v1058
    %v1071 = vmul.f32 %v1070, %v1069
    %v1072 = vmul.f32 0.5, %v1071
    %v1073 = vsub.f32 1.5, %v1072
    %v1074 = vmul.f32 %v1069, %v1073
    %vm1075 = vweird.f32 %v1058
    %vm1076 = vweird.f32 %v1069
    %vm1077 = vmor %vm1075, %vm1076
    %v1078 = vsel %vm1077, %v1069, %v1074
    %v1079 = vmul.f32 %v1047, %v1068
    %v1080 = vmul.f32 %v1048, %v1078
    %v1081 = vld [vmem:[#allocation19] sm:$0x1]
    %v1083 = vperm.slane %v1081, 0
    %v1085 = vmul.f32 %v1079, %v1083
    %v1086 = vmul.f32 %v1080, %v1083
    %v1087 = vld [vmem:[#allocation20] sm:$0x1]
    %v1089 = vperm.slane %v1087, 0
    %v1091 = vadd.f32 %v1085, %v1089
    %v1092 = vadd.f32 %v1086, %v1089
    %v1093 = vadd.f32 %v416, %v1091
    %v1094 = vadd.f32 %v417, %v1092
    %v1095 = vpack.c.bf16 %v1094, %v1093
    %v1096 = vld [vmem:[#allocation22] sm:$0xf]
    %v1097 = vld [vmem:[#allocation22 + $0x4] sm:$0xf]
    %v1098 = vld [vmem:[#allocation22 + $0x8] sm:$0xf]
    %v1099 = vld [vmem:[#allocation22 + $0xc] sm:$0xf]
    %v1100 = vld [vmem:[#allocation22 + $0x10] sm:$0xf]
    %v1101 = vld [vmem:[#allocation22 + $0x14] sm:$0xf]
    %v1102 = vld [vmem:[#allocation22 + $0x18] sm:$0xf]
    %v1103 = vld [vmem:[#allocation22 + $0x1c] sm:$0xf]
    %v1104 = vld [vmem:[#allocation22 + $0x20] sm:$0xf]
    %v1105 = vld [vmem:[#allocation22 + $0x24] sm:$0xf]
    %v1106 = vld [vmem:[#allocation22 + $0x28] sm:$0xf]
    %v1107 = vld [vmem:[#allocation22 + $0x2c] sm:$0xf]
    %v1108 = vld [vmem:[#allocation22 + $0x30] sm:$0xf]
    %v1109 = vld [vmem:[#allocation22 + $0x34] sm:$0xf]
    %v1110 = vld [vmem:[#allocation22 + $0x38] sm:$0xf]
    %v1111 = vld [vmem:[#allocation22 + $0x3c] sm:$0xf]
    %v1112 = vld [vmem:[#allocation23] sm:$0x1]
    %v1114 = vperm.slane %v1112, 0
    %v1132 = vunpack.c.l.b16 %v1096
    %v1133 = vunpack.c.l.b16 %v1097
    %v1134 = vunpack.c.l.b16 %v1098
    %v1135 = vunpack.c.l.b16 %v1099
    %v1136 = vunpack.c.l.b16 %v1100
    %v1137 = vunpack.c.l.b16 %v1101
    %v1138 = vunpack.c.l.b16 %v1102
    %v1139 = vunpack.c.l.b16 %v1103
    %v1140 = vunpack.c.l.b16 %v1104
    %v1141 = vunpack.c.l.b16 %v1105
    %v1142 = vunpack.c.l.b16 %v1106
    %v1143 = vunpack.c.l.b16 %v1107
    %v1144 = vunpack.c.l.b16 %v1108
    %v1145 = vunpack.c.l.b16 %v1109
    %v1146 = vunpack.c.l.b16 %v1110
    %v1147 = vunpack.c.l.b16 %v1111
    %v1148 = vpack.c.b16 %v1133, %v1132
    %v1149 = vpack.c.b16 %v1135, %v1134
    %v1150 = vpack.c.b16 %v1137, %v1136
    %v1151 = vpack.c.b16 %v1139, %v1138
    %v1152 = vpack.c.b16 %v1141, %v1140
    %v1153 = vpack.c.b16 %v1143, %v1142
    %v1154 = vpack.c.b16 %v1145, %v1144
    %v1155 = vpack.c.b16 %v1147, %v1146
    %1164 = vmatpush.bf16.msra.mxu0 %v1155
    %1165 = vmatpush.bf16.msra.mxu0 %v1154
    %1166 = vmatpush.bf16.msra.mxu0 %v1153
    %1167 = vmatpush.bf16.msra.mxu0 %v1152
    %1168 = vmatpush.bf16.msra.mxu0 %v1151
    %1169 = vmatpush.bf16.msra.mxu0 %v1150
    %1170 = vmatpush.bf16.msra.mxu0 %v1149
    %1171 = vmatpush.bf16.msra.mxu0 %v1148
    %1172 = vmatmul.bf16.gmra.mxu0 %v1095
    %v1173 = vpop.f32.mrf.mxu0
    %v1174 = vadd.f32 %v1114, %v1173
    %v1175 = vpop.f32.mrf.mxu0
    %v1176 = vadd.f32 %v1114, %v1175
    %1177 = vdwg.mxu0
    %v1178 = vld [vmem:[#allocation2] sm:$0xff]
    %v1179 = vld [vmem:[#allocation2 + $0x8] sm:$0xff]
    %v1180 = vld [vmem:[#allocation2 + $0x10] sm:$0xff]
    %v1181 = vld [vmem:[#allocation2 + $0x18] sm:$0xff]
    %v1182 = vpack.c.bf16 %v1179, %v1178
    %v1183 = vpack.c.bf16 %v1181, %v1180
    %v1184 = vld [vmem:[#allocation25] sm:$0xff]
    %v1185 = vld [vmem:[#allocation25 + $0x8] sm:$0xff]
    %v1186 = vld [vmem:[#allocation25 + $0x10] sm:$0xff]
    %v1187 = vld [vmem:[#allocation25 + $0x18] sm:$0xff]
    %v1188 = vld [vmem:[#allocation25 + $0x20] sm:$0xff]
    %v1189 = vld [vmem:[#allocation25 + $0x28] sm:$0xff]
    %v1190 = vld [vmem:[#allocation25 + $0x30] sm:$0xff]
    %v1191 = vld [vmem:[#allocation25 + $0x38] sm:$0xff]
    %v1192 = vld [vmem:[#allocation25 + $0x40] sm:$0xff]
    %v1193 = vld [vmem:[#allocation25 + $0x48] sm:$0xff]
    %v1194 = vld [vmem:[#allocation25 + $0x50] sm:$0xff]
    %v1195 = vld [vmem:[#allocation25 + $0x58] sm:$0xff]
    %v1196 = vld [vmem:[#allocation25 + $0x60] sm:$0xff]
    %v1197 = vld [vmem:[#allocation25 + $0x68] sm:$0xff]
    %v1198 = vld [vmem:[#allocation25 + $0x70] sm:$0xff]
    %v1199 = vld [vmem:[#allocation25 + $0x78] sm:$0xff]
    %v1200 = vld [vmem:[#allocation26] sm:$0x3]
    %v1202 = vperm.slane %v1200, 0
    %v1203 = vperm.slane %v1200, 1
    %v1222 = vunpack.c.l.b16 %v1184
    %v1223 = vunpack.c.h.b16 %v1184
    %v1224 = vunpack.c.l.b16 %v1185
    %v1225 = vunpack.c.h.b16 %v1185
    %v1226 = vunpack.c.l.b16 %v1186
    %v1227 = vunpack.c.h.b16 %v1186
    %v1228 = vunpack.c.l.b16 %v1187
    %v1229 = vunpack.c.h.b16 %v1187
    %v1230 = vunpack.c.l.b16 %v1188
    %v1231 = vunpack.c.h.b16 %v1188
    %v1232 = vunpack.c.l.b16 %v1189
    %v1233 = vunpack.c.h.b16 %v1189
    %v1234 = vunpack.c.l.b16 %v1190
    %v1235 = vunpack.c.h.b16 %v1190
    %v1236 = vunpack.c.l.b16 %v1191
    %v1237 = vunpack.c.h.b16 %v1191
    %v1238 = vunpack.c.l.b16 %v1192
    %v1239 = vunpack.c.h.b16 %v1192
    %v1240 = vunpack.c.l.b16 %v1193
    %v1241 = vunpack.c.h.b16 %v1193
    %v1242 = vunpack.c.l.b16 %v1194
    %v1243 = vunpack.c.h.b16 %v1194
    %v1244 = vunpack.c.l.b16 %v1195
    %v1245 = vunpack.c.h.b16 %v1195
    %v1246 = vunpack.c.l.b16 %v1196
    %v1247 = vunpack.c.h.b16 %v1196
    %v1248 = vunpack.c.l.b16 %v1197
    %v1249 = vunpack.c.h.b16 %v1197
    %v1250 = vunpack.c.l.b16 %v1198
    %v1251 = vunpack.c.h.b16 %v1198
    %v1252 = vunpack.c.l.b16 %v1199
    %v1253 = vunpack.c.h.b16 %v1199
    %v1254 = vpack.c.b16 %v1224, %v1222
    %v1255 = vpack.c.b16 %v1225, %v1223
    %v1256 = vpack.c.b16 %v1228, %v1226
    %v1257 = vpack.c.b16 %v1229, %v1227
    %v1258 = vpack.c.b16 %v1232, %v1230
    %v1259 = vpack.c.b16 %v1233, %v1231
    %v1260 = vpack.c.b16 %v1236, %v1234
    %v1261 = vpack.c.b16 %v1237, %v1235
    %v1262 = vpack.c.b16 %v1240, %v1238
    %v1263 = vpack.c.b16 %v1241, %v1239
    %v1264 = vpack.c.b16 %v1244, %v1242
    %v1265 = vpack.c.b16 %v1245, %v1243
    %v1266 = vpack.c.b16 %v1248, %v1246
    %v1267 = vpack.c.b16 %v1249, %v1247
    %v1268 = vpack.c.b16 %v1252, %v1250
    %v1269 = vpack.c.b16 %v1253, %v1251
    %1286 = vmatpush.bf16.msra.mxu0 %v1268
    %1287 = vmatpush.bf16.msra.mxu0 %v1266
    %1288 = vmatpush.bf16.msra.mxu0 %v1264
    %1289 = vmatpush.bf16.msra.mxu0 %v1262
    %1290 = vmatpush.bf16.msra.mxu0 %v1260
    %1291 = vmatpush.bf16.msra.mxu0 %v1258
    %1292 = vmatpush.bf16.msra.mxu0 %v1256
    %1293 = vmatpush.bf16.msra.mxu0 %v1254
    %1294 = vmatmul.bf16.gmra.mxu0 %v1182
    %v1295 = vpop.f32.mrf.mxu0
    %v1296 = vadd.f32 %v1202, %v1295
    %v1297 = vpop.f32.mrf.mxu0
    %v1298 = vadd.f32 %v1202, %v1297
    %1299 = vmatmul.bf16.gmra.mxu0 %v1183
    %v1300 = vpop.f32.mrf.mxu0
    %v1301 = vadd.f32 %v1202, %v1300
    %v1302 = vpop.f32.mrf.mxu0
    %v1303 = vadd.f32 %v1202, %v1302
    %1304 = vdwg.mxu0
    %1305 = vmatpush.bf16.msra.mxu0 %v1269
    %1306 = vmatpush.bf16.msra.mxu0 %v1267
    %1307 = vmatpush.bf16.msra.mxu0 %v1265
    %1308 = vmatpush.bf16.msra.mxu0 %v1263
    %1309 = vmatpush.bf16.msra.mxu0 %v1261
    %1310 = vmatpush.bf16.msra.mxu0 %v1259
    %1311 = vmatpush.bf16.msra.mxu0 %v1257
    %1312 = vmatpush.bf16.msra.mxu0 %v1255
    %1313 = vmatmul.bf16.gmra.mxu0 %v1182
    %v1314 = vpop.f32.mrf.mxu0
    %v1315 = vadd.f32 %v1203, %v1314
    %v1316 = vpop.f32.mrf.mxu0
    %v1317 = vadd.f32 %v1203, %v1316
    %1318 = vmatmul.bf16.gmra.mxu0 %v1183
    %v1319 = vpop.f32.mrf.mxu0
    %v1320 = vadd.f32 %v1203, %v1319
    %v1321 = vpop.f32.mrf.mxu0
    %v1322 = vadd.f32 %v1203, %v1321
    %1323 = vdwg.mxu0
    %v1324 = vpack.c.bf16 %v1174, %v1174
    %v1325 = vpack.c.bf16 %v1176, %v1176
    %v1326 = vpack.c.bf16 %v1296, %v1296
    %v1327 = vpack.c.bf16 %v1298, %v1298
    %v1328 = vpack.c.bf16 %v1301, %v1301
    %v1329 = vpack.c.bf16 %v1303, %v1303
    %v1330 = vpack.c.bf16 %v1315, %v1315
    %v1331 = vpack.c.bf16 %v1317, %v1317
    %v1332 = vpack.c.bf16 %v1320, %v1320
    %v1333 = vpack.c.bf16 %v1322, %v1322
    %v1336 = vunpack.c.l.b16 %v1326
    %v1337 = vunpack.c.l.b16 %v1327
    %v1338 = vpack.c.b16 %v1337, %v1336
    %v1340 = vsel %vm713, %v1324, 0
    %v1343 = vsel %vm713, %v1338, 0
    %1345 = vmatpush.bf16.xpose.msra.mxu0 0
    %1346 = vmatpush.bf16.xpose.msra.mxu0 0
    %1347 = vmatpush.bf16.xpose.msra.mxu0 0
    %1348 = vmatpush.bf16.xpose.msra.mxu0 0
    %1349 = vmatpush.bf16.xpose.msra.mxu0 0
    %1350 = vmatpush.bf16.xpose.msra.mxu0 0
    %1351 = vmatpush.bf16.xpose.msra.mxu0 0
    %1352 = vmatpush.bf16.xpose.msra.mxu0 %v1343
    %1353 = vmatmul.bf16.gmra.mxu0 %v1340
    %v1354 = vpop.f32.mrf.mxu0
    %v1355 = vadd.f32 0.0, %v1354
    %v1356 = vpop.f32.mrf.mxu0
    %1357 = vdwg.mxu0
    %v1360 = vunpack.c.l.b16 %v1328
    %v1361 = vunpack.c.l.b16 %v1329
    %v1362 = vpack.c.b16 %v1361, %v1360
    %v1364 = vsel %vm713, %v1325, 0
    %v1367 = vsel %vm713, %v1362, 0
    %1369 = vmatpush.bf16.xpose.msra.mxu0 0
    %1370 = vmatpush.bf16.xpose.msra.mxu0 0
    %1371 = vmatpush.bf16.xpose.msra.mxu0 0
    %1372 = vmatpush.bf16.xpose.msra.mxu0 0
    %1373 = vmatpush.bf16.xpose.msra.mxu0 0
    %1374 = vmatpush.bf16.xpose.msra.mxu0 0
    %1375 = vmatpush.bf16.xpose.msra.mxu0 0
    %1376 = vmatpush.bf16.xpose.msra.mxu0 %v1367
    %1377 = vmatmul.bf16.gmra.mxu0 %v1364
    %v1378 = vpop.f32.mrf.mxu0
    %v1379 = vadd.f32 0.0, %v1378
    %v1380 = vpop.f32.mrf.mxu0
    %1381 = vdwg.mxu0
    %vm1382 = vcmask 130048
    %v1383 = vsel %vm1382, %v1355, -inf
    %1384 = vmax.xlane.f32.xlu0 %v1383
    %v1385 = vpop.xlane.xlu0 %1384
    %v1386 = vsel %vm1382, %v1379, -inf
    %1387 = vmax.xlane.f32.xlu0 %v1386
    %v1388 = vpop.xlane.xlu0 %1387
    %v1389 = vsub.f32 %v1355, %v1385
    %v1390 = vsub.f32 %v1379, %v1388
    %v1391 = vmul.f32 %v1389, 1.442695
    %v1392 = vpow.pop %v1391
    %v1393 = vmul.f32 %v1390, 1.442695
    %v1394 = vpow.pop %v1393
    %v1395 = vsel %vm1382, %v1392, 0.0
    %1396 = vadd.xlane.f32.xlu0 %v1395
    %v1397 = vpop.xlane.xlu0 %1396
    %v1398 = vsel %vm1382, %v1394, 0.0
    %1399 = vadd.xlane.f32.xlu0 %v1398
    %v1400 = vpop.xlane.xlu0 %1399
    %v1401 = vrcp.pop %v1397
    %v1402 = vrcp.pop %v1400
    %v1403 = vmul.f32 %v1392, %v1401
    %v1404 = vmul.f32 %v1394, %v1402
    %v1405 = vpack.c.bf16 %v1403, %v1403
    %v1406 = vpack.c.bf16 %v1404, %v1404
    %v1409 = vunpack.c.l.b16 %v1330
    %v1410 = vunpack.c.l.b16 %v1331
    %v1411 = vpack.c.b16 %v1410, %v1409
    %v1414 = vsel %vm1382, %v1405, 0
    %1416 = vmatpush.bf16.msra.mxu0 0
    %1417 = vmatpush.bf16.msra.mxu0 0
    %1418 = vmatpush.bf16.msra.mxu0 0
    %1419 = vmatpush.bf16.msra.mxu0 0
    %1420 = vmatpush.bf16.msra.mxu0 0
    %1421 = vmatpush.bf16.msra.mxu0 0
    %1422 = vmatpush.bf16.msra.mxu0 0
    %1423 = vmatpush.bf16.msra.mxu0 %v1411
    %1424 = vmatmul.bf16.gmra.mxu0 %v1414
    %v1425 = vpop.f32.mrf.mxu0
    %v1426 = vadd.f32 0.0, %v1425
    %v1427 = vpop.f32.mrf.mxu0
    %1428 = vdwg.mxu0
    %v1431 = vunpack.c.l.b16 %v1332
    %v1432 = vunpack.c.l.b16 %v1333
    %v1433 = vpack.c.b16 %v1432, %v1431
    %v1436 = vsel %vm1382, %v1406, 0
    %1438 = vmatpush.bf16.msra.mxu0 0
    %1439 = vmatpush.bf16.msra.mxu0 0
    %1440 = vmatpush.bf16.msra.mxu0 0
    %1441 = vmatpush.bf16.msra.mxu0 0
    %1442 = vmatpush.bf16.msra.mxu0 0
    %1443 = vmatpush.bf16.msra.mxu0 0
    %1444 = vmatpush.bf16.msra.mxu0 0
    %1445 = vmatpush.bf16.msra.mxu0 %v1433
    %1446 = vmatmul.bf16.gmra.mxu0 %v1436
    %v1447 = vpop.f32.mrf.mxu0
    %v1448 = vadd.f32 0.0, %v1447
    %v1449 = vpop.f32.mrf.mxu0
    %1450 = vdwg.mxu0
    %v1452 = vunpack.c.l.b16 %v1324
    %v1453 = vpack.c.b16 %v1452, %v1452
    %1454 = vrot.lane.b32.xlu0 %v1453, 64
    %v1455 = vpop.permute.xlu0 %1454
    %1456 = vrot.lane.b32.xlu0 %v1338, 64
    %v1457 = vpop.permute.xlu0 %1456
    %v1459 = vsel %vm713, %v1455, 0
    %v1462 = vsel %vm713, %v1457, 0
    %1464 = vmatpush.bf16.xpose.msra.mxu0 0
    %1465 = vmatpush.bf16.xpose.msra.mxu0 0
    %1466 = vmatpush.bf16.xpose.msra.mxu0 0
    %1467 = vmatpush.bf16.xpose.msra.mxu0 0
    %1468 = vmatpush.bf16.xpose.msra.mxu0 0
    %1469 = vmatpush.bf16.xpose.msra.mxu0 0
    %1470 = vmatpush.bf16.xpose.msra.mxu0 0
    %1471 = vmatpush.bf16.xpose.msra.mxu0 %v1462
    %1472 = vmatmul.bf16.gmra.mxu0 %v1459
    %v1473 = vpop.f32.mrf.mxu0
    %v1474 = vadd.f32 0.0, %v1473
    %v1475 = vpop.f32.mrf.mxu0
    %1476 = vdwg.mxu0
    %v1478 = vunpack.c.l.b16 %v1325
    %v1479 = vpack.c.b16 %v1478, %v1478
    %1480 = vrot.lane.b32.xlu0 %v1479, 64
    %v1481 = vpop.permute.xlu0 %1480
    %1482 = vrot.lane.b32.xlu0 %v1362, 64
    %v1483 = vpop.permute.xlu0 %1482
    %v1485 = vsel %vm713, %v1481, 0
    %v1488 = vsel %vm713, %v1483, 0
    %1490 = vmatpush.bf16.xpose.msra.mxu0 0
    %1491 = vmatpush.bf16.xpose.msra.mxu0 0
    %1492 = vmatpush.bf16.xpose.msra.mxu0 0
    %1493 = vmatpush.bf16.xpose.msra.mxu0 0
    %1494 = vmatpush.bf16.xpose.msra.mxu0 0
    %1495 = vmatpush.bf16.xpose.msra.mxu0 0
    %1496 = vmatpush.bf16.xpose.msra.mxu0 0
    %1497 = vmatpush.bf16.xpose.msra.mxu0 %v1488
    %1498 = vmatmul.bf16.gmra.mxu0 %v1485
    %v1499 = vpop.f32.mrf.mxu0
    %v1500 = vadd.f32 0.0, %v1499
    %v1501 = vpop.f32.mrf.mxu0
    %1502 = vdwg.mxu0
    %v1503 = vsel %vm1382, %v1474, -inf
    %1504 = vmax.xlane.f32.xlu0 %v1503
    %v1505 = vpop.xlane.xlu0 %1504
    %v1506 = vsel %vm1382, %v1500, -inf
    %1507 = vmax.xlane.f32.xlu0 %v1506
    %v1508 = vpop.xlane.xlu0 %1507
    %v1509 = vsub.f32 %v1474, %v1505
    %v1510 = vsub.f32 %v1500, %v1508
    %v1511 = vmul.f32 %v1509, 1.442695
    %v1512 = vpow.pop %v1511
    %v1513 = vmul.f32 %v1510, 1.442695
    %v1514 = vpow.pop %v1513
    %v1515 = vsel %vm1382, %v1512, 0.0
    %1516 = vadd.xlane.f32.xlu0 %v1515
    %v1517 = vpop.xlane.xlu0 %1516
    %v1518 = vsel %vm1382, %v1514, 0.0
    %1519 = vadd.xlane.f32.xlu0 %v1518
    %v1520 = vpop.xlane.xlu0 %1519
    %v1521 = vrcp.pop %v1517
    %v1522 = vrcp.pop %v1520
    %v1523 = vmul.f32 %v1512, %v1521
    %v1524 = vmul.f32 %v1514, %v1522
    %v1525 = vpack.c.bf16 %v1523, %v1523
    %v1526 = vpack.c.bf16 %v1524, %v1524
    %1527 = vrot.lane.b32.xlu0 %v1411, 64
    %v1528 = vpop.permute.xlu0 %1527
    %v1531 = vsel %vm1382, %v1525, 0
    %1533 = vmatpush.bf16.msra.mxu0 0
    %1534 = vmatpush.bf16.msra.mxu0 0
    %1535 = vmatpush.bf16.msra.mxu0 0
    %1536 = vmatpush.bf16.msra.mxu0 0
    %1537 = vmatpush.bf16.msra.mxu0 0
    %1538 = vmatpush.bf16.msra.mxu0 0
    %1539 = vmatpush.bf16.msra.mxu0 0
    %1540 = vmatpush.bf16.msra.mxu0 %v1528
    %1541 = vmatmul.bf16.gmra.mxu0 %v1531
    %v1542 = vpop.f32.mrf.mxu0
    %v1543 = vadd.f32 0.0, %v1542
    %v1544 = vpop.f32.mrf.mxu0
    %1545 = vdwg.mxu0
    %1546 = vrot.lane.b32.xlu0 %v1433, 64
    %v1547 = vpop.permute.xlu0 %1546
    %v1550 = vsel %vm1382, %v1526, 0
    %1552 = vmatpush.bf16.msra.mxu0 0
    %1553 = vmatpush.bf16.msra.mxu0 0
    %1554 = vmatpush.bf16.msra.mxu0 0
    %1555 = vmatpush.bf16.msra.mxu0 0
    %1556 = vmatpush.bf16.msra.mxu0 0
    %1557 = vmatpush.bf16.msra.mxu0 0
    %1558 = vmatpush.bf16.msra.mxu0 0
    %1559 = vmatpush.bf16.msra.mxu0 %v1547
    %1560 = vmatmul.bf16.gmra.mxu0 %v1550
    %v1561 = vpop.f32.mrf.mxu0
    %v1562 = vadd.f32 0.0, %v1561
    %v1563 = vpop.f32.mrf.mxu0
    %1564 = vdwg.mxu0
    %1567 = vrot.lane.b32.xlu0 %v1543, 64
    %v1568 = vpop.permute.xlu0 %1567
    %1569 = vrot.lane.b32.xlu0 %v1562, 64
    %v1570 = vpop.permute.xlu0 %1569
    %v1573 = vsel %vm713, %v1426, %v1568
    %v1574 = vsel %vm713, %v1448, %v1570
    %v1575 = vpack.c.bf16 %v1574, %v1573
    %v1576 = vld [vmem:[#allocation28] sm:$0xf]
    %v1577 = vld [vmem:[#allocation28 + $0x4] sm:$0xf]
    %v1578 = vld [vmem:[#allocation28 + $0x8] sm:$0xf]
    %v1579 = vld [vmem:[#allocation28 + $0xc] sm:$0xf]
    %v1580 = vld [vmem:[#allocation28 + $0x10] sm:$0xf]
    %v1581 = vld [vmem:[#allocation28 + $0x14] sm:$0xf]
    %v1582 = vld [vmem:[#allocation28 + $0x18] sm:$0xf]
    %v1583 = vld [vmem:[#allocation28 + $0x1c] sm:$0xf]
    %v1584 = vld [vmem:[#allocation28 + $0x20] sm:$0xf]
    %v1585 = vld [vmem:[#allocation28 + $0x24] sm:$0xf]
    %v1586 = vld [vmem:[#allocation28 + $0x28] sm:$0xf]
    %v1587 = vld [vmem:[#allocation28 + $0x2c] sm:$0xf]
    %v1588 = vld [vmem:[#allocation28 + $0x30] sm:$0xf]
    %v1589 = vld [vmem:[#allocation28 + $0x34] sm:$0xf]
    %v1590 = vld [vmem:[#allocation28 + $0x38] sm:$0xf]
    %v1591 = vld [vmem:[#allocation28 + $0x3c] sm:$0xf]
    %v1592 = vld [vmem:[#allocation29] sm:$0x1]
    %v1594 = vperm.slane %v1592, 0
    %v1612 = vunpack.c.l.b16 %v1576
    %v1613 = vunpack.c.l.b16 %v1577
    %v1614 = vunpack.c.l.b16 %v1578
    %v1615 = vunpack.c.l.b16 %v1579
    %v1616 = vunpack.c.l.b16 %v1580
    %v1617 = vunpack.c.l.b16 %v1581
    %v1618 = vunpack.c.l.b16 %v1582
    %v1619 = vunpack.c.l.b16 %v1583
    %v1620 = vunpack.c.l.b16 %v1584
    %v1621 = vunpack.c.l.b16 %v1585
    %v1622 = vunpack.c.l.b16 %v1586
    %v1623 = vunpack.c.l.b16 %v1587
    %v1624 = vunpack.c.l.b16 %v1588
    %v1625 = vunpack.c.l.b16 %v1589
    %v1626 = vunpack.c.l.b16 %v1590
    %v1627 = vunpack.c.l.b16 %v1591
    %v1628 = vpack.c.b16 %v1613, %v1612
    %v1629 = vpack.c.b16 %v1615, %v1614
    %v1630 = vpack.c.b16 %v1617, %v1616
    %v1631 = vpack.c.b16 %v1619, %v1618
    %v1632 = vpack.c.b16 %v1621, %v1620
    %v1633 = vpack.c.b16 %v1623, %v1622
    %v1634 = vpack.c.b16 %v1625, %v1624
    %v1635 = vpack.c.b16 %v1627, %v1626
    %1644 = vmatpush.bf16.msra.mxu0 %v1635
    %1645 = vmatpush.bf16.msra.mxu0 %v1634
    %1646 = vmatpush.bf16.msra.mxu0 %v1633
    %1647 = vmatpush.bf16.msra.mxu0 %v1632
    %1648 = vmatpush.bf16.msra.mxu0 %v1631
    %1649 = vmatpush.bf16.msra.mxu0 %v1630
    %1650 = vmatpush.bf16.msra.mxu0 %v1629
    %1651 = vmatpush.bf16.msra.mxu0 %v1628
    %1652 = vmatmul.bf16.gmra.mxu0 %v1575
    %v1653 = vpop.f32.mrf.mxu0
    %v1654 = vadd.f32 %v1594, %v1653
    %v1655 = vpop.f32.mrf.mxu0
    %v1656 = vadd.f32 %v1594, %v1655
    %1657 = vdwg.mxu0
    %v1658 = vadd.f32 %v1039, %v1654
    %v1659 = vadd.f32 %v1040, %v1656
    %1660 = vadd.xlane.f32.xlu0 %v1658
    %v1661 = vpop.xlane.xlu0 %1660
    %1662 = vadd.xlane.f32.xlu0 %v1659
    %v1663 = vpop.xlane.xlu0 %1662
    %v1664 = vmul.f32 %v1661, %v430
    %v1665 = vmul.f32 %v1663, %v430
    %v1666 = vsub.f32 %v1658, %v1664
    %v1667 = vsub.f32 %v1659, %v1665
    %v1668 = vmul.f32 %v1666, %v1666
    %v1669 = vmul.f32 %v1667, %v1667
    %1670 = vadd.xlane.f32.xlu0 %v1668
    %v1671 = vpop.xlane.xlu0 %1670
    %1672 = vadd.xlane.f32.xlu0 %v1669
    %v1673 = vpop.xlane.xlu0 %1672
    %v1674 = vmul.f32 %v1671, %v430
    %v1675 = vmul.f32 %v1673, %v430
    %v1676 = vadd.f32 %v1674, 1e-05
    %v1677 = vadd.f32 %v1675, 1e-05
    %v1678 = vrsqrt.pop %v1676
    %v1679 = vmul.f32 %v1678, %v1676
    %v1680 = vmul.f32 %v1679, %v1678
    %v1681 = vmul.f32 0.5, %v1680
    %v1682 = vsub.f32 1.5, %v1681
    %v1683 = vmul.f32 %v1678, %v1682
    %vm1684 = vweird.f32 %v1676
    %vm1685 = vweird.f32 %v1678
    %vm1686 = vmor %vm1684, %vm1685
    %v1687 = vsel %vm1686, %v1678, %v1683
    %v1688 = vrsqrt.pop %v1677
    %v1689 = vmul.f32 %v1688, %v1677
    %v1690 = vmul.f32 %v1689, %v1688
    %v1691 = vmul.f32 0.5, %v1690
    %v1692 = vsub.f32 1.5, %v1691
    %v1693 = vmul.f32 %v1688, %v1692
    %vm1694 = vweird.f32 %v1677
    %vm1695 = vweird.f32 %v1688
    %vm1696 = vmor %vm1694, %vm1695
    %v1697 = vsel %vm1696, %v1688, %v1693
    %v1698 = vmul.f32 %v1666, %v1687
    %v1699 = vmul.f32 %v1667, %v1697
    %v1700 = vld [vmem:[#allocation31] sm:$0x1]
    %v1702 = vperm.slane %v1700, 0
    %v1704 = vmul.f32 %v1698, %v1702
    %v1705 = vmul.f32 %v1699, %v1702
    %v1706 = vld [vmem:[#allocation32] sm:$0x1]
    %v1708 = vperm.slane %v1706, 0
    %v1710 = vadd.f32 %v1704, %v1708
    %v1711 = vadd.f32 %v1705, %v1708
    %v1712 = vpack.c.bf16 %v1711, %v1710
    %v1713 = vld [vmem:[#allocation34] sm:$0xff]
    %v1714 = vld [vmem:[#allocation34 + $0x8] sm:$0xff]
    %v1715 = vld [vmem:[#allocation34 + $0x10] sm:$0xff]
    %v1716 = vld [vmem:[#allocation34 + $0x18] sm:$0xff]
    %v1717 = vld [vmem:[#allocation34 + $0x20] sm:$0xff]
    %v1718 = vld [vmem:[#allocation34 + $0x28] sm:$0xff]
    %v1719 = vld [vmem:[#allocation34 + $0x30] sm:$0xff]
    %v1720 = vld [vmem:[#allocation34 + $0x38] sm:$0xff]
    %v1721 = vld [vmem:[#allocation34 + $0x40] sm:$0xff]
    %v1722 = vld [vmem:[#allocation34 + $0x48] sm:$0xff]
    %v1723 = vld [vmem:[#allocation34 + $0x50] sm:$0xff]
    %v1724 = vld [vmem:[#allocation34 + $0x58] sm:$0xff]
    %v1725 = vld [vmem:[#allocation34 + $0x60] sm:$0xff]
    %v1726 = vld [vmem:[#allocation34 + $0x68] sm:$0xff]
    %v1727 = vld [vmem:[#allocation34 + $0x70] sm:$0xff]
    %v1728 = vld [vmem:[#allocation34 + $0x78] sm:$0xff]
    %v1729 = vld [vmem:[#allocation34 + $0x80] sm:$0xff]
    %v1730 = vld [vmem:[#allocation34 + $0x88] sm:$0xff]
    %v1731 = vld [vmem:[#allocation34 + $0x90] sm:$0xff]
    %v1732 = vld [vmem:[#allocation34 + $0x98] sm:$0xff]
    %v1733 = vld [vmem:[#allocation34 + $0xa0] sm:$0xff]
    %v1734 = vld [vmem:[#allocation34 + $0xa8] sm:$0xff]
    %v1735 = vld [vmem:[#allocation34 + $0xb0] sm:$0xff]
    %v1736 = vld [vmem:[#allocation34 + $0xb8] sm:$0xff]
    %v1737 = vld [vmem:[#allocation34 + $0xc0] sm:$0xff]
    %v1738 = vld [vmem:[#allocation34 + $0xc8] sm:$0xff]
    %v1739 = vld [vmem:[#allocation34 + $0xd0] sm:$0xff]
    %v1740 = vld [vmem:[#allocation34 + $0xd8] sm:$0xff]
    %v1741 = vld [vmem:[#allocation34 + $0xe0] sm:$0xff]
    %v1742 = vld [vmem:[#allocation34 + $0xe8] sm:$0xff]
    %v1743 = vld [vmem:[#allocation34 + $0xf0] sm:$0xff]
    %v1744 = vld [vmem:[#allocation34 + $0xf8] sm:$0xff]
    %v1745 = vld [vmem:[%s23] sm:$0xf]
    %v1747 = vperm.slane %v1745, 0
    %v1748 = vperm.slane %v1745, 1
    %v1749 = vperm.slane %v1745, 2
    %v1750 = vperm.slane %v1745, 3
    %v1787 = vunpack.c.l.b16 %v1713
    %v1788 = vunpack.c.h.b16 %v1713
    %v1789 = vunpack.c.l.b16 %v1714
    %v1790 = vunpack.c.h.b16 %v1714
    %v1791 = vunpack.c.l.b16 %v1715
    %v1792 = vunpack.c.h.b16 %v1715
    %v1793 = vunpack.c.l.b16 %v1716
    %v1794 = vunpack.c.h.b16 %v1716
    %v1795 = vunpack.c.l.b16 %v1717
    %v1796 = vunpack.c.h.b16 %v1717
    %v1797 = vunpack.c.l.b16 %v1718
    %v1798 = vunpack.c.h.b16 %v1718
    %v1799 = vunpack.c.l.b16 %v1719
    %v1800 = vunpack.c.h.b16 %v1719
    %v1801 = vunpack.c.l.b16 %v1720
    %v1802 = vunpack.c.h.b16 %v1720
    %v1803 = vunpack.c.l.b16 %v1721
    %v1804 = vunpack.c.h.b16 %v1721
    %v1805 = vunpack.c.l.b16 %v1722
    %v1806 = vunpack.c.h.b16 %v1722
    %v1807 = vunpack.c.l.b16 %v1723
    %v1808 = vunpack.c.h.b16 %v1723
    %v1809 = vunpack.c.l.b16 %v1724
    %v1810 = vunpack.c.h.b16 %v1724
    %v1811 = vunpack.c.l.b16 %v1725
    %v1812 = vunpack.c.h.b16 %v1725
    %v1813 = vunpack.c.l.b16 %v1726
    %v1814 = vunpack.c.h.b16 %v1726
    %v1815 = vunpack.c.l.b16 %v1727
    %v1816 = vunpack.c.h.b16 %v1727
    %v1817 = vunpack.c.l.b16 %v1728
    %v1818 = vunpack.c.h.b16 %v1728
    %v1819 = vunpack.c.l.b16 %v1729
    %v1820 = vunpack.c.h.b16 %v1729
    %v1821 = vunpack.c.l.b16 %v1730
    %v1822 = vunpack.c.h.b16 %v1730
    %v1823 = vunpack.c.l.b16 %v1731
    %v1824 = vunpack.c.h.b16 %v1731
    %v1825 = vunpack.c.l.b16 %v1732
    %v1826 = vunpack.c.h.b16 %v1732
    %v1827 = vunpack.c.l.b16 %v1733
    %v1828 = vunpack.c.h.b16 %v1733
    %v1829 = vunpack.c.l.b16 %v1734
    %v1830 = vunpack.c.h.b16 %v1734
    %v1831 = vunpack.c.l.b16 %v1735
    %v1832 = vunpack.c.h.b16 %v1735
    %v1833 = vunpack.c.l.b16 %v1736
    %v1834 = vunpack.c.h.b16 %v1736
    %v1835 = vunpack.c.l.b16 %v1737
    %v1836 = vunpack.c.h.b16 %v1737
    %v1837 = vunpack.c.l.b16 %v1738
    %v1838 = vunpack.c.h.b16 %v1738
    %v1839 = vunpack.c.l.b16 %v1739
    %v1840 = vunpack.c.h.b16 %v1739
    %v1841 = vunpack.c.l.b16 %v1740
    %v1842 = vunpack.c.h.b16 %v1740
    %v1843 = vunpack.c.l.b16 %v1741
    %v1844 = vunpack.c.h.b16 %v1741
    %v1845 = vunpack.c.l.b16 %v1742
    %v1846 = vunpack.c.h.b16 %v1742
    %v1847 = vunpack.c.l.b16 %v1743
    %v1848 = vunpack.c.h.b16 %v1743
    %v1849 = vunpack.c.l.b16 %v1744
    %v1850 = vunpack.c.h.b16 %v1744
    %v1851 = vpack.c.b16 %v1791, %v1787
    %v1852 = vpack.c.b16 %v1792, %v1788
    %v1853 = vpack.c.b16 %v1793, %v1789
    %v1854 = vpack.c.b16 %v1794, %v1790
    %v1855 = vpack.c.b16 %v1799, %v1795
    %v1856 = vpack.c.b16 %v1800, %v1796
    %v1857 = vpack.c.b16 %v1801, %v1797
    %v1858 = vpack.c.b16 %v1802, %v1798
    %v1859 = vpack.c.b16 %v1807, %v1803
    %v1860 = vpack.c.b16 %v1808, %v1804
    %v1861 = vpack.c.b16 %v1809, %v1805
    %v1862 = vpack.c.b16 %v1810, %v1806
    %v1863 = vpack.c.b16 %v1815, %v1811
    %v1864 = vpack.c.b16 %v1816, %v1812
    %v1865 = vpack.c.b16 %v1817, %v1813
    %v1866 = vpack.c.b16 %v1818, %v1814
    %v1867 = vpack.c.b16 %v1823, %v1819
    %v1868 = vpack.c.b16 %v1824, %v1820
    %v1869 = vpack.c.b16 %v1825, %v1821
    %v1870 = vpack.c.b16 %v1826, %v1822
    %v1871 = vpack.c.b16 %v1831, %v1827
    %v1872 = vpack.c.b16 %v1832, %v1828
    %v1873 = vpack.c.b16 %v1833, %v1829
    %v1874 = vpack.c.b16 %v1834, %v1830
    %v1875 = vpack.c.b16 %v1839, %v1835
    %v1876 = vpack.c.b16 %v1840, %v1836
    %v1877 = vpack.c.b16 %v1841, %v1837
    %v1878 = vpack.c.b16 %v1842, %v1838
    %v1879 = vpack.c.b16 %v1847, %v1843
    %v1880 = vpack.c.b16 %v1848, %v1844
    %v1881 = vpack.c.b16 %v1849, %v1845
    %v1882 = vpack.c.b16 %v1850, %v1846
    %1915 = vmatpush.bf16.msra.mxu0 %v1879
    %1916 = vmatpush.bf16.msra.mxu0 %v1875
    %1917 = vmatpush.bf16.msra.mxu0 %v1871
    %1918 = vmatpush.bf16.msra.mxu0 %v1867
    %1919 = vmatpush.bf16.msra.mxu0 %v1863
    %1920 = vmatpush.bf16.msra.mxu0 %v1859
    %1921 = vmatpush.bf16.msra.mxu0 %v1855
    %1922 = vmatpush.bf16.msra.mxu0 %v1851
    %1923 = vmatmul.bf16.gmra.mxu0 %v1712
    %v1924 = vpop.f32.mrf.mxu0
    %v1925 = vadd.f32 %v1747, %v1924
    %v1926 = vpop.f32.mrf.mxu0
    %v1927 = vadd.f32 %v1747, %v1926
    %1928 = vdwg.mxu0
    %1929 = vmatpush.bf16.msra.mxu0 %v1880
    %1930 = vmatpush.bf16.msra.mxu0 %v1876
    %1931 = vmatpush.bf16.msra.mxu0 %v1872
    %1932 = vmatpush.bf16.msra.mxu0 %v1868
    %1933 = vmatpush.bf16.msra.mxu0 %v1864
    %1934 = vmatpush.bf16.msra.mxu0 %v1860
    %1935 = vmatpush.bf16.msra.mxu0 %v1856
    %1936 = vmatpush.bf16.msra.mxu0 %v1852
    %1937 = vmatmul.bf16.gmra.mxu0 %v1712
    %v1938 = vpop.f32.mrf.mxu0
    %v1939 = vadd.f32 %v1748, %v1938
    %v1940 = vpop.f32.mrf.mxu0
    %v1941 = vadd.f32 %v1748, %v1940
    %1942 = vdwg.mxu0
    %1943 = vmatpush.bf16.msra.mxu0 %v1881
    %1944 = vmatpush.bf16.msra.mxu0 %v1877
    %1945 = vmatpush.bf16.msra.mxu0 %v1873
    %1946 = vmatpush.bf16.msra.mxu0 %v1869
    %1947 = vmatpush.bf16.msra.mxu0 %v1865
    %1948 = vmatpush.bf16.msra.mxu0 %v1861
    %1949 = vmatpush.bf16.msra.mxu0 %v1857
    %1950 = vmatpush.bf16.msra.mxu0 %v1853
    %1951 = vmatmul.bf16.gmra.mxu0 %v1712
    %v1952 = vpop.f32.mrf.mxu0
    %v1953 = vadd.f32 %v1749, %v1952
    %v1954 = vpop.f32.mrf.mxu0
    %v1955 = vadd.f32 %v1749, %v1954
    %1956 = vdwg.mxu0
    %1957 = vmatpush.bf16.msra.mxu0 %v1882
    %1958 = vmatpush.bf16.msra.mxu0 %v1878
    %1959 = vmatpush.bf16.msra.mxu0 %v1874
    %1960 = vmatpush.bf16.msra.mxu0 %v1870
    %1961 = vmatpush.bf16.msra.mxu0 %v1866
    %1962 = vmatpush.bf16.msra.mxu0 %v1862
    %1963 = vmatpush.bf16.msra.mxu0 %v1858
    %1964 = vmatpush.bf16.msra.mxu0 %v1854
    %1965 = vmatmul.bf16.gmra.mxu0 %v1712
    %v1966 = vpop.f32.mrf.mxu0
    %v1967 = vadd.f32 %v1750, %v1966
    %v1968 = vpop.f32.mrf.mxu0
    %v1969 = vadd.f32 %v1750, %v1968
    %1970 = vdwg.mxu0
    %v1971 = vmul.f32 %v1925, 0.5
    %v1972 = vmul.f32 %v1939, 0.5
    %v1973 = vmul.f32 %v1953, 0.5
    %v1974 = vmul.f32 %v1967, 0.5
    %v1975 = vmul.f32 %v1927, 0.5
    %v1976 = vmul.f32 %v1941, 0.5
    %v1977 = vmul.f32 %v1955, 0.5
    %v1978 = vmul.f32 %v1969, 0.5
    %v1979 = vmul.f32 %v1925, 0.70710677
    %v1980 = vmul.f32 %v1939, 0.70710677
    %v1981 = vmul.f32 %v1953, 0.70710677
    %v1982 = vmul.f32 %v1967, 0.70710677
    %v1983 = vmul.f32 %v1927, 0.70710677
    %v1984 = vmul.f32 %v1941, 0.70710677
    %v1985 = vmul.f32 %v1955, 0.70710677
    %v1986 = vmul.f32 %v1969, 0.70710677
    %v1987 = vmul.f32 %v1979, %v1979
    %v1988 = vmin.f32 16.0, %v1987
    %v1989 = vmul.f32 %v1988, 2.1237322e-06
    %v1990 = vadd.f32 %v1989, 0.00028619796
    %v1991 = vmul.f32 %v1988, %v1990
    %v1992 = vadd.f32 %v1991, 0.0036580483
    %v1993 = vmul.f32 %v1988, %v1992
    %v1994 = vadd.f32 %v1993, 0.05243302
    %v1995 = vmul.f32 %v1988, %v1994
    %v1996 = vadd.f32 %v1995, 0.18741608
    %v1997 = vmul.f32 %v1988, %v1996
    %v1998 = vadd.f32 %v1997, 1.1283791
    %v1999 = vmul.f32 %v1979, %v1998
    %v2000 = vmul.f32 %v1988, 3.8918573e-05
    %v2001 = vadd.f32 %v2000, 0.001143296
    %v2002 = vmul.f32 %v1988, %v2001
    %v2003 = vadd.f32 %v2002, 0.014752088
    %v2004 = vmul.f32 %v1988, %v2003
    %v2005 = vadd.f32 %v2004, 0.112945676
    %v2006 = vmul.f32 %v1988, %v2005
    %v2007 = vadd.f32 %v2006, 0.4994258
    %v2008 = vmul.f32 %v1988, %v2007
    %v2009 = vadd.f32 %v2008, 1.0
    %v2010 = vrcp.pop %v2009
    %v2011 = vmul.f32 %v2009, %v2010
    %v2012 = vsub.f32 1.0, %v2011
    %v2013 = vmul.f32 %v2010, %v2012
    %v2014 = vadd.f32 %v2010, %v2013
    %vm2015 = vweird.f32 %v2009
    %vm2016 = vweird.f32 %v2010
    %vm2017 = vmor %vm2015, %vm2016
    %v2018 = vsel %vm2017, %v2010, %v2014
    %v2019 = vand.u32 2147483647, %v2009
    %vm2020 = vcmp.eq.f32.partialorder %v2019, 8.507059e+37
    %v2021 = vand.u32 %v2009, 2147483648
    %v2022 = vor.u32 1.1754944e-38, %v2021
    %v2023 = vsel %vm2020, %v2022, %v2018
    %v2024 = vmul.f32 %v1999, %v2023
    %v2025 = vmin.f32 %v2024, 1.0
    %v2026 = vmax.f32 %v2025, -1.0
    %v2027 = vmul.f32 %v1980, %v1980
    %v2028 = vmin.f32 16.0, %v2027
    %v2029 = vmul.f32 %v2028, 2.1237322e-06
    %v2030 = vadd.f32 %v2029, 0.00028619796
    %v2031 = vmul.f32 %v2028, %v2030
    %v2032 = vadd.f32 %v2031, 0.0036580483
    %v2033 = vmul.f32 %v2028, %v2032
    %v2034 = vadd.f32 %v2033, 0.05243302
    %v2035 = vmul.f32 %v2028, %v2034
    %v2036 = vadd.f32 %v2035, 0.18741608
    %v2037 = vmul.f32 %v2028, %v2036
    %v2038 = vadd.f32 %v2037, 1.1283791
    %v2039 = vmul.f32 %v1980, %v2038
    %v2040 = vmul.f32 %v2028, 3.8918573e-05
    %v2041 = vadd.f32 %v2040, 0.001143296
    %v2042 = vmul.f32 %v2028, %v2041
    %v2043 = vadd.f32 %v2042, 0.014752088
    %v2044 = vmul.f32 %v2028, %v2043
    %v2045 = vadd.f32 %v2044, 0.112945676
    %v2046 = vmul.f32 %v2028, %v2045
    %v2047 = vadd.f32 %v2046, 0.4994258
    %v2048 = vmul.f32 %v2028, %v2047
    %v2049 = vadd.f32 %v2048, 1.0
    %v2050 = vrcp.pop %v2049
    %v2051 = vmul.f32 %v2049, %v2050
    %v2052 = vsub.f32 1.0, %v2051
    %v2053 = vmul.f32 %v2050, %v2052
    %v2054 = vadd.f32 %v2050, %v2053
    %vm2055 = vweird.f32 %v2049
    %vm2056 = vweird.f32 %v2050
    %vm2057 = vmor %vm2055, %vm2056
    %v2058 = vsel %vm2057, %v2050, %v2054
    %v2059 = vand.u32 2147483647, %v2049
    %vm2060 = vcmp.eq.f32.partialorder %v2059, 8.507059e+37
    %v2061 = vand.u32 %v2049, 2147483648
    %v2062 = vor.u32 1.1754944e-38, %v2061
    %v2063 = vsel %vm2060, %v2062, %v2058
    %v2064 = vmul.f32 %v2039, %v2063
    %v2065 = vmin.f32 %v2064, 1.0
    %v2066 = vmax.f32 %v2065, -1.0
    %v2067 = vmul.f32 %v1981, %v1981
    %v2068 = vmin.f32 16.0, %v2067
    %v2069 = vmul.f32 %v2068, 2.1237322e-06
    %v2070 = vadd.f32 %v2069, 0.00028619796
    %v2071 = vmul.f32 %v2068, %v2070
    %v2072 = vadd.f32 %v2071, 0.0036580483
    %v2073 = vmul.f32 %v2068, %v2072
    %v2074 = vadd.f32 %v2073, 0.05243302
    %v2075 = vmul.f32 %v2068, %v2074
    %v2076 = vadd.f32 %v2075, 0.18741608
    %v2077 = vmul.f32 %v2068, %v2076
    %v2078 = vadd.f32 %v2077, 1.1283791
    %v2079 = vmul.f32 %v1981, %v2078
    %v2080 = vmul.f32 %v2068, 3.8918573e-05
    %v2081 = vadd.f32 %v2080, 0.001143296
    %v2082 = vmul.f32 %v2068, %v2081
    %v2083 = vadd.f32 %v2082, 0.014752088
    %v2084 = vmul.f32 %v2068, %v2083
    %v2085 = vadd.f32 %v2084, 0.112945676
    %v2086 = vmul.f32 %v2068, %v2085
    %v2087 = vadd.f32 %v2086, 0.4994258
    %v2088 = vmul.f32 %v2068, %v2087
    %v2089 = vadd.f32 %v2088, 1.0
    %v2090 = vrcp.pop %v2089
    %v2091 = vmul.f32 %v2089, %v2090
    %v2092 = vsub.f32 1.0, %v2091
    %v2093 = vmul.f32 %v2090, %v2092
    %v2094 = vadd.f32 %v2090, %v2093
    %vm2095 = vweird.f32 %v2089
    %vm2096 = vweird.f32 %v2090
    %vm2097 = vmor %vm2095, %vm2096
    %v2098 = vsel %vm2097, %v2090, %v2094
    %v2099 = vand.u32 2147483647, %v2089
    %vm2100 = vcmp.eq.f32.partialorder %v2099, 8.507059e+37
    %v2101 = vand.u32 %v2089, 2147483648
    %v2102 = vor.u32 1.1754944e-38, %v2101
    %v2103 = vsel %vm2100, %v2102, %v2098
    %v2104 = vmul.f32 %v2079, %v2103
    %v2105 = vmin.f32 %v2104, 1.0
    %v2106 = vmax.f32 %v2105, -1.0
    %v2107 = vmul.f32 %v1982, %v1982
    %v2108 = vmin.f32 16.0, %v2107
    %v2109 = vmul.f32 %v2108, 2.1237322e-06
    %v2110 = vadd.f32 %v2109, 0.00028619796
    %v2111 = vmul.f32 %v2108, %v2110
    %v2112 = vadd.f32 %v2111, 0.0036580483
    %v2113 = vmul.f32 %v2108, %v2112
    %v2114 = vadd.f32 %v2113, 0.05243302
    %v2115 = vmul.f32 %v2108, %v2114
    %v2116 = vadd.f32 %v2115, 0.18741608
    %v2117 = vmul.f32 %v2108, %v2116
    %v2118 = vadd.f32 %v2117, 1.1283791
    %v2119 = vmul.f32 %v1982, %v2118
    %v2120 = vmul.f32 %v2108, 3.8918573e-05
    %v2121 = vadd.f32 %v2120, 0.001143296
    %v2122 = vmul.f32 %v2108, %v2121
    %v2123 = vadd.f32 %v2122, 0.014752088
    %v2124 = vmul.f32 %v2108, %v2123
    %v2125 = vadd.f32 %v2124, 0.112945676
    %v2126 = vmul.f32 %v2108, %v2125
    %v2127 = vadd.f32 %v2126, 0.4994258
    %v2128 = vmul.f32 %v2108, %v2127
    %v2129 = vadd.f32 %v2128, 1.0
    %v2130 = vrcp.pop %v2129
    %v2131 = vmul.f32 %v2129, %v2130
    %v2132 = vsub.f32 1.0, %v2131
    %v2133 = vmul.f32 %v2130, %v2132
    %v2134 = vadd.f32 %v2130, %v2133
    %vm2135 = vweird.f32 %v2129
    %vm2136 = vweird.f32 %v2130
    %vm2137 = vmor %vm2135, %vm2136
    %v2138 = vsel %vm2137, %v2130, %v2134
    %v2139 = vand.u32 2147483647, %v2129
    %vm2140 = vcmp.eq.f32.partialorder %v2139, 8.507059e+37
    %v2141 = vand.u32 %v2129, 2147483648
    %v2142 = vor.u32 1.1754944e-38, %v2141
    %v2143 = vsel %vm2140, %v2142, %v2138
    %v2144 = vmul.f32 %v2119, %v2143
    %v2145 = vmin.f32 %v2144, 1.0
    %v2146 = vmax.f32 %v2145, -1.0
    %v2147 = vmul.f32 %v1983, %v1983
    %v2148 = vmin.f32 16.0, %v2147
    %v2149 = vmul.f32 %v2148, 2.1237322e-06
    %v2150 = vadd.f32 %v2149, 0.00028619796
    %v2151 = vmul.f32 %v2148, %v2150
    %v2152 = vadd.f32 %v2151, 0.0036580483
    %v2153 = vmul.f32 %v2148, %v2152
    %v2154 = vadd.f32 %v2153, 0.05243302
    %v2155 = vmul.f32 %v2148, %v2154
    %v2156 = vadd.f32 %v2155, 0.18741608
    %v2157 = vmul.f32 %v2148, %v2156
    %v2158 = vadd.f32 %v2157, 1.1283791
    %v2159 = vmul.f32 %v1983, %v2158
    %v2160 = vmul.f32 %v2148, 3.8918573e-05
    %v2161 = vadd.f32 %v2160, 0.001143296
    %v2162 = vmul.f32 %v2148, %v2161
    %v2163 = vadd.f32 %v2162, 0.014752088
    %v2164 = vmul.f32 %v2148, %v2163
    %v2165 = vadd.f32 %v2164, 0.112945676
    %v2166 = vmul.f32 %v2148, %v2165
    %v2167 = vadd.f32 %v2166, 0.4994258
    %v2168 = vmul.f32 %v2148, %v2167
    %v2169 = vadd.f32 %v2168, 1.0
    %v2170 = vrcp.pop %v2169
    %v2171 = vmul.f32 %v2169, %v2170
    %v2172 = vsub.f32 1.0, %v2171
    %v2173 = vmul.f32 %v2170, %v2172
    %v2174 = vadd.f32 %v2170, %v2173
    %vm2175 = vweird.f32 %v2169
    %vm2176 = vweird.f32 %v2170
    %vm2177 = vmor %vm2175, %vm2176
    %v2178 = vsel %vm2177, %v2170, %v2174
    %v2179 = vand.u32 2147483647, %v2169
    %vm2180 = vcmp.eq.f32.partialorder %v2179, 8.507059e+37
    %v2181 = vand.u32 %v2169, 2147483648
    %v2182 = vor.u32 1.1754944e-38, %v2181
    %v2183 = vsel %vm2180, %v2182, %v2178
    %v2184 = vmul.f32 %v2159, %v2183
    %v2185 = vmin.f32 %v2184, 1.0
    %v2186 = vmax.f32 %v2185, -1.0
    %v2187 = vmul.f32 %v1984, %v1984
    %v2188 = vmin.f32 16.0, %v2187
    %v2189 = vmul.f32 %v2188, 2.1237322e-06
    %v2190 = vadd.f32 %v2189, 0.00028619796
    %v2191 = vmul.f32 %v2188, %v2190
    %v2192 = vadd.f32 %v2191, 0.0036580483
    %v2193 = vmul.f32 %v2188, %v2192
    %v2194 = vadd.f32 %v2193, 0.05243302
    %v2195 = vmul.f32 %v2188, %v2194
    %v2196 = vadd.f32 %v2195, 0.18741608
    %v2197 = vmul.f32 %v2188, %v2196
    %v2198 = vadd.f32 %v2197, 1.1283791
    %v2199 = vmul.f32 %v1984, %v2198
    %v2200 = vmul.f32 %v2188, 3.8918573e-05
    %v2201 = vadd.f32 %v2200, 0.001143296
    %v2202 = vmul.f32 %v2188, %v2201
    %v2203 = vadd.f32 %v2202, 0.014752088
    %v2204 = vmul.f32 %v2188, %v2203
    %v2205 = vadd.f32 %v2204, 0.112945676
    %v2206 = vmul.f32 %v2188, %v2205
    %v2207 = vadd.f32 %v2206, 0.4994258
    %v2208 = vmul.f32 %v2188, %v2207
    %v2209 = vadd.f32 %v2208, 1.0
    %v2210 = vrcp.pop %v2209
    %v2211 = vmul.f32 %v2209, %v2210
    %v2212 = vsub.f32 1.0, %v2211
    %v2213 = vmul.f32 %v2210, %v2212
    %v2214 = vadd.f32 %v2210, %v2213
    %vm2215 = vweird.f32 %v2209
    %vm2216 = vweird.f32 %v2210
    %vm2217 = vmor %vm2215, %vm2216
    %v2218 = vsel %vm2217, %v2210, %v2214
    %v2219 = vand.u32 2147483647, %v2209
    %vm2220 = vcmp.eq.f32.partialorder %v2219, 8.507059e+37
    %v2221 = vand.u32 %v2209, 2147483648
    %v2222 = vor.u32 1.1754944e-38, %v2221
    %v2223 = vsel %vm2220, %v2222, %v2218
    %v2224 = vmul.f32 %v2199, %v2223
    %v2225 = vmin.f32 %v2224, 1.0
    %v2226 = vmax.f32 %v2225, -1.0
    %v2227 = vmul.f32 %v1985, %v1985
    %v2228 = vmin.f32 16.0, %v2227
    %v2229 = vmul.f32 %v2228, 2.1237322e-06
    %v2230 = vadd.f32 %v2229, 0.00028619796
    %v2231 = vmul.f32 %v2228, %v2230
    %v2232 = vadd.f32 %v2231, 0.0036580483
    %v2233 = vmul.f32 %v2228, %v2232
    %v2234 = vadd.f32 %v2233, 0.05243302
    %v2235 = vmul.f32 %v2228, %v2234
    %v2236 = vadd.f32 %v2235, 0.18741608
    %v2237 = vmul.f32 %v2228, %v2236
    %v2238 = vadd.f32 %v2237, 1.1283791
    %v2239 = vmul.f32 %v1985, %v2238
    %v2240 = vmul.f32 %v2228, 3.8918573e-05
    %v2241 = vadd.f32 %v2240, 0.001143296
    %v2242 = vmul.f32 %v2228, %v2241
    %v2243 = vadd.f32 %v2242, 0.014752088
    %v2244 = vmul.f32 %v2228, %v2243
    %v2245 = vadd.f32 %v2244, 0.112945676
    %v2246 = vmul.f32 %v2228, %v2245
    %v2247 = vadd.f32 %v2246, 0.4994258
    %v2248 = vmul.f32 %v2228, %v2247
    %v2249 = vadd.f32 %v2248, 1.0
    %v2250 = vrcp.pop %v2249
    %v2251 = vmul.f32 %v2249, %v2250
    %v2252 = vsub.f32 1.0, %v2251
    %v2253 = vmul.f32 %v2250, %v2252
    %v2254 = vadd.f32 %v2250, %v2253
    %vm2255 = vweird.f32 %v2249
    %vm2256 = vweird.f32 %v2250
    %vm2257 = vmor %vm2255, %vm2256
    %v2258 = vsel %vm2257, %v2250, %v2254
    %v2259 = vand.u32 2147483647, %v2249
    %vm2260 = vcmp.eq.f32.partialorder %v2259, 8.507059e+37
    %v2261 = vand.u32 %v2249, 2147483648
    %v2262 = vor.u32 1.1754944e-38, %v2261
    %v2263 = vsel %vm2260, %v2262, %v2258
    %v2264 = vmul.f32 %v2239, %v2263
    %v2265 = vmin.f32 %v2264, 1.0
    %v2266 = vmax.f32 %v2265, -1.0
    %v2267 = vmul.f32 %v1986, %v1986
    %v2268 = vmin.f32 16.0, %v2267
    %v2269 = vmul.f32 %v2268, 2.1237322e-06
    %v2270 = vadd.f32 %v2269, 0.00028619796
    %v2271 = vmul.f32 %v2268, %v2270
    %v2272 = vadd.f32 %v2271, 0.0036580483
    %v2273 = vmul.f32 %v2268, %v2272
    %v2274 = vadd.f32 %v2273, 0.05243302
    %v2275 = vmul.f32 %v2268, %v2274
    %v2276 = vadd.f32 %v2275, 0.18741608
    %v2277 = vmul.f32 %v2268, %v2276
    %v2278 = vadd.f32 %v2277, 1.1283791
    %v2279 = vmul.f32 %v1986, %v2278
    %v2280 = vmul.f32 %v2268, 3.8918573e-05
    %v2281 = vadd.f32 %v2280, 0.001143296
    %v2282 = vmul.f32 %v2268, %v2281
    %v2283 = vadd.f32 %v2282, 0.014752088
    %v2284 = vmul.f32 %v2268, %v2283
    %v2285 = vadd.f32 %v2284, 0.112945676
    %v2286 = vmul.f32 %v2268, %v2285
    %v2287 = vadd.f32 %v2286, 0.4994258
    %v2288 = vmul.f32 %v2268, %v2287
    %v2289 = vadd.f32 %v2288, 1.0
    %v2290 = vrcp.pop %v2289
    %v2291 = vmul.f32 %v2289, %v2290
    %v2292 = vsub.f32 1.0, %v2291
    %v2293 = vmul.f32 %v2290, %v2292
    %v2294 = vadd.f32 %v2290, %v2293
    %vm2295 = vweird.f32 %v2289
    %vm2296 = vweird.f32 %v2290
    %vm2297 = vmor %vm2295, %vm2296
    %v2298 = vsel %vm2297, %v2290, %v2294
    %v2299 = vand.u32 2147483647, %v2289
    %vm2300 = vcmp.eq.f32.partialorder %v2299, 8.507059e+37
    %v2301 = vand.u32 %v2289, 2147483648
    %v2302 = vor.u32 1.1754944e-38, %v2301
    %v2303 = vsel %vm2300, %v2302, %v2298
    %v2304 = vmul.f32 %v2279, %v2303
    %v2305 = vmin.f32 %v2304, 1.0
    %v2306 = vmax.f32 %v2305, -1.0
    %v2307 = vadd.f32 %v2026, 1.0
    %v2308 = vadd.f32 %v2066, 1.0
    %v2309 = vadd.f32 %v2106, 1.0
    %v2310 = vadd.f32 %v2146, 1.0
    %v2311 = vadd.f32 %v2186, 1.0
    %v2312 = vadd.f32 %v2226, 1.0
    %v2313 = vadd.f32 %v2266, 1.0
    %v2314 = vadd.f32 %v2306, 1.0
    %v2315 = vmul.f32 %v1971, %v2307
    %v2316 = vmul.f32 %v1972, %v2308
    %v2317 = vmul.f32 %v1973, %v2309
    %v2318 = vmul.f32 %v1974, %v2310
    %v2319 = vmul.f32 %v1975, %v2311
    %v2320 = vmul.f32 %v1976, %v2312
    %v2321 = vmul.f32 %v1977, %v2313
    %v2322 = vmul.f32 %v1978, %v2314
    %v2323 = vpack.c.bf16 %v2319, %v2315
    %v2324 = vpack.c.bf16 %v2320, %v2316
    %v2325 = vpack.c.bf16 %v2321, %v2317
    %v2326 = vpack.c.bf16 %v2322, %v2318
    %v2327 = vld [vmem:[#allocation35] sm:$0xf]
    %v2328 = vld [vmem:[#allocation35 + $0x4] sm:$0xf]
    %v2329 = vld [vmem:[#allocation35 + $0x8] sm:$0xf]
    %v2330 = vld [vmem:[#allocation35 + $0xc] sm:$0xf]
    %v2331 = vld [vmem:[#allocation35 + $0x10] sm:$0xf]
    %v2332 = vld [vmem:[#allocation35 + $0x14] sm:$0xf]
    %v2333 = vld [vmem:[#allocation35 + $0x18] sm:$0xf]
    %v2334 = vld [vmem:[#allocation35 + $0x1c] sm:$0xf]
    %v2335 = vld [vmem:[#allocation35 + $0x20] sm:$0xf]
    %v2336 = vld [vmem:[#allocation35 + $0x24] sm:$0xf]
    %v2337 = vld [vmem:[#allocation35 + $0x28] sm:$0xf]
    %v2338 = vld [vmem:[#allocation35 + $0x2c] sm:$0xf]
    %v2339 = vld [vmem:[#allocation35 + $0x30] sm:$0xf]
    %v2340 = vld [vmem:[#allocation35 + $0x34] sm:$0xf]
    %v2341 = vld [vmem:[#allocation35 + $0x38] sm:$0xf]
    %v2342 = vld [vmem:[#allocation35 + $0x3c] sm:$0xf]
    %v2343 = vld [vmem:[#allocation35 + $0x40] sm:$0xf]
    %v2344 = vld [vmem:[#allocation35 + $0x44] sm:$0xf]
    %v2345 = vld [vmem:[#allocation35 + $0x48] sm:$0xf]
    %v2346 = vld [vmem:[#allocation35 + $0x4c] sm:$0xf]
    %v2347 = vld [vmem:[#allocation35 + $0x50] sm:$0xf]
    %v2348 = vld [vmem:[#allocation35 + $0x54] sm:$0xf]
    %v2349 = vld [vmem:[#allocation35 + $0x58] sm:$0xf]
    %v2350 = vld [vmem:[#allocation35 + $0x5c] sm:$0xf]
    %v2351 = vld [vmem:[#allocation35 + $0x60] sm:$0xf]
    %v2352 = vld [vmem:[#allocation35 + $0x64] sm:$0xf]
    %v2353 = vld [vmem:[#allocation35 + $0x68] sm:$0xf]
    %v2354 = vld [vmem:[#allocation35 + $0x6c] sm:$0xf]
    %v2355 = vld [vmem:[#allocation35 + $0x70] sm:$0xf]
    %v2356 = vld [vmem:[#allocation35 + $0x74] sm:$0xf]
    %v2357 = vld [vmem:[#allocation35 + $0x78] sm:$0xf]
    %v2358 = vld [vmem:[#allocation35 + $0x7c] sm:$0xf]
    %v2359 = vld [vmem:[#allocation35 + $0x80] sm:$0xf]
    %v2360 = vld [vmem:[#allocation35 + $0x84] sm:$0xf]
    %v2361 = vld [vmem:[#allocation35 + $0x88] sm:$0xf]
    %v2362 = vld [vmem:[#allocation35 + $0x8c] sm:$0xf]
    %v2363 = vld [vmem:[#allocation35 + $0x90] sm:$0xf]
    %v2364 = vld [vmem:[#allocation35 + $0x94] sm:$0xf]
    %v2365 = vld [vmem:[#allocation35 + $0x98] sm:$0xf]
    %v2366 = vld [vmem:[#allocation35 + $0x9c] sm:$0xf]
    %v2367 = vld [vmem:[#allocation35 + $0xa0] sm:$0xf]
    %v2368 = vld [vmem:[#allocation35 + $0xa4] sm:$0xf]
    %v2369 = vld [vmem:[#allocation35 + $0xa8] sm:$0xf]
    %v2370 = vld [vmem:[#allocation35 + $0xac] sm:$0xf]
    %v2371 = vld [vmem:[#allocation35 + $0xb0] sm:$0xf]
    %v2372 = vld [vmem:[#allocation35 + $0xb4] sm:$0xf]
    %v2373 = vld [vmem:[#allocation35 + $0xb8] sm:$0xf]
    %v2374 = vld [vmem:[#allocation35 + $0xbc] sm:$0xf]
    %v2375 = vld [vmem:[#allocation35 + $0xc0] sm:$0xf]
    %v2376 = vld [vmem:[#allocation35 + $0xc4] sm:$0xf]
    %v2377 = vld [vmem:[#allocation35 + $0xc8] sm:$0xf]
    %v2378 = vld [vmem:[#allocation35 + $0xcc] sm:$0xf]
    %v2379 = vld [vmem:[#allocation35 + $0xd0] sm:$0xf]
    %v2380 = vld [vmem:[#allocation35 + $0xd4] sm:$0xf]
    %v2381 = vld [vmem:[#allocation35 + $0xd8] sm:$0xf]
    %v2382 = vld [vmem:[#allocation35 + $0xdc] sm:$0xf]
    %v2383 = vld [vmem:[#allocation35 + $0xe0] sm:$0xf]
    %v2384 = vld [vmem:[#allocation35 + $0xe4] sm:$0xf]
    %v2385 = vld [vmem:[#allocation35 + $0xe8] sm:$0xf]
    %v2386 = vld [vmem:[#allocation35 + $0xec] sm:$0xf]
    %v2387 = vld [vmem:[#allocation35 + $0xf0] sm:$0xf]
    %v2388 = vld [vmem:[#allocation35 + $0xf4] sm:$0xf]
    %v2389 = vld [vmem:[#allocation35 + $0xf8] sm:$0xf]
    %v2390 = vld [vmem:[#allocation35 + $0xfc] sm:$0xf]
    %v2391 = vld [vmem:[#allocation37] sm:$0x1]
    %v2393 = vperm.slane %v2391, 0
    %v2459 = vunpack.c.l.b16 %v2327
    %v2460 = vunpack.c.l.b16 %v2328
    %v2461 = vunpack.c.l.b16 %v2329
    %v2462 = vunpack.c.l.b16 %v2330
    %v2463 = vunpack.c.l.b16 %v2331
    %v2464 = vunpack.c.l.b16 %v2332
    %v2465 = vunpack.c.l.b16 %v2333
    %v2466 = vunpack.c.l.b16 %v2334
    %v2467 = vunpack.c.l.b16 %v2335
    %v2468 = vunpack.c.l.b16 %v2336
    %v2469 = vunpack.c.l.b16 %v2337
    %v2470 = vunpack.c.l.b16 %v2338
    %v2471 = vunpack.c.l.b16 %v2339
    %v2472 = vunpack.c.l.b16 %v2340
    %v2473 = vunpack.c.l.b16 %v2341
    %v2474 = vunpack.c.l.b16 %v2342
    %v2475 = vunpack.c.l.b16 %v2343
    %v2476 = vunpack.c.l.b16 %v2344
    %v2477 = vunpack.c.l.b16 %v2345
    %v2478 = vunpack.c.l.b16 %v2346
    %v2479 = vunpack.c.l.b16 %v2347
    %v2480 = vunpack.c.l.b16 %v2348
    %v2481 = vunpack.c.l.b16 %v2349
    %v2482 = vunpack.c.l.b16 %v2350
    %v2483 = vunpack.c.l.b16 %v2351
    %v2484 = vunpack.c.l.b16 %v2352
    %v2485 = vunpack.c.l.b16 %v2353
    %v2486 = vunpack.c.l.b16 %v2354
    %v2487 = vunpack.c.l.b16 %v2355
    %v2488 = vunpack.c.l.b16 %v2356
    %v2489 = vunpack.c.l.b16 %v2357
    %v2490 = vunpack.c.l.b16 %v2358
    %v2491 = vunpack.c.l.b16 %v2359
    %v2492 = vunpack.c.l.b16 %v2360
    %v2493 = vunpack.c.l.b16 %v2361
    %v2494 = vunpack.c.l.b16 %v2362
    %v2495 = vunpack.c.l.b16 %v2363
    %v2496 = vunpack.c.l.b16 %v2364
    %v2497 = vunpack.c.l.b16 %v2365
    %v2498 = vunpack.c.l.b16 %v2366
    %v2499 = vunpack.c.l.b16 %v2367
    %v2500 = vunpack.c.l.b16 %v2368
    %v2501 = vunpack.c.l.b16 %v2369
    %v2502 = vunpack.c.l.b16 %v2370
    %v2503 = vunpack.c.l.b16 %v2371
    %v2504 = vunpack.c.l.b16 %v2372
    %v2505 = vunpack.c.l.b16 %v2373
    %v2506 = vunpack.c.l.b16 %v2374
    %v2507 = vunpack.c.l.b16 %v2375
    %v2508 = vunpack.c.l.b16 %v2376
    %v2509 = vunpack.c.l.b16 %v2377
    %v2510 = vunpack.c.l.b16 %v2378
    %v2511 = vunpack.c.l.b16 %v2379
    %v2512 = vunpack.c.l.b16 %v2380
    %v2513 = vunpack.c.l.b16 %v2381
    %v2514 = vunpack.c.l.b16 %v2382
    %v2515 = vunpack.c.l.b16 %v2383
    %v2516 = vunpack.c.l.b16 %v2384
    %v2517 = vunpack.c.l.b16 %v2385
    %v2518 = vunpack.c.l.b16 %v2386
    %v2519 = vunpack.c.l.b16 %v2387
    %v2520 = vunpack.c.l.b16 %v2388
    %v2521 = vunpack.c.l.b16 %v2389
    %v2522 = vunpack.c.l.b16 %v2390
    %v2523 = vpack.c.b16 %v2460, %v2459
    %v2524 = vpack.c.b16 %v2462, %v2461
    %v2525 = vpack.c.b16 %v2464, %v2463
    %v2526 = vpack.c.b16 %v2466, %v2465
    %v2527 = vpack.c.b16 %v2468, %v2467
    %v2528 = vpack.c.b16 %v2470, %v2469
    %v2529 = vpack.c.b16 %v2472, %v2471
    %v2530 = vpack.c.b16 %v2474, %v2473
    %v2531 = vpack.c.b16 %v2476, %v2475
    %v2532 = vpack.c.b16 %v2478, %v2477
    %v2533 = vpack.c.b16 %v2480, %v2479
    %v2534 = vpack.c.b16 %v2482, %v2481
    %v2535 = vpack.c.b16 %v2484, %v2483
    %v2536 = vpack.c.b16 %v2486, %v2485
    %v2537 = vpack.c.b16 %v2488, %v2487
    %v2538 = vpack.c.b16 %v2490, %v2489
    %v2539 = vpack.c.b16 %v2492, %v2491
    %v2540 = vpack.c.b16 %v2494, %v2493
    %v2541 = vpack.c.b16 %v2496, %v2495
    %v2542 = vpack.c.b16 %v2498, %v2497
    %v2543 = vpack.c.b16 %v2500, %v2499
    %v2544 = vpack.c.b16 %v2502, %v2501
    %v2545 = vpack.c.b16 %v2504, %v2503
    %v2546 = vpack.c.b16 %v2506, %v2505
    %v2547 = vpack.c.b16 %v2508, %v2507
    %v2548 = vpack.c.b16 %v2510, %v2509
    %v2549 = vpack.c.b16 %v2512, %v2511
    %v2550 = vpack.c.b16 %v2514, %v2513
    %v2551 = vpack.c.b16 %v2516, %v2515
    %v2552 = vpack.c.b16 %v2518, %v2517
    %v2553 = vpack.c.b16 %v2520, %v2519
    %v2554 = vpack.c.b16 %v2522, %v2521
    %2587 = vmatpush.bf16.msra.mxu0 %v2530
    %2588 = vmatpush.bf16.msra.mxu0 %v2529
    %2589 = vmatpush.bf16.msra.mxu0 %v2528
    %2590 = vmatpush.bf16.msra.mxu0 %v2527
    %2591 = vmatpush.bf16.msra.mxu0 %v2526
    %2592 = vmatpush.bf16.msra.mxu0 %v2525
    %2593 = vmatpush.bf16.msra.mxu0 %v2524
    %2594 = vmatpush.bf16.msra.mxu0 %v2523
    %2595 = vmatmul.bf16.gmra.mxu0 %v2323
    %v2596 = vpop.f32.mrf.mxu0
    %v2597 = vadd.f32 %v2393, %v2596
    %v2598 = vpop.f32.mrf.mxu0
    %v2599 = vadd.f32 %v2393, %v2598
    %2600 = vdwg.mxu0
    %2601 = vmatpush.bf16.msra.mxu0 %v2538
    %2602 = vmatpush.bf16.msra.mxu0 %v2537
    %2603 = vmatpush.bf16.msra.mxu0 %v2536
    %2604 = vmatpush.bf16.msra.mxu0 %v2535
    %2605 = vmatpush.bf16.msra.mxu0 %v2534
    %2606 = vmatpush.bf16.msra.mxu0 %v2533
    %2607 = vmatpush.bf16.msra.mxu0 %v2532
    %2608 = vmatpush.bf16.msra.mxu0 %v2531
    %2609 = vmatmul.bf16.gmra.mxu0 %v2324
    %v2610 = vpop.f32.mrf.mxu0
    %v2611 = vadd.f32 %v2597, %v2610
    %v2612 = vpop.f32.mrf.mxu0
    %v2613 = vadd.f32 %v2599, %v2612
    %2614 = vdwg.mxu0
    %2615 = vmatpush.bf16.msra.mxu0 %v2546
    %2616 = vmatpush.bf16.msra.mxu0 %v2545
    %2617 = vmatpush.bf16.msra.mxu0 %v2544
    %2618 = vmatpush.bf16.msra.mxu0 %v2543
    %2619 = vmatpush.bf16.msra.mxu0 %v2542
    %2620 = vmatpush.bf16.msra.mxu0 %v2541
    %2621 = vmatpush.bf16.msra.mxu0 %v2540
    %2622 = vmatpush.bf16.msra.mxu0 %v2539
    %2623 = vmatmul.bf16.gmra.mxu0 %v2325
    %v2624 = vpop.f32.mrf.mxu0
    %v2625 = vadd.f32 %v2611, %v2624
    %v2626 = vpop.f32.mrf.mxu0
    %v2627 = vadd.f32 %v2613, %v2626
    %2628 = vdwg.mxu0
    %2629 = vmatpush.bf16.msra.mxu0 %v2554
    %2630 = vmatpush.bf16.msra.mxu0 %v2553
    %2631 = vmatpush.bf16.msra.mxu0 %v2552
    %2632 = vmatpush.bf16.msra.mxu0 %v2551
    %2633 = vmatpush.bf16.msra.mxu0 %v2550
    %2634 = vmatpush.bf16.msra.mxu0 %v2549
    %2635 = vmatpush.bf16.msra.mxu0 %v2548
    %2636 = vmatpush.bf16.msra.mxu0 %v2547
    %2637 = vmatmul.bf16.gmra.mxu0 %v2326
    %v2638 = vpop.f32.mrf.mxu0
    %v2639 = vadd.f32 %v2625, %v2638
    %v2640 = vpop.f32.mrf.mxu0
    %v2641 = vadd.f32 %v2627, %v2640
    %2642 = vdwg.mxu0
    %v2643 = vadd.f32 %v1658, %v2639
    %v2644 = vadd.f32 %v1659, %v2641
    %2645 = vst [vmem:[#allocation38] sm:$0xff] %v2643
    %2646 = vst [vmem:[#allocation38 + $0x8] sm:$0xff] %v2644
    // Predicated region
    $region198: #{team_block_forward.1} parent=1 // pred_check
      _
    $region199: #{team_block_forward.1} parent=1 // pred_check_branch
      %2648 = sbr.rel (0) target = $region201
    $region200: #{team_block_forward.1} parent=1 // pred_region
      %2650 = vsyncadd [#allocation4], 0
      %s2651 = sshll.u32 [#allocation38], 4
      %s2652 = int_to_ptr.vmem [resolvable:$true] %s2651
      %s2653 = sshll.u32 %s26, 4
      %s2654 = int_to_ptr.hbm [resolvable:$true] %s2653
      %2659 = dma.vmem_to_hbm [thread:$0]  %s2652, 256, %s2654, [#allocation4], 128, 128, 8
    $region201: #{team_block_forward.1} parent=1 // pred_fallthru
      _
    // Predicated region
    $region202: #{team_block_forward.1} parent=1 // pred_check
      _
    $region203: #{team_block_forward.1} parent=1 // pred_check_branch
      %2661 = sbr.rel (0) target = $region205
    $region204: #{team_block_forward.1} parent=1 // pred_region
      %2663 = dma.done [#allocation4], 256
    $region205: #{team_block_forward.1} parent=1 // pred_fallthru
      _
    %2664 = vsyncpa [#allocation3], 1
    %2665 = vsyncpa [#allocation6], 1
    %2666 = vsyncpa [#allocation9], 1
    %2667 = vsyncpa [#allocation12], 1
    %2668 = vsyncpa [#allocation15], 1
    %2669 = vsyncpa [#allocation18], 1
    %2670 = vsyncpa [#allocation21], 1
    %2671 = vsyncpa [#allocation24], 1
    %2672 = vsyncpa [#allocation27], 1
    %2673 = vsyncpa [#allocation30], 1
    %2674 = vsyncpa [#allocation33], 1
    %2675 = vsyncpa [#allocation36], 1
    %2676 = vsyncpa [#allocation4], 1

</llo_original>
